<compile_context>
chip_gen: v6e
topology: v6e:2x2x1
jax: 0.10.0
libtpu: 0.0.40
codegen_flags: <defaults>
</compile_context>

<pallas_src>
import functools
import math

import jax
import jax.numpy as jnp
from jax import lax
from jax.experimental import pallas as pl
from jax.experimental.pallas import tpu as pltpu

_MIB = 2 ** 20


# ---------------------------------------------------------------------------
# Phase folding: a stride-1 kxk conv on a nearest-s-upsampled signal equals s
# phases of a win-tap conv on the ORIGINAL signal (win=2 for k=3, pad=1, s>=2;
# win=k for s=1).
# ---------------------------------------------------------------------------
def _phase_fold(k, pad, s):
    d = [[(p + t - pad) // s for t in range(k)] for p in range(s)]
    dmin = [min(row) for row in d]
    win = max(max(row) - mn for row, mn in zip(d, dmin)) + 1
    pad_lo = max(0, -min(dmin))
    starts = [mn + pad_lo for mn in dmin]
    r_idx = [[d[p][t] - dmin[p] for t in range(k)] for p in range(s)]
    return win, pad_lo, starts, r_idx


def _fold_weights(w_oihw, s, win, r_idx):
    """(Cout, Cin, k, k) OIHW -> (s, s, win*win, Cin, Cout) phase-folded taps."""
    cout, cin, k, _ = w_oihw.shape
    w_hwio = jnp.transpose(w_oihw, (2, 3, 1, 0))            # (k, k, Cin, Cout)
    out = jnp.zeros((s, s, win, win, cin, cout), w_hwio.dtype)
    for p in range(s):
        for q in range(s):
            for t in range(k):
                for u in range(k):
                    out = out.at[p, q, r_idx[p][t], r_idx[q][u]].add(w_hwio[t, u])
    return out.reshape(s, s, win * win, cin, cout)


# ---------------------------------------------------------------------------
# Kernel 1: fused nearest-upsample + conv (phase-folded taps) + BN partial stats
# ---------------------------------------------------------------------------
def _conv_phase_kernel(*refs, s, win, halo, row_starts, col_starts,
                       ta, wa, cin, cout, use_im2col):
    xm_ref = refs[0]                       # (1, ta, Wp, Cin)   main row tile
    halo_refs = refs[1:1 + halo]           # halo x (1, 1, Wp, Cin)
    w_ref = refs[1 + halo]                 # (s, s, win*win, Cin, Cout)
    out_ref = refs[2 + halo]               # (1, ta, s, wa, s*Cout)
    stats_ref = refs[3 + halo]             # (1, 1, 2, Cout)
    f32 = jnp.float32

    # (ta + halo) halo'd rows of the padded ORIGINAL image, entirely in VMEM.
    parts = [xm_ref[0]] + [h[0] for h in halo_refs]
    xt = jnp.concatenate(parts, axis=0) if halo else xm_ref[0]

    ssum = jnp.zeros((1, cout), f32)
    ssq = jnp.zeros((1, cout), f32)
    for p in range(s):                                       # row phase
        r0 = row_starts[p]
        col_accs = []
        for q in range(s):                                   # col phase
            c0 = col_starts[q]
            if use_im2col:
                # Pack the win*win window into the contraction dim (K=win^2*Cin)
                # so the 256-deep MXU is filled even for narrow channel counts.
                taps = [xt[r0 + r:r0 + r + ta, c0 + c:c0 + c + wa, :]
                        for r in range(win) for c in range(win)]
                patch = jnp.concatenate(taps, axis=-1).reshape(
                    ta * wa, win * win * cin)
                acc = jnp.dot(patch, w_ref[p, q].reshape(win * win * cin, cout),
                              preferred_element_type=f32)
            else:
                acc = jnp.zeros((ta * wa, cout), f32)
                for r in range(win):
                    for c in range(win):
                        patch = xt[r0 + r:r0 + r + ta, c0 + c:c0 + c + wa, :]
                        acc = acc + jnp.dot(patch.reshape(ta * wa, cin),
                                            w_ref[p, q, r * win + c],
                                            preferred_element_type=f32)
            ssum = ssum + jnp.sum(acc, axis=0, keepdims=True)
            ssq = ssq + jnp.sum(acc * acc, axis=0, keepdims=True)
            col_accs.append(acc.reshape(ta, wa, cout))
        row_out = jnp.concatenate(col_accs, axis=-1) if s > 1 else col_accs[0]
        out_ref[0, :, p, :, :] = row_out.astype(out_ref.dtype)
    stats_ref[0, 0] = jnp.concatenate([ssum, ssq], axis=0)


# ---------------------------------------------------------------------------
# Kernel 2: BatchNorm (folded scale/shift) + LeakyReLU(0.2), lane-dense tiles
# ---------------------------------------------------------------------------
def _bn_lrelu_kernel(y_ref, scale_ref, shift_ref, o_ref, *, slope):
    z = y_ref[...].astype(jnp.float32) * scale_ref[...] + shift_ref[...]
    o_ref[...] = jnp.where(z >= 0, z, slope * z).astype(o_ref.dtype)


# ---------------------------------------------------------------------------
# Parameters (deterministic init mirroring Conv2d + BatchNorm2d defaults)
# ---------------------------------------------------------------------------
def init_up_block_params(key, in_features, out_features, kernel_size=3):
    fan_in = in_features * kernel_size * kernel_size
    w = jax.random.normal(
        key, (out_features, in_features, kernel_size, kernel_size), jnp.float32
    ) / math.sqrt(fan_in)
    return {
        "weight": w,                                         # OIHW (PyTorch layout)
        "gamma": jnp.ones((out_features,), jnp.float32),
        "beta": jnp.zeros((out_features,), jnp.float32),
        "running_mean": jnp.zeros((out_features,), jnp.float32),
        "running_var": jnp.ones((out_features,), jnp.float32),
    }


# ---------------------------------------------------------------------------
# Forward
# ---------------------------------------------------------------------------
@functools.partial(
    jax.jit,
    static_argnames=("padding", "scale_factor", "upscaling_mode",
                     "late_upscaling", "training", "compute_dtype"),
)
def up_block_forward(x, params, *, padding=1, scale_factor=2,
                     upscaling_mode="nearest", late_upscaling=False,
                     training=True, compute_dtype=jnp.float32):
    """x: (B, C_in, H, W) f32 -> (B, C_out, H*s, W*s) f32."""
    if upscaling_mode != "nearest":
        raise NotImplementedError("only 'nearest' upscaling is supported")
    s_up = int(scale_factor)
    if s_up != scale_factor or s_up < 1:
        raise NotImplementedError("only integer scale factors are supported")

    B, Cin, H, W = x.shape
    w = params["weight"]
    Cout, _, k, _ = w.shape
    pad = padding

    # Conv runs on the upsampled grid for early upscaling, on the original grid
    # for late upscaling; either way the Pallas kernel only ever reads the
    # ORIGINAL-resolution image (the upsample is folded into the phase weights).
    s = 1 if late_upscaling else s_up
    Ho = s * H + 2 * pad - k + 1
    Wo = s * W + 2 * pad - k + 1
    if Ho <= 0 or Wo <= 0 or Ho % s or Wo % s:
        raise NotImplementedError("unsupported kernel/padding/scale combination")
    A_r, A_c = Ho // s, Wo // s

    win, pad_lo, starts, r_idx = _phase_fold(k, pad, s)
    halo = max(starts) + win - 1
    pad_hi_r = max(0, (A_r - 1) + max(starts) + win - 1 - (H - 1 + pad_lo))
    pad_hi_c = max(0, (A_c - 1) + max(starts) + win - 1 - (W - 1 + pad_lo))

    # NCHW -> NHWC (channels on the lane axis) + small border pad of the
    # ORIGINAL image (the scale^2-larger upsampled image is never built).
    xh = jnp.transpose(x, (0, 2, 3, 1)).astype(compute_dtype)
    xp = jnp.pad(xh, ((0, 0), (pad_lo, pad_hi_r), (pad_lo, pad_hi_c), (0, 0)))
    Hp, Wp = H + pad_lo + pad_hi_r, W + pad_lo + pad_hi_c

    wfold = _fold_weights(w, s, win, r_idx).astype(compute_dtype)

    # ---- kernel 1 row tiling, sized against a VMEM budget -------------------
    cbytes = jnp.dtype(compute_dtype).itemsize
    use_im2col = (Cin < 128) and (win * win * Cin <= 1024)

    def step_bytes(ta):
        in_b = (ta + halo) * Wp * Cin * cbytes
        w_b = s * s * win * win * Cin * Cout * cbytes
        out_b = ta * s * A_c * s * Cout * 4
        temps = (ta + halo) * Wp * Cin * cbytes + 2 * ta * A_c * Cout * 4
        if use_im2col:
            temps += ta * A_c * win * win * Cin * cbytes
        return 2 * (in_b + w_b + out_b + 2 * Cout * 4) + temps

    ta = 1
    for cand in range(1, A_r + 1):
        if A_r % cand == 0 and step_bytes(cand) <= 24 * _MIB:
            ta = cand
    n_tiles = A_r // ta
    vmem1 = int(min(64 * _MIB, max(32 * _MIB, 1.4 * step_bytes(ta))))

    in_specs = [pl.BlockSpec((1, ta, Wp, Cin), lambda b, t: (b, t, 0, 0))]
    for h in range(halo):
        in_specs.append(
            pl.BlockSpec((1, 1, Wp, Cin),
                         lambda b, t, h=h: (b, (t + 1) * ta + h, 0, 0)))
    in_specs.append(
        pl.BlockSpec((s, s, win * win, Cin, Cout),
                     lambda b, t: (0, 0, 0, 0, 0)))

    conv_out, stats = pl.pallas_call(
        functools.partial(
            _conv_phase_kernel, s=s, win=win, halo=halo, row_starts=starts,
            col_starts=starts, ta=ta, wa=A_c, cin=Cin, cout=Cout,
            use_im2col=use_im2col),
        out_shape=(
            jax.ShapeDtypeStruct((B, A_r, s, A_c, s * Cout), jnp.float32),
            jax.ShapeDtypeStruct((B, n_tiles, 2, Cout), jnp.float32),
        ),
        grid=(B, n_tiles),
        in_specs=in_specs,
        out_specs=(
            pl.BlockSpec((1, ta, s, A_c, s * Cout),
                         lambda b, t: (b, t, 0, 0, 0)),
            pl.BlockSpec((1, 1, 2, Cout), lambda b, t: (b, t, 0, 0)),
        ),
        compiler_params=pltpu.CompilerParams(
            dimension_semantics=("parallel", "parallel"),
            vmem_limit_bytes=vmem1),
    )(*([xp] * (1 + halo)), wfold)

    # ---- BatchNorm statistics (training: biased batch stats over N,H,W) -----
    n_elems = B * Ho * Wo
    if training:
        tot = jnp.sum(stats, axis=(0, 1))                    # (2, Cout)
        mean = tot[0] / n_elems
        # TODO(synk): E[x^2]-E[x]^2 can cancel if the conv-output mean is large;
        # a shifted / Welford combine would be more robust.
        var = jnp.maximum(tot[1] / n_elems - mean * mean, 0.0)
    else:
        mean, var = params["running_mean"], params["running_var"]
    eps = 1e-5
    scale = params["gamma"] * lax.rsqrt(var + eps)
    shift = params["beta"] - mean * scale

    # ---- kernel 2: BN affine + LeakyReLU on a lane-dense flattened view ------
    lane0 = s * Cout
    M2 = B * A_r * s * A_c
    r = 1
    while r * lane0 < 128 and M2 % (2 * r) == 0:
        r *= 2
    Lw = r * lane0
    M2r = M2 // r
    y2 = conv_out.reshape(M2r, Lw)                           # free reshape
    scale_l = jnp.tile(scale, s * r).reshape(1, Lw)
    shift_l = jnp.tile(shift, s * r).reshape(1, Lw)

    tm = max(8, min(1024, (8 * _MIB) // max(1, Lw * 4)))
    tm = (tm // 8) * 8
    if M2r <= tm:
        tm = M2r
    vmem2 = int(min(64 * _MIB, max(32 * _MIB, 5 * tm * Lw * 4)))

    out2 = pl.pallas_call(
        functools.partial(_bn_lrelu_kernel, slope=0.2),
        out_shape=jax.ShapeDtypeStruct((M2r, Lw), jnp.float32),
        grid=(pl.cdiv(M2r, tm),),            # partial last block is masked
        in_specs=[
            pl.BlockSpec((tm, Lw), lambda i: (i, 0)),
            pl.BlockSpec((1, Lw), lambda i: (0, 0)),
            pl.BlockSpec((1, Lw), lambda i: (0, 0)),
        ],
        out_specs=pl.BlockSpec((tm, Lw), lambda i: (i, 0)),
        compiler_params=pltpu.CompilerParams(
            dimension_semantics=("parallel",),
            vmem_limit_bytes=vmem2),
    )(y2, scale_l, shift_l)

    # phase-interleaved layout -> NHWC is a pure (free) row-major reshape
    out_nhwc = out2.reshape(B, A_r, s, A_c, s, Cout).reshape(B, Ho, Wo, Cout)

    if late_upscaling and s_up > 1:
        # TODO(synk): could be fused into kernel 2's output index_map.
        out_nhwc = jnp.repeat(jnp.repeat(out_nhwc, s_up, axis=1), s_up, axis=2)

    # TODO(synk): final layout pass; could be emitted NCHW directly by kernel 2.
    return jnp.transpose(out_nhwc, (0, 3, 1, 2))


# ---------------------------------------------------------------------------
# Pure-JAX reference (mirrors the PyTorch module) for an in-script check
# ---------------------------------------------------------------------------
def _reference(x, params, *, padding=1, scale_factor=2, late_upscaling=False):
    w = params["weight"]
    out = x
    if not late_upscaling:
        out = jnp.repeat(jnp.repeat(out, scale_factor, axis=2), scale_factor, axis=3)
    out = lax.conv_general_dilated(
        out, w, window_strides=(1, 1),
        padding=[(padding, padding), (padding, padding)],
        dimension_numbers=("NCHW", "OIHW", "NCHW"))
    mean = jnp.mean(out, axis=(0, 2, 3), keepdims=True)
    var = jnp.mean((out - mean) ** 2, axis=(0, 2, 3), keepdims=True)
    g = params["gamma"].reshape(1, -1, 1, 1)
    b = params["beta"].reshape(1, -1, 1, 1)
    out = (out - mean) * lax.rsqrt(var + 1e-5) * g + b
    out = jnp.where(out >= 0, out, 0.2 * out)
    if late_upscaling:
        out = jnp.repeat(jnp.repeat(out, scale_factor, axis=2), scale_factor, axis=3)
    return out


if __name__ == "__main__":
    B, C_in, H, W, C_out = 2, 4, 16, 16, 8
    key = jax.random.PRNGKey(0)
    kx, kw = jax.random.split(key)
    x = jax.random.normal(kx, (B, C_in, H, W), jnp.float32)
    params = init_up_block_params(kw, C_in, C_out, kernel_size=3)

    y = up_block_forward(x, params)          # defaults: early nearest x2, training BN
    y = jax.block_until_ready(y)

    assert y.shape == (B, C_out, H * 2, W * 2), y.shape
    assert y.dtype == jnp.float32
    assert bool(jnp.all(jnp.isfinite(y)))

    y_ref = _reference(x, params)
    err = float(jnp.max(jnp.abs(y - y_ref)))
    assert bool(jnp.allclose(y, y_ref, atol=2e-3, rtol=2e-3)), err
    print("KERNEL_OK")
</pallas_src>

<mosaic_0001>
module attributes {stable_mosaic.version = 11 : i64} {
  func.func @_conv_phase_kernel(%arg0: i32, %arg1: i32, %arg2: memref<1x16x18x4xf32, #tpu.memory_space<vmem>>, %arg3: memref<1x1x18x4xf32, #tpu.memory_space<vmem>>, %arg4: memref<1x1x18x4xf32, #tpu.memory_space<vmem>>, %arg5: memref<2x2x4x4x8xf32, #tpu.memory_space<vmem>>, %arg6: memref<1x16x2x16x16xf32, #tpu.memory_space<vmem>>, %arg7: memref<1x1x2x8xf32, #tpu.memory_space<vmem>>) attributes {dimension_semantics = [#tpu.dimension_semantics<parallel>, #tpu.dimension_semantics<parallel>], iteration_bounds = array<i64: 2, 1>, scalar_prefetch = 0 : i64, scratch_operands = 0 : i64, tpu.core_type = #tpu.core_type<tc>, window_params = [{transform_indices = @transform_0, window_bounds = array<i64: 1, 16, 18, 4>}, {transform_indices = @transform_1, window_bounds = array<i64: 1, 1, 18, 4>}, {transform_indices = @transform_2, window_bounds = array<i64: 1, 1, 18, 4>}, {pipeline_mode = #tpu.pipeline_mode<synchronous>, transform_indices = @transform_3, window_bounds = array<i64: 2, 2, 4, 4, 8>}, {transform_indices = @transform_4, window_bounds = array<i64: 1, 16, 2, 16, 16>}, {transform_indices = @transform_5, window_bounds = array<i64: 1, 1, 2, 8>}]} {
    %c0 = arith.constant 0 : index
    %c0_0 = arith.constant 0 : index
    %c0_1 = arith.constant 0 : index
    %c0_2 = arith.constant 0 : index
    %0 = vector.load %arg2[%c0, %c0_0, %c0_1, %c0_2] : memref<1x16x18x4xf32, #tpu.memory_space<vmem>>, vector<1x16x18x4xf32>
    %1 = vector.shape_cast %0 : vector<1x16x18x4xf32> to vector<16x18x4xf32>
    %c0_3 = arith.constant 0 : index
    %c0_4 = arith.constant 0 : index
    %c0_5 = arith.constant 0 : index
    %c0_6 = arith.constant 0 : index
    %2 = vector.load %arg3[%c0_3, %c0_4, %c0_5, %c0_6] : memref<1x1x18x4xf32, #tpu.memory_space<vmem>>, vector<1x1x18x4xf32>
    %3 = vector.shape_cast %2 : vector<1x1x18x4xf32> to vector<1x18x4xf32>
    %c0_7 = arith.constant 0 : index
    %c0_8 = arith.constant 0 : index
    %c0_9 = arith.constant 0 : index
    %c0_10 = arith.constant 0 : index
    %4 = vector.load %arg4[%c0_7, %c0_8, %c0_9, %c0_10] : memref<1x1x18x4xf32, #tpu.memory_space<vmem>>, vector<1x1x18x4xf32>
    %5 = vector.shape_cast %4 : vector<1x1x18x4xf32> to vector<1x18x4xf32>
    %6 = tpu.concatenate %1, %3, %5 in 0 : vector<16x18x4xf32>, vector<1x18x4xf32>, vector<1x18x4xf32> -> vector<18x18x4xf32>
    %cst = arith.constant 0.000000e+00 : f32
    %7 = vector.broadcast %cst : f32 to vector<1x8xf32>
    %cst_11 = arith.constant 0.000000e+00 : f32
    %8 = vector.broadcast %cst_11 : f32 to vector<1x8xf32>
    %9 = vector.extract_strided_slice %6 {offsets = [0, 0, 0], sizes = [16, 16, 4], strides = [1, 1, 1]} : vector<18x18x4xf32> to vector<16x16x4xf32>
    %10 = vector.extract_strided_slice %6 {offsets = [0, 1, 0], sizes = [16, 16, 4], strides = [1, 1, 1]} : vector<18x18x4xf32> to vector<16x16x4xf32>
    %11 = vector.extract_strided_slice %6 {offsets = [1, 0, 0], sizes = [16, 16, 4], strides = [1, 1, 1]} : vector<18x18x4xf32> to vector<16x16x4xf32>
    %12 = vector.extract_strided_slice %6 {offsets = [1, 1, 0], sizes = [16, 16, 4], strides = [1, 1, 1]} : vector<18x18x4xf32> to vector<16x16x4xf32>
    %13 = tpu.concatenate %9, %10, %11, %12 in 2 : vector<16x16x4xf32>, vector<16x16x4xf32>, vector<16x16x4xf32>, vector<16x16x4xf32> -> vector<16x16x16xf32>
    %14 = vector.shape_cast %13 : vector<16x16x16xf32> to vector<256x16xf32>
    %c0_12 = arith.constant 0 : index
    %c0_13 = arith.constant 0 : index
    %c0_14 = arith.constant 0 : index
    %c0_15 = arith.constant 0 : index
    %c0_16 = arith.constant 0 : index
    %15 = vector.load %arg5[%c0_12, %c0_13, %c0_14, %c0_15, %c0_16] : memref<2x2x4x4x8xf32, #tpu.memory_space<vmem>>, vector<1x1x4x4x8xf32>
    %16 = vector.shape_cast %15 : vector<1x1x4x4x8xf32> to vector<4x4x8xf32>
    %17 = vector.shape_cast %16 : vector<4x4x8xf32> to vector<16x8xf32>
    %cst_17 = arith.constant dense<0.000000e+00> : vector<256x8xf32>
    %18 = tpu.matmul %14, %17, %cst_17 {dimension_numbers = #tpu.dot_dimension_numbers<[1], [0], [0], [1], [0, 0, 1, 1], [], []>} : vector<256x16xf32>, vector<16x8xf32>, vector<256x8xf32> -> vector<256x8xf32>
    %cst_18 = arith.constant dense<0.000000e+00> : vector<8xf32>
    %19 = vector.multi_reduction <add>, %18, %cst_18 [0] : vector<256x8xf32> to vector<8xf32>
    %20 = vector.shape_cast %19 : vector<8xf32> to vector<1x8xf32>
    %21 = arith.addf %7, %20 : vector<1x8xf32>
    %22 = arith.mulf %18, %18 : vector<256x8xf32>
    %cst_19 = arith.constant dense<0.000000e+00> : vector<8xf32>
    %23 = vector.multi_reduction <add>, %22, %cst_19 [0] : vector<256x8xf32> to vector<8xf32>
    %24 = vector.shape_cast %23 : vector<8xf32> to vector<1x8xf32>
    %25 = arith.addf %8, %24 : vector<1x8xf32>
    %26 = vector.shape_cast %18 : vector<256x8xf32> to vector<16x16x8xf32>
    %27 = vector.extract_strided_slice %6 {offsets = [0, 1, 0], sizes = [16, 16, 4], strides = [1, 1, 1]} : vector<18x18x4xf32> to vector<16x16x4xf32>
    %28 = vector.extract_strided_slice %6 {offsets = [0, 2, 0], sizes = [16, 16, 4], strides = [1, 1, 1]} : vector<18x18x4xf32> to vector<16x16x4xf32>
    %29 = vector.extract_strided_slice %6 {offsets = [1, 1, 0], sizes = [16, 16, 4], strides = [1, 1, 1]} : vector<18x18x4xf32> to vector<16x16x4xf32>
    %30 = vector.extract_strided_slice %6 {offsets = [1, 2, 0], sizes = [16, 16, 4], strides = [1, 1, 1]} : vector<18x18x4xf32> to vector<16x16x4xf32>
    %31 = tpu.concatenate %27, %28, %29, %30 in 2 : vector<16x16x4xf32>, vector<16x16x4xf32>, vector<16x16x4xf32>, vector<16x16x4xf32> -> vector<16x16x16xf32>
    %32 = vector.shape_cast %31 : vector<16x16x16xf32> to vector<256x16xf32>
    %c0_20 = arith.constant 0 : index
    %c1 = arith.constant 1 : index
    %c0_21 = arith.constant 0 : index
    %c0_22 = arith.constant 0 : index
    %c0_23 = arith.constant 0 : index
    %33 = vector.load %arg5[%c0_20, %c1, %c0_21, %c0_22, %c0_23] : memref<2x2x4x4x8xf32, #tpu.memory_space<vmem>>, vector<1x1x4x4x8xf32>
    %34 = vector.shape_cast %33 : vector<1x1x4x4x8xf32> to vector<4x4x8xf32>
    %35 = vector.shape_cast %34 : vector<4x4x8xf32> to vector<16x8xf32>
    %cst_24 = arith.constant dense<0.000000e+00> : vector<256x8xf32>
    %36 = tpu.matmul %32, %35, %cst_24 {dimension_numbers = #tpu.dot_dimension_numbers<[1], [0], [0], [1], [0, 0, 1, 1], [], []>} : vector<256x16xf32>, vector<16x8xf32>, vector<256x8xf32> -> vector<256x8xf32>
    %cst_25 = arith.constant dense<0.000000e+00> : vector<8xf32>
    %37 = vector.multi_reduction <add>, %36, %cst_25 [0] : vector<256x8xf32> to vector<8xf32>
    %38 = vector.shape_cast %37 : vector<8xf32> to vector<1x8xf32>
    %39 = arith.addf %21, %38 : vector<1x8xf32>
    %40 = arith.mulf %36, %36 : vector<256x8xf32>
    %cst_26 = arith.constant dense<0.000000e+00> : vector<8xf32>
    %41 = vector.multi_reduction <add>, %40, %cst_26 [0] : vector<256x8xf32> to vector<8xf32>
    %42 = vector.shape_cast %41 : vector<8xf32> to vector<1x8xf32>
    %43 = arith.addf %25, %42 : vector<1x8xf32>
    %44 = vector.shape_cast %36 : vector<256x8xf32> to vector<16x16x8xf32>
    %45 = tpu.concatenate %26, %44 in 2 : vector<16x16x8xf32>, vector<16x16x8xf32> -> vector<16x16x16xf32>
    %c0_27 = arith.constant 0 : index
    %c0_28 = arith.constant 0 : index
    %c0_29 = arith.constant 0 : index
    %c0_30 = arith.constant 0 : index
    %c0_31 = arith.constant 0 : index
    %46 = vector.load %arg6[%c0_27, %c0_28, %c0_29, %c0_30, %c0_31] : memref<1x16x2x16x16xf32, #tpu.memory_space<vmem>>, vector<1x16x1x16x16xf32>
    %47 = vector.shape_cast %46 : vector<1x16x1x16x16xf32> to vector<16x16x16xf32>
    %48 = vector.shape_cast %45 : vector<16x16x16xf32> to vector<1x16x1x16x16xf32>
    tpu.vector_store %arg6[%c0_27, %c0_28, %c0_29, %c0_30, %c0_31], %48 {strides = array<i32>} : memref<1x16x2x16x16xf32, #tpu.memory_space<vmem>>, vector<1x16x1x16x16xf32>,
    %49 = vector.extract_strided_slice %6 {offsets = [1, 0, 0], sizes = [16, 16, 4], strides = [1, 1, 1]} : vector<18x18x4xf32> to vector<16x16x4xf32>
    %50 = vector.extract_strided_slice %6 {offsets = [1, 1, 0], sizes = [16, 16, 4], strides = [1, 1, 1]} : vector<18x18x4xf32> to vector<16x16x4xf32>
    %51 = vector.extract_strided_slice %6 {offsets = [2, 0, 0], sizes = [16, 16, 4], strides = [1, 1, 1]} : vector<18x18x4xf32> to vector<16x16x4xf32>
    %52 = vector.extract_strided_slice %6 {offsets = [2, 1, 0], sizes = [16, 16, 4], strides = [1, 1, 1]} : vector<18x18x4xf32> to vector<16x16x4xf32>
    %53 = tpu.concatenate %49, %50, %51, %52 in 2 : vector<16x16x4xf32>, vector<16x16x4xf32>, vector<16x16x4xf32>, vector<16x16x4xf32> -> vector<16x16x16xf32>
    %54 = vector.shape_cast %53 : vector<16x16x16xf32> to vector<256x16xf32>
    %c1_32 = arith.constant 1 : index
    %c0_33 = arith.constant 0 : index
    %c0_34 = arith.constant 0 : index
    %c0_35 = arith.constant 0 : index
    %c0_36 = arith.constant 0 : index
    %55 = vector.load %arg5[%c1_32, %c0_33, %c0_34, %c0_35, %c0_36] : memref<2x2x4x4x8xf32, #tpu.memory_space<vmem>>, vector<1x1x4x4x8xf32>
    %56 = vector.shape_cast %55 : vector<1x1x4x4x8xf32> to vector<4x4x8xf32>
    %57 = vector.shape_cast %56 : vector<4x4x8xf32> to vector<16x8xf32>
    %cst_37 = arith.constant dense<0.000000e+00> : vector<256x8xf32>
    %58 = tpu.matmul %54, %57, %cst_37 {dimension_numbers = #tpu.dot_dimension_numbers<[1], [0], [0], [1], [0, 0, 1, 1], [], []>} : vector<256x16xf32>, vector<16x8xf32>, vector<256x8xf32> -> vector<256x8xf32>
    %cst_38 = arith.constant dense<0.000000e+00> : vector<8xf32>
    %59 = vector.multi_reduction <add>, %58, %cst_38 [0] : vector<256x8xf32> to vector<8xf32>
    %60 = vector.shape_cast %59 : vector<8xf32> to vector<1x8xf32>
    %61 = arith.addf %39, %60 : vector<1x8xf32>
    %62 = arith.mulf %58, %58 : vector<256x8xf32>
    %cst_39 = arith.constant dense<0.000000e+00> : vector<8xf32>
    %63 = vector.multi_reduction <add>, %62, %cst_39 [0] : vector<256x8xf32> to vector<8xf32>
    %64 = vector.shape_cast %63 : vector<8xf32> to vector<1x8xf32>
    %65 = arith.addf %43, %64 : vector<1x8xf32>
    %66 = vector.shape_cast %58 : vector<256x8xf32> to vector<16x16x8xf32>
    %67 = vector.extract_strided_slice %6 {offsets = [1, 1, 0], sizes = [16, 16, 4], strides = [1, 1, 1]} : vector<18x18x4xf32> to vector<16x16x4xf32>
    %68 = vector.extract_strided_slice %6 {offsets = [1, 2, 0], sizes = [16, 16, 4], strides = [1, 1, 1]} : vector<18x18x4xf32> to vector<16x16x4xf32>
    %69 = vector.extract_strided_slice %6 {offsets = [2, 1, 0], sizes = [16, 16, 4], strides = [1, 1, 1]} : vector<18x18x4xf32> to vector<16x16x4xf32>
    %70 = vector.extract_strided_slice %6 {offsets = [2, 2, 0], sizes = [16, 16, 4], strides = [1, 1, 1]} : vector<18x18x4xf32> to vector<16x16x4xf32>
    %71 = tpu.concatenate %67, %68, %69, %70 in 2 : vector<16x16x4xf32>, vector<16x16x4xf32>, vector<16x16x4xf32>, vector<16x16x4xf32> -> vector<16x16x16xf32>
    %72 = vector.shape_cast %71 : vector<16x16x16xf32> to vector<256x16xf32>
    %c1_40 = arith.constant 1 : index
    %c1_41 = arith.constant 1 : index
    %c0_42 = arith.constant 0 : index
    %c0_43 = arith.constant 0 : index
    %c0_44 = arith.constant 0 : index
    %73 = vector.load %arg5[%c1_40, %c1_41, %c0_42, %c0_43, %c0_44] : memref<2x2x4x4x8xf32, #tpu.memory_space<vmem>>, vector<1x1x4x4x8xf32>
    %74 = vector.shape_cast %73 : vector<1x1x4x4x8xf32> to vector<4x4x8xf32>
    %75 = vector.shape_cast %74 : vector<4x4x8xf32> to vector<16x8xf32>
    %cst_45 = arith.constant dense<0.000000e+00> : vector<256x8xf32>
    %76 = tpu.matmul %72, %75, %cst_45 {dimension_numbers = #tpu.dot_dimension_numbers<[1], [0], [0], [1], [0, 0, 1, 1], [], []>} : vector<256x16xf32>, vector<16x8xf32>, vector<256x8xf32> -> vector<256x8xf32>
    %cst_46 = arith.constant dense<0.000000e+00> : vector<8xf32>
    %77 = vector.multi_reduction <add>, %76, %cst_46 [0] : vector<256x8xf32> to vector<8xf32>
    %78 = vector.shape_cast %77 : vector<8xf32> to vector<1x8xf32>
    %79 = arith.addf %61, %78 : vector<1x8xf32>
    %80 = arith.mulf %76, %76 : vector<256x8xf32>
    %cst_47 = arith.constant dense<0.000000e+00> : vector<8xf32>
    %81 = vector.multi_reduction <add>, %80, %cst_47 [0] : vector<256x8xf32> to vector<8xf32>
    %82 = vector.shape_cast %81 : vector<8xf32> to vector<1x8xf32>
    %83 = arith.addf %65, %82 : vector<1x8xf32>
    %84 = vector.shape_cast %76 : vector<256x8xf32> to vector<16x16x8xf32>
    %85 = tpu.concatenate %66, %84 in 2 : vector<16x16x8xf32>, vector<16x16x8xf32> -> vector<16x16x16xf32>
    %c0_48 = arith.constant 0 : index
    %c0_49 = arith.constant 0 : index
    %c1_50 = arith.constant 1 : index
    %c0_51 = arith.constant 0 : index
    %c0_52 = arith.constant 0 : index
    %86 = vector.load %arg6[%c0_48, %c0_49, %c1_50, %c0_51, %c0_52] : memref<1x16x2x16x16xf32, #tpu.memory_space<vmem>>, vector<1x16x1x16x16xf32>
    %87 = vector.shape_cast %86 : vector<1x16x1x16x16xf32> to vector<16x16x16xf32>
    %88 = vector.shape_cast %85 : vector<16x16x16xf32> to vector<1x16x1x16x16xf32>
    tpu.vector_store %arg6[%c0_48, %c0_49, %c1_50, %c0_51, %c0_52], %88 {strides = array<i32>} : memref<1x16x2x16x16xf32, #tpu.memory_space<vmem>>, vector<1x16x1x16x16xf32>,
    %89 = tpu.concatenate %79, %83 in 0 : vector<1x8xf32>, vector<1x8xf32> -> vector<2x8xf32>
    %c0_53 = arith.constant 0 : index
    %c0_54 = arith.constant 0 : index
    %c0_55 = arith.constant 0 : index
    %c0_56 = arith.constant 0 : index
    %90 = vector.load %arg7[%c0_53, %c0_54, %c0_55, %c0_56] : memref<1x1x2x8xf32, #tpu.memory_space<vmem>>, vector<1x1x2x8xf32>
    %91 = vector.shape_cast %90 : vector<1x1x2x8xf32> to vector<2x8xf32>
    %92 = vector.shape_cast %89 : vector<2x8xf32> to vector<1x1x2x8xf32>
    tpu.vector_store %arg7[%c0_53, %c0_54, %c0_55, %c0_56], %92 {strides = array<i32>} : memref<1x1x2x8xf32, #tpu.memory_space<vmem>>, vector<1x1x2x8xf32>,
    return
  }
  func.func @transform_0(%arg0: i32, %arg1: i32) -> (i32, i32, i32, i32) {
    %c0_i32 = arith.constant 0 : i32
    %c0_i32_0 = arith.constant 0 : i32
    %c0_i32_1 = arith.constant 0 : i32
    return %arg0, %arg1, %c0_i32, %c0_i32_0 : i32, i32, i32, i32
  }
  func.func @transform_1(%arg0: i32, %arg1: i32) -> (i32, i32, i32, i32) {
    %c1_i32 = arith.constant 1 : i32
    %0 = arith.addi %arg1, %c1_i32 : i32
    %c16_i32 = arith.constant 16 : i32
    %1 = arith.muli %0, %c16_i32 : i32
    %c0_i32 = arith.constant 0 : i32
    %2 = arith.addi %1, %c0_i32 : i32
    %c0_i32_0 = arith.constant 0 : i32
    %c0_i32_1 = arith.constant 0 : i32
    %c0_i32_2 = arith.constant 0 : i32
    return %arg0, %2, %c0_i32_0, %c0_i32_1 : i32, i32, i32, i32
  }
  func.func @transform_2(%arg0: i32, %arg1: i32) -> (i32, i32, i32, i32) {
    %c1_i32 = arith.constant 1 : i32
    %0 = arith.addi %arg1, %c1_i32 : i32
    %c16_i32 = arith.constant 16 : i32
    %1 = arith.muli %0, %c16_i32 : i32
    %c1_i32_0 = arith.constant 1 : i32
    %2 = arith.addi %1, %c1_i32_0 : i32
    %c0_i32 = arith.constant 0 : i32
    %c0_i32_1 = arith.constant 0 : i32
    %c0_i32_2 = arith.constant 0 : i32
    return %arg0, %2, %c0_i32, %c0_i32_1 : i32, i32, i32, i32
  }
  func.func @transform_3(%arg0: i32, %arg1: i32) -> (i32, i32, i32, i32, i32) {
    %c0_i32 = arith.constant 0 : i32
    %c0_i32_0 = arith.constant 0 : i32
    %c0_i32_1 = arith.constant 0 : i32
    %c0_i32_2 = arith.constant 0 : i32
    %c0_i32_3 = arith.constant 0 : i32
    %c0_i32_4 = arith.constant 0 : i32
    return %c0_i32, %c0_i32_0, %c0_i32_1, %c0_i32_2, %c0_i32_3 : i32, i32, i32, i32, i32
  }
  func.func @transform_4(%arg0: i32, %arg1: i32) -> (i32, i32, i32, i32, i32) {
    %c0_i32 = arith.constant 0 : i32
    %c0_i32_0 = arith.constant 0 : i32
    %c0_i32_1 = arith.constant 0 : i32
    %c0_i32_2 = arith.constant 0 : i32
    return %arg0, %arg1, %c0_i32, %c0_i32_0, %c0_i32_1 : i32, i32, i32, i32, i32
  }
  func.func @transform_5(%arg0: i32, %arg1: i32) -> (i32, i32, i32, i32) {
    %c0_i32 = arith.constant 0 : i32
    %c0_i32_0 = arith.constant 0 : i32
    %c0_i32_1 = arith.constant 0 : i32
    return %arg0, %arg1, %c0_i32, %c0_i32_0 : i32, i32, i32, i32
  }
}

module attributes {stable_mosaic.version = 11 : i64} {
  func.func @_bn_lrelu_kernel(%arg0: i32, %arg1: memref<128x128xf32, #tpu.memory_space<vmem>>, %arg2: memref<1x128xf32, #tpu.memory_space<vmem>>, %arg3: memref<1x128xf32, #tpu.memory_space<vmem>>, %arg4: memref<128x128xf32, #tpu.memory_space<vmem>>) attributes {dimension_semantics = [#tpu.dimension_semantics<parallel>], iteration_bounds = array<i64: 1>, scalar_prefetch = 0 : i64, scratch_operands = 0 : i64, tpu.core_type = #tpu.core_type<tc>, window_params = [{transform_indices = @transform_0, window_bounds = array<i64: 128, 128>}, {pipeline_mode = #tpu.pipeline_mode<synchronous>, transform_indices = @transform_1, window_bounds = array<i64: 1, 128>}, {pipeline_mode = #tpu.pipeline_mode<synchronous>, transform_indices = @transform_2, window_bounds = array<i64: 1, 128>}, {transform_indices = @transform_3, window_bounds = array<i64: 128, 128>}]} {
    %c0 = arith.constant 0 : index
    %c0_0 = arith.constant 0 : index
    %0 = vector.load %arg1[%c0, %c0_0] : memref<128x128xf32, #tpu.memory_space<vmem>>, vector<128x128xf32>
    %c0_1 = arith.constant 0 : index
    %c0_2 = arith.constant 0 : index
    %1 = vector.load %arg2[%c0_1, %c0_2] : memref<1x128xf32, #tpu.memory_space<vmem>>, vector<1x128xf32>
    %2 = vector.broadcast %1 : vector<1x128xf32> to vector<128x128xf32>
    %3 = arith.mulf %0, %2 : vector<128x128xf32>
    %c0_3 = arith.constant 0 : index
    %c0_4 = arith.constant 0 : index
    %4 = vector.load %arg3[%c0_3, %c0_4] : memref<1x128xf32, #tpu.memory_space<vmem>>, vector<1x128xf32>
    %5 = vector.broadcast %4 : vector<1x128xf32> to vector<128x128xf32>
    %6 = arith.addf %3, %5 : vector<128x128xf32>
    %cst = arith.constant 0.000000e+00 : f32
    %7 = vector.broadcast %cst : f32 to vector<128x128xf32>
    %8 = arith.cmpf oge, %6, %7 : vector<128x128xf32>
    %cst_5 = arith.constant 2.000000e-01 : f32
    %9 = vector.broadcast %cst_5 : f32 to vector<128x128xf32>
    %10 = arith.mulf %9, %6 : vector<128x128xf32>
    %11 = arith.select %8, %6, %10 : vector<128x128xi1>, vector<128x128xf32>
    %c0_6 = arith.constant 0 : index
    %c0_7 = arith.constant 0 : index
    %12 = vector.load %arg4[%c0_6, %c0_7] : memref<128x128xf32, #tpu.memory_space<vmem>>, vector<128x128xf32>
    tpu.vector_store %arg4[%c0_6, %c0_7], %11 {strides = array<i32>} : memref<128x128xf32, #tpu.memory_space<vmem>>, vector<128x128xf32>,
    return
  }
  func.func @transform_0(%arg0: i32) -> (i32, i32) {
    %c0_i32 = arith.constant 0 : i32
    %c0_i32_0 = arith.constant 0 : i32
    return %arg0, %c0_i32 : i32, i32
  }
  func.func @transform_1(%arg0: i32) -> (i32, i32) {
    %c0_i32 = arith.constant 0 : i32
    %c0_i32_0 = arith.constant 0 : i32
    %c0_i32_1 = arith.constant 0 : i32
    return %c0_i32, %c0_i32_0 : i32, i32
  }
  func.func @transform_2(%arg0: i32) -> (i32, i32) {
    %c0_i32 = arith.constant 0 : i32
    %c0_i32_0 = arith.constant 0 : i32
    %c0_i32_1 = arith.constant 0 : i32
    return %c0_i32, %c0_i32_0 : i32, i32
  }
  func.func @transform_3(%arg0: i32) -> (i32, i32) {
    %c0_i32 = arith.constant 0 : i32
    %c0_i32_0 = arith.constant 0 : i32
    return %arg0, %c0_i32 : i32, i32
  }
}

</mosaic_0001>

<llo_original>
// kernel: tile.18
$region0: #{tile.18}
  #allocation0 [shape = 's32[1]{0}', space=sflag, size = 0x4, scoped, tag = 'scoped memory for tile.18']
  %s0 = inlined_call_operand.vmem [shape: f32[8], index: 0, kind: input, shape index: {}]
  %s1 = inlined_call_operand.vmem [shape: f32[16,8], index: 1, kind: output, shape index: {}]
  // Predicated region
  $region2: #{tile.18} parent=0 // pred_check
    _
  $region3: #{tile.18} parent=0 // pred_check_branch
    %3 = sbr.rel (0) target = $region5
  $region4: #{tile.18} parent=0 // pred_region
    _
  $region5: #{tile.18} parent=0 // pred_fallthru
    _
  %v4 = vld [vmem:[%s0] ss:$0 sm:$0xff]
  %5 = vst [vmem:[%s1] sm:$0xff] %v4
  %s6 = scalar_lea.vmem %s1, 8
  %7 = vst [vmem:[%s6] sm:$0xff] %v4

// kernel: tile.19
$region0: #{tile.19}
  %s0 = inlined_call_operand.vmem [shape: f32[16,8], index: 0, kind: input, shape index: {}]
  %s1 = inlined_call_operand.vmem [shape: f32[1,128], index: 1, kind: output, shape index: {}]
  $region1: #{tile.19} parent=0
    #allocation0 [shape = 'u8[4096]{0}', space=vmem, size = 0x1000, scoped, tag = 'scoped mem for output reshape']
    %v2 = vld [vmem:[%s0] sm:$0x1]
    %vm3 = vcmask 64512
    %4 = vst.msk [vmem:[#allocation0] sm:$0x1] %vm3, %v2
    %s5 = scalar_lea.vmem %s0, 15
    %v6 = vld [vmem:[%s5] sm:$0x1]
    %7 = vrot.lane.b32.xlu0 %v6, 120
    %v8 = vpop.permute.xlu0 %7
    %vm9 = vcmask 1048512
    %10 = vst.msk [vmem:[#allocation0] sm:$0x1] %vm9, %v8
    %s11 = scalar_lea.vmem %s0, 14
    %v12 = vld [vmem:[%s11] sm:$0x1]
    %13 = vrot.lane.b32.xlu0 %v12, 112
    %v14 = vpop.permute.xlu0 %13
    %vm15 = vcmask 982912
    %16 = vst.msk [vmem:[#allocation0] sm:$0x1] %vm15, %v14
    %s17 = scalar_lea.vmem %s0, 13
    %v18 = vld [vmem:[%s17] sm:$0x1]
    %19 = vrot.lane.b32.xlu0 %v18, 104
    %v20 = vpop.permute.xlu0 %19
    %vm21 = vcmask 917312
    %22 = vst.msk [vmem:[#allocation0] sm:$0x1] %vm21, %v20
    %s23 = scalar_lea.vmem %s0, 12
    %v24 = vld [vmem:[%s23] sm:$0x1]
    %25 = vrot.lane.b32.xlu0 %v24, 96
    %v26 = vpop.permute.xlu0 %25
    %vm27 = vcmask 851712
    %28 = vst.msk [vmem:[#allocation0] sm:$0x1] %vm27, %v26
    %s29 = scalar_lea.vmem %s0, 11
    %v30 = vld [vmem:[%s29] sm:$0x1]
    %31 = vrot.lane.b32.xlu0 %v30, 88
    %v32 = vpop.permute.xlu0 %31
    %vm33 = vcmask 786112
    %34 = vst.msk [vmem:[#allocation0] sm:$0x1] %vm33, %v32
    %s35 = scalar_lea.vmem %s0, 10
    %v36 = vld [vmem:[%s35] sm:$0x1]
    %37 = vrot.lane.b32.xlu0 %v36, 80
    %v38 = vpop.permute.xlu0 %37
    %vm39 = vcmask 720512
    %40 = vst.msk [vmem:[#allocation0] sm:$0x1] %vm39, %v38
    %s41 = scalar_lea.vmem %s0, 9
    %v42 = vld [vmem:[%s41] sm:$0x1]
    %43 = vrot.lane.b32.xlu0 %v42, 72
    %v44 = vpop.permute.xlu0 %43
    %vm45 = vcmask 654912
    %46 = vst.msk [vmem:[#allocation0] sm:$0x1] %vm45, %v44
    %s47 = scalar_lea.vmem %s0, 8
    %v48 = vld [vmem:[%s47] sm:$0x1]
    %49 = vrot.lane.b32.xlu0 %v48, 64
    %v50 = vpop.permute.xlu0 %49
    %vm51 = vcmask 589312
    %52 = vst.msk [vmem:[#allocation0] sm:$0x1] %vm51, %v50
    %s53 = scalar_lea.vmem %s0, 7
    %v54 = vld [vmem:[%s53] sm:$0x1]
    %55 = vrot.lane.b32.xlu0 %v54, 56
    %v56 = vpop.permute.xlu0 %55
    %vm57 = vcmask 523712
    %58 = vst.msk [vmem:[#allocation0] sm:$0x1] %vm57, %v56
    %s59 = scalar_lea.vmem %s0, 6
    %v60 = vld [vmem:[%s59] sm:$0x1]
    %61 = vrot.lane.b32.xlu0 %v60, 48
    %v62 = vpop.permute.xlu0 %61
    %vm63 = vcmask 458112
    %64 = vst.msk [vmem:[#allocation0] sm:$0x1] %vm63, %v62
    %s65 = scalar_lea.vmem %s0, 5
    %v66 = vld [vmem:[%s65] sm:$0x1]
    %67 = vrot.lane.b32.xlu0 %v66, 40
    %v68 = vpop.permute.xlu0 %67
    %vm69 = vcmask 392512
    %70 = vst.msk [vmem:[#allocation0] sm:$0x1] %vm69, %v68
    %s71 = scalar_lea.vmem %s0, 4
    %v72 = vld [vmem:[%s71] sm:$0x1]
    %73 = vrot.lane.b32.xlu0 %v72, 32
    %v74 = vpop.permute.xlu0 %73
    %vm75 = vcmask 326912
    %76 = vst.msk [vmem:[#allocation0] sm:$0x1] %vm75, %v74
    %s77 = scalar_lea.vmem %s0, 3
    %v78 = vld [vmem:[%s77] sm:$0x1]
    %79 = vrot.lane.b32.xlu0 %v78, 24
    %v80 = vpop.permute.xlu0 %79
    %vm81 = vcmask 261312
    %82 = vst.msk [vmem:[#allocation0] sm:$0x1] %vm81, %v80
    %s83 = scalar_lea.vmem %s0, 2
    %v84 = vld [vmem:[%s83] sm:$0x1]
    %85 = vrot.lane.b32.xlu0 %v84, 16
    %v86 = vpop.permute.xlu0 %85
    %vm87 = vcmask 195712
    %88 = vst.msk [vmem:[#allocation0] sm:$0x1] %vm87, %v86
    %s89 = scalar_lea.vmem %s0, 1
    %v90 = vld [vmem:[%s89] sm:$0x1]
    %91 = vrot.lane.b32.xlu0 %v90, 8
    %v92 = vpop.permute.xlu0 %91
    %vm93 = vcmask 130112
    %94 = vst.msk [vmem:[#allocation0] sm:$0x1] %vm93, %v92
    %s96 = sshll.u32 1, 1
    %s97 = ssub.s32 %s96, 1
    %v99 = vld [vmem:[#allocation0] sm:%s97]
    %s100 = sshll.u32 1, 1
    %s101 = ssub.s32 %s100, 1
    %102 = vst [vmem:[%s1] sm:%s101] %v99

// kernel: up_block_forward.3
$region0: #{up_block_forward.3}
  #allocation0 [shape = 'u32[]', space=smem, size = 0x4, offset = 0x4, fixed_abs, tag = 'smem constant byte address 0x4 - core index']
  #allocation1 [shape = 'u32[144,128]{1,0:T(1,128)}', space=vmem, size = 0x12000, scoped, tag = 'internal scratch']
  %s0 = inlined_call_operand.vmem [shape: f32[128,128], index: 0, kind: input, shape index: {}]
  %s1 = inlined_call_operand.vmem [shape: f32[1,128], index: 1, kind: input, shape index: {}]
  %s2 = inlined_call_operand.vmem [shape: f32[1,128], index: 2, kind: input, shape index: {}]
  %s3 = inlined_call_operand.vmem [shape: f32[128,128], index: 3, kind: output, shape index: {}]
  %s4 = sld [smem:[#allocation0]]
  $region22: #{up_block_forward.3} parent=0
    _
  %s6 = ssub.s32 1, %s4
  %s7 = scalar_select 0, %s6, %s4
  // Predicated region
  $region2: #{up_block_forward.3} parent=0 // pred_check
    _
  $region3: #{up_block_forward.3} parent=0 // pred_check_branch
    %9 = sbr.rel (0) target = $region5
  $region4: #{up_block_forward.3} parent=0 // pred_region
    _
  $region5: #{up_block_forward.3} parent=0 // pred_fallthru
    _
  // Predicated region
  $region6: #{up_block_forward.3} parent=0 // pred_check
    _
  $region7: #{up_block_forward.3} parent=0 // pred_check_branch
    %11 = sbr.rel (0) target = $region9
  $region8: #{up_block_forward.3} parent=0 // pred_region
    _
  $region9: #{up_block_forward.3} parent=0 // pred_fallthru
    _
  // Predicated region
  $region10: #{up_block_forward.3} parent=0 // pred_check
    _
  $region11: #{up_block_forward.3} parent=0 // pred_check_branch
    %13 = sbr.rel (0) target = $region13
  $region12: #{up_block_forward.3} parent=0 // pred_region
    _
  $region13: #{up_block_forward.3} parent=0 // pred_fallthru
    _
  %v14 = vld [vmem:[%s0] sm:$0xff]
  %v15 = vld [vmem:[%s0 + $0x8] sm:$0xff]
  %v16 = vld [vmem:[%s0 + $0x10] sm:$0xff]
  %v17 = vld [vmem:[%s0 + $0x18] sm:$0xff]
  %v18 = vld [vmem:[%s0 + $0x20] sm:$0xff]
  %v19 = vld [vmem:[%s0 + $0x28] sm:$0xff]
  %v20 = vld [vmem:[%s0 + $0x30] sm:$0xff]
  %v21 = vld [vmem:[%s0 + $0x38] sm:$0xff]
  %v22 = vld [vmem:[%s0 + $0x40] sm:$0xff]
  %v23 = vld [vmem:[%s0 + $0x48] sm:$0xff]
  %v24 = vld [vmem:[%s0 + $0x50] sm:$0xff]
  %v25 = vld [vmem:[%s0 + $0x58] sm:$0xff]
  %v26 = vld [vmem:[%s0 + $0x60] sm:$0xff]
  %v27 = vld [vmem:[%s0 + $0x68] sm:$0xff]
  %v28 = vld [vmem:[%s0 + $0x70] sm:$0xff]
  %v29 = vld [vmem:[%s0 + $0x78] sm:$0xff]
  %v30 = vld [vmem:[%s1] sm:$0x1]
  %v32 = vlaneseq
  %v33 = vshrl.u32 %v32, 7
  %v34 = vsub.s32 0, %v33
  %v35 = vrot.slane %v30, %v34
  %v37 = vmul.f32 %v14, %v35
  %v38 = vmul.f32 %v15, %v35
  %v39 = vmul.f32 %v16, %v35
  %v40 = vmul.f32 %v17, %v35
  %v41 = vmul.f32 %v18, %v35
  %v42 = vmul.f32 %v19, %v35
  %v43 = vmul.f32 %v20, %v35
  %v44 = vmul.f32 %v21, %v35
  %v45 = vmul.f32 %v22, %v35
  %v46 = vmul.f32 %v23, %v35
  %v47 = vmul.f32 %v24, %v35
  %v48 = vmul.f32 %v25, %v35
  %v49 = vmul.f32 %v26, %v35
  %v50 = vmul.f32 %v27, %v35
  %v51 = vmul.f32 %v28, %v35
  %v52 = vmul.f32 %v29, %v35
  %v53 = vld [vmem:[%s2] sm:$0x1]
  %v55 = vlaneseq
  %v56 = vshrl.u32 %v55, 7
  %v57 = vsub.s32 0, %v56
  %v58 = vrot.slane %v53, %v57
  %v60 = vadd.f32 %v37, %v58
  %v61 = vadd.f32 %v38, %v58
  %v62 = vadd.f32 %v39, %v58
  %v63 = vadd.f32 %v40, %v58
  %v64 = vadd.f32 %v41, %v58
  %v65 = vadd.f32 %v42, %v58
  %v66 = vadd.f32 %v43, %v58
  %v67 = vadd.f32 %v44, %v58
  %v68 = vadd.f32 %v45, %v58
  %v69 = vadd.f32 %v46, %v58
  %v70 = vadd.f32 %v47, %v58
  %v71 = vadd.f32 %v48, %v58
  %v72 = vadd.f32 %v49, %v58
  %v73 = vadd.f32 %v50, %v58
  %v74 = vadd.f32 %v51, %v58
  %v75 = vadd.f32 %v52, %v58
  %vm76 = vcmp.ge.f32.partialorder %v60, 0.0
  %vm77 = vcmp.ge.f32.partialorder %v61, 0.0
  %vm78 = vcmp.ge.f32.partialorder %v62, 0.0
  %vm79 = vcmp.ge.f32.partialorder %v63, 0.0
  %vm80 = vcmp.ge.f32.partialorder %v64, 0.0
  %vm81 = vcmp.ge.f32.partialorder %v65, 0.0
  %vm82 = vcmp.ge.f32.partialorder %v66, 0.0
  %vm83 = vcmp.ge.f32.partialorder %v67, 0.0
  %vm84 = vcmp.ge.f32.partialorder %v68, 0.0
  %vm85 = vcmp.ge.f32.partialorder %v69, 0.0
  %vm86 = vcmp.ge.f32.partialorder %v70, 0.0
  %vm87 = vcmp.ge.f32.partialorder %v71, 0.0
  %vm88 = vcmp.ge.f32.partialorder %v72, 0.0
  %vm89 = vcmp.ge.f32.partialorder %v73, 0.0
  %vm90 = vcmp.ge.f32.partialorder %v74, 0.0
  %vm91 = vcmp.ge.f32.partialorder %v75, 0.0
  %v92 = vmul.f32 %v60, 0.2
  %v93 = vmul.f32 %v61, 0.2
  %v94 = vmul.f32 %v62, 0.2
  %v95 = vmul.f32 %v63, 0.2
  %v96 = vmul.f32 %v64, 0.2
  %v97 = vmul.f32 %v65, 0.2
  %v98 = vmul.f32 %v66, 0.2
  %v99 = vmul.f32 %v67, 0.2
  %v100 = vmul.f32 %v68, 0.2
  %v101 = vmul.f32 %v69, 0.2
  %v102 = vmul.f32 %v70, 0.2
  %v103 = vmul.f32 %v71, 0.2
  %v104 = vmul.f32 %v72, 0.2
  %v105 = vmul.f32 %v73, 0.2
  %v106 = vmul.f32 %v74, 0.2
  %v107 = vmul.f32 %v75, 0.2
  %v108 = vsel %vm76, %v60, %v92
  %v109 = vsel %vm77, %v61, %v93
  %v110 = vsel %vm78, %v62, %v94
  %v111 = vsel %vm79, %v63, %v95
  %v112 = vsel %vm80, %v64, %v96
  %v113 = vsel %vm81, %v65, %v97
  %v114 = vsel %vm82, %v66, %v98
  %v115 = vsel %vm83, %v67, %v99
  %v116 = vsel %vm84, %v68, %v100
  %v117 = vsel %vm85, %v69, %v101
  %v118 = vsel %vm86, %v70, %v102
  %v119 = vsel %vm87, %v71, %v103
  %v120 = vsel %vm88, %v72, %v104
  %v121 = vsel %vm89, %v73, %v105
  %v122 = vsel %vm90, %v74, %v106
  %v123 = vsel %vm91, %v75, %v107
  %124 = vst [vmem:[%s3] sm:$0xff] %v108
  %125 = vst [vmem:[%s3 + $0x8] sm:$0xff] %v109
  %126 = vst [vmem:[%s3 + $0x10] sm:$0xff] %v110
  %127 = vst [vmem:[%s3 + $0x18] sm:$0xff] %v111
  %128 = vst [vmem:[%s3 + $0x20] sm:$0xff] %v112
  %129 = vst [vmem:[%s3 + $0x28] sm:$0xff] %v113
  %130 = vst [vmem:[%s3 + $0x30] sm:$0xff] %v114
  %131 = vst [vmem:[%s3 + $0x38] sm:$0xff] %v115
  %132 = vst [vmem:[%s3 + $0x40] sm:$0xff] %v116
  %133 = vst [vmem:[%s3 + $0x48] sm:$0xff] %v117
  %134 = vst [vmem:[%s3 + $0x50] sm:$0xff] %v118
  %135 = vst [vmem:[%s3 + $0x58] sm:$0xff] %v119
  %136 = vst [vmem:[%s3 + $0x60] sm:$0xff] %v120
  %137 = vst [vmem:[%s3 + $0x68] sm:$0xff] %v121
  %138 = vst [vmem:[%s3 + $0x70] sm:$0xff] %v122
  %139 = vst [vmem:[%s3 + $0x78] sm:$0xff] %v123
  // Predicated region
  $region14: #{up_block_forward.3} parent=0 // pred_check
    _
  $region15: #{up_block_forward.3} parent=0 // pred_check_branch
    %141 = sbr.rel (0) target = $region17
  $region16: #{up_block_forward.3} parent=0 // pred_region
    _
  $region17: #{up_block_forward.3} parent=0 // pred_fallthru
    _
  // Predicated region
  $region18: #{up_block_forward.3} parent=0 // pred_check
    _
  $region19: #{up_block_forward.3} parent=0 // pred_check_branch
    %143 = sbr.rel (0) target = $region21
  $region20: #{up_block_forward.3} parent=0 // pred_region
    _
  $region21: #{up_block_forward.3} parent=0 // pred_fallthru
    _

// kernel: up_block_forward.2
$region0: #{up_block_forward.2}
  #allocation0 [shape = 'u32[]', space=smem, size = 0x4, offset = 0x4, fixed_abs, tag = 'smem constant byte address 0x4 - core index']
  #allocation1 [shape = 'u32[144,128]{1,0:T(1,128)}', space=vmem, size = 0x12000, scoped, tag = 'internal scratch']
  %s0 = inlined_call_operand.vmem [shape: f32[2,18,18,4], index: 0, kind: input, shape index: {}, may-alias: {0,1,2}]
  %s1 = inlined_call_operand.vmem [shape: f32[2,18,18,4], index: 1, kind: input, shape index: {}, may-alias: {0,1,2}]
  %s2 = inlined_call_operand.vmem [shape: f32[2,18,18,4], index: 2, kind: input, shape index: {}, may-alias: {0,1,2}]
  %s3 = inlined_call_operand.vmem [shape: f32[2,2,4,4,8], index: 3, kind: input, shape index: {}]
  %s4 = inlined_call_operand.vmem [shape: f32[2,16,2,16,16], index: 4, kind: output, shape index: {0}]
  %s5 = inlined_call_operand.vmem [shape: f32[2,1,2,8], index: 5, kind: output, shape index: {1}]
  %6 = xla_tuple %s4, %s5
  %s7 = sld [smem:[#allocation0]]
  $region57: #{up_block_forward.2} parent=0
    _
  %s9 = ssub.s32 1, %s7
  %s10 = scalar_select 0, %s9, %s7
  loop: start=0, step=1, limit=4
  $region2: #{up_block_forward.2} parent=0 // loop_pre_header
    _
  $region3: #{up_block_forward.2} parent=0 // loop_header
    %s12 = sphi 0, %s16
    %p13 = scmp.ge.s32.totalorder %s12, 4
    %s19 = sphi 0, %s31
    %s20 = sphi 0, %s27
    %s21 = sphi 0, %s19
    %s22 = sphi 0, %s20
    %s23 = sphi 0, %s21
    %s24 = sphi 0, %s22
    %s36 = sphi 0, %s38
    %s39 = sphi 0, %s36
    %s40 = sphi 0, %s39
    %s56 = sphi 0, %s40
    %s68 = sphi 0, %s70
    %s71 = sphi 0, %s68
    %s72 = sphi 0, %s71
    %s88 = sphi 0, %s72
    %s102 = sphi 0, %s104
    %s105 = sphi 0, %s102
    %s106 = sphi 0, %s105
    %s122 = sphi 0, %s106
    %s126 = sphi 0, %s126
    %s128 = sphi 0, %s126
    %s129 = sphi 0, %s128
    %s143 = sphi 0, %s129
    %s151 = sphi 0, %s153
    %s154 = sphi 0, %s151
    %s155 = sphi 0, %s154
    %s171 = sphi 0, %s155
    %s179 = sphi 0, %s181
    %s182 = sphi 0, %s179
    %s183 = sphi 0, %s182
    %s199 = sphi 0, %s183
  $region4: #{up_block_forward.2} parent=0 // loop_header_branch
    %15 = sbr.rel (%p13) target = $region8
  $region5: #{up_block_forward.2} parent=0 // loop_body
    %s17 = ssub.s32 %s12, 1
    %s18 = ssub.s32 %s12, 2
    %s25 = sadd.s32 1, %s20
    %p26 = scmp.ge.s32.totalorder %s25, 1
    %s27 = scalar_select %p26, 0, %s25
    %s28 = sadd.s32 1, %s19
    %s29 = scalar_select %p26, %s28, %s19
    %p30 = scmp.ge.s32.totalorder %s29, 2
    %s31 = scalar_select %p30, 0, %s29
    %s32 = ssub.s32 %s19, %s31
    %s33 = ssub.s32 %s20, %s27
    %s34 = sor.u32 %s32, %s33
    %p35 = scmp.eq.s32.totalorder %s34, 0
    %s37 = sadd.s32 %s36, 1
    %s38 = scalar_select %p35, %s36, %s37
    %p41 = pneg %p35
    %p42 = scmp.eq.s32.totalorder %s12, 1
    %p43 = por %p41, %p42
    %p44 = scmp.ne.s32.totalorder %s36, %s39
    %p45 = scmp.eq.s32.totalorder %s12, 0
    %p46 = por %p44, %p45
    %p47 = scmp.ne.s32.totalorder %s36, %s39
    %p48 = scmp.eq.s32.totalorder %s17, 1
    %p49 = por %p47, %p48
    %p50 = scmp.ne.s32.totalorder %s39, %s40
    %p51 = scmp.eq.s32.totalorder %s17, 0
    %p52 = por %p50, %p51
    %p53 = scmp.ne.s32.totalorder %s39, %s40
    %p54 = scmp.eq.s32.totalorder %s18, 1
    %p55 = por %p53, %p54
    %p57 = scmp.ne.s32.totalorder %s40, %s56
    %p58 = scmp.eq.s32.totalorder %s18, 0
    %p59 = por %p57, %p58
    %s60 = sadd.s32 %s20, 1
    %s61 = smul.u32 %s60, 16
    %s62 = sadd.s32 %s27, 1
    %s63 = smul.u32 %s62, 16
    %s64 = ssub.s32 %s19, %s31
    %s65 = ssub.s32 %s61, %s63
    %s66 = sor.u32 %s64, %s65
    %p67 = scmp.eq.s32.totalorder %s66, 0
    %s69 = sadd.s32 %s68, 1
    %s70 = scalar_select %p67, %s68, %s69
    %p73 = pneg %p67
    %p74 = scmp.eq.s32.totalorder %s12, 1
    %p75 = por %p73, %p74
    %p76 = scmp.ne.s32.totalorder %s68, %s71
    %p77 = scmp.eq.s32.totalorder %s12, 0
    %p78 = por %p76, %p77
    %p79 = scmp.ne.s32.totalorder %s68, %s71
    %p80 = scmp.eq.s32.totalorder %s17, 1
    %p81 = por %p79, %p80
    %p82 = scmp.ne.s32.totalorder %s71, %s72
    %p83 = scmp.eq.s32.totalorder %s17, 0
    %p84 = por %p82, %p83
    %p85 = scmp.ne.s32.totalorder %s71, %s72
    %p86 = scmp.eq.s32.totalorder %s18, 1
    %p87 = por %p85, %p86
    %p89 = scmp.ne.s32.totalorder %s72, %s88
    %p90 = scmp.eq.s32.totalorder %s18, 0
    %p91 = por %p89, %p90
    %s92 = sadd.s32 %s20, 1
    %s93 = smul.u32 %s92, 16
    %s94 = sadd.s32 %s93, 1
    %s95 = sadd.s32 %s27, 1
    %s96 = smul.u32 %s95, 16
    %s97 = sadd.s32 %s96, 1
    %s98 = ssub.s32 %s19, %s31
    %s99 = ssub.s32 %s94, %s97
    %s100 = sor.u32 %s98, %s99
    %p101 = scmp.eq.s32.totalorder %s100, 0
    %s103 = sadd.s32 %s102, 1
    %s104 = scalar_select %p101, %s102, %s103
    %p107 = pneg %p101
    %p108 = scmp.eq.s32.totalorder %s12, 1
    %p109 = por %p107, %p108
    %p110 = scmp.ne.s32.totalorder %s102, %s105
    %p111 = scmp.eq.s32.totalorder %s12, 0
    %p112 = por %p110, %p111
    %p113 = scmp.ne.s32.totalorder %s102, %s105
    %p114 = scmp.eq.s32.totalorder %s17, 1
    %p115 = por %p113, %p114
    %p116 = scmp.ne.s32.totalorder %s105, %s106
    %p117 = scmp.eq.s32.totalorder %s17, 0
    %p118 = por %p116, %p117
    %p119 = scmp.ne.s32.totalorder %s105, %s106
    %p120 = scmp.eq.s32.totalorder %s18, 1
    %p121 = por %p119, %p120
    %p123 = scmp.ne.s32.totalorder %s106, %s122
    %p124 = scmp.eq.s32.totalorder %s18, 0
    %p125 = por %p123, %p124
    %s127 = sadd.s32 %s126, 1
    %p130 = scmp.eq.s32.totalorder %s12, 1
    %p131 = scmp.ne.s32.totalorder %s126, %s128
    %p132 = scmp.eq.s32.totalorder %s12, 0
    %p133 = por %p131, %p132
    %p134 = scmp.ne.s32.totalorder %s126, %s128
    %p135 = scmp.eq.s32.totalorder %s17, 1
    %p136 = por %p134, %p135
    %p137 = scmp.ne.s32.totalorder %s128, %s129
    %p138 = scmp.eq.s32.totalorder %s17, 0
    %p139 = por %p137, %p138
    %p140 = scmp.ne.s32.totalorder %s128, %s129
    %p141 = scmp.eq.s32.totalorder %s18, 1
    %p142 = por %p140, %p141
    %p144 = scmp.ne.s32.totalorder %s129, %s143
    %p145 = scmp.eq.s32.totalorder %s18, 0
    %p146 = por %p144, %p145
    %s147 = ssub.s32 %s19, %s31
    %s148 = ssub.s32 %s20, %s27
    %s149 = sor.u32 %s147, %s148
    %p150 = scmp.eq.s32.totalorder %s149, 0
    %s152 = sadd.s32 %s151, 1
    %s153 = scalar_select %p150, %s151, %s152
    %p156 = pneg %p150
    %p157 = scmp.eq.s32.totalorder %s12, 1
    %p158 = por %p156, %p157
    %p159 = scmp.ne.s32.totalorder %s151, %s154
    %p160 = scmp.eq.s32.totalorder %s12, 0
    %p161 = por %p159, %p160
    %p162 = scmp.ne.s32.totalorder %s151, %s154
    %p163 = scmp.eq.s32.totalorder %s17, 1
    %p164 = por %p162, %p163
    %p165 = scmp.ne.s32.totalorder %s154, %s155
    %p166 = scmp.eq.s32.totalorder %s17, 0
    %p167 = por %p165, %p166
    %p168 = scmp.ne.s32.totalorder %s154, %s155
    %p169 = scmp.eq.s32.totalorder %s18, 1
    %p170 = por %p168, %p169
    %p172 = scmp.ne.s32.totalorder %s155, %s171
    %p173 = scmp.eq.s32.totalorder %s18, 0
    %p174 = por %p172, %p173
    %s175 = ssub.s32 %s19, %s31
    %s176 = ssub.s32 %s20, %s27
    %s177 = sor.u32 %s175, %s176
    %p178 = scmp.eq.s32.totalorder %s177, 0
    %s180 = sadd.s32 %s179, 1
    %s181 = scalar_select %p178, %s179, %s180
    %p184 = pneg %p178
    %p185 = scmp.eq.s32.totalorder %s12, 1
    %p186 = por %p184, %p185
    %p187 = scmp.ne.s32.totalorder %s179, %s182
    %p188 = scmp.eq.s32.totalorder %s12, 0
    %p189 = por %p187, %p188
    %p190 = scmp.ne.s32.totalorder %s179, %s182
    %p191 = scmp.eq.s32.totalorder %s17, 1
    %p192 = por %p190, %p191
    %p193 = scmp.ne.s32.totalorder %s182, %s183
    %p194 = scmp.eq.s32.totalorder %s17, 0
    %p195 = por %p193, %p194
    %p196 = scmp.ne.s32.totalorder %s182, %s183
    %p197 = scmp.eq.s32.totalorder %s18, 1
    %p198 = por %p196, %p197
    %p200 = scmp.ne.s32.totalorder %s183, %s199
    %p201 = scmp.eq.s32.totalorder %s18, 0
    %p202 = por %p200, %p201
    %p203 = scmp.le.s32.totalorder 1, %s12
    %p204 = scmp.lt.s32.totalorder %s12, 3
    %p205 = pnand %p203, %p204
    %p206 = pneg %p205
    // Predicated region
    $region9: #{up_block_forward.2} parent=5 // pred_check
      _
    $region10: #{up_block_forward.2} parent=5 // pred_check_branch
      %208 = sbr.rel (%p205) target = $region12
    $region11: #{up_block_forward.2} parent=5 // pred_region
      %s209 = ssub.s32 %s12, 1
      // Predicated region
      $region13: #{up_block_forward.2} parent=11 // pred_check
        %p210 = pneg %p139
      $region14: #{up_block_forward.2} parent=11 // pred_check_branch
        %212 = sbr.rel (%p210) target = $region16
      $region15: #{up_block_forward.2} parent=11 // pred_region
        _
      $region16: #{up_block_forward.2} parent=11 // pred_fallthru
        _
    $region12: #{up_block_forward.2} parent=5 // pred_fallthru
      _
    %p213 = scmp.lt.s32.totalorder %s12, 2
    // Predicated region
    $region17: #{up_block_forward.2} parent=5 // pred_check
      %p214 = pneg %p213
    $region18: #{up_block_forward.2} parent=5 // pred_check_branch
      %216 = sbr.rel (%p214) target = $region20
    $region19: #{up_block_forward.2} parent=5 // pred_region
      // Predicated region
      $region21: #{up_block_forward.2} parent=19 // pred_check
        %p217 = pneg %p46
      $region22: #{up_block_forward.2} parent=19 // pred_check_branch
        %219 = sbr.rel (%p217) target = $region24
      $region23: #{up_block_forward.2} parent=19 // pred_region
        %s220 = smul.u32 16, %s20
        %s221 = ssub.s32 18, %s220
        %p222 = scmp.lt.s32.totalorder %s221, 16
        %s223 = scalar_select %p222, %s221, 16
        %s224 = smul.u32 128, %s223
        %s225 = smul.u32 %s224, 3
        %p226 = scmp.lt.s32.totalorder %s19, 1
        %s227 = scalar_select %p226, %s19, 1
        %p228 = scmp.lt.s32.totalorder %s220, 17
        %s229 = scalar_select %p228, %s220, 17
        %s230 = smul.addr %s229, 3
        %s231 = smul.addr %s227, 54
        %s232 = sadd.s32 %s230, %s231
        %s233 = smul.addr %s232, 8
        %s234 = scalar_lea.vmem %s0, %s233
        %s235 = smul.u32 16, %s20
        %s236 = ssub.s32 18, %s235
        %p237 = scmp.lt.s32.totalorder %s236, 16
        %s238 = scalar_select %p237, %s236, 16
        %s239 = smul.u32 128, %s238
        %s240 = smul.u32 %s239, 3
      $region24: #{up_block_forward.2} parent=19 // pred_fallthru
        _
      // Predicated region
      $region25: #{up_block_forward.2} parent=19 // pred_check
        %p241 = pneg %p78
      $region26: #{up_block_forward.2} parent=19 // pred_check_branch
        %243 = sbr.rel (%p241) target = $region28
      $region27: #{up_block_forward.2} parent=19 // pred_region
        %s244 = sadd.s32 %s20, 1
        %s245 = smul.u32 %s244, 16
        %p246 = scmp.lt.s32.totalorder %s19, 1
        %s247 = scalar_select %p246, %s19, 1
        %p248 = scmp.lt.s32.totalorder %s245, 17
        %s249 = scalar_select %p248, %s245, 17
        %s250 = smul.addr %s249, 3
        %s251 = smul.addr %s247, 54
        %s252 = sadd.s32 %s250, %s251
        %s253 = smul.addr %s252, 8
        %s254 = scalar_lea.vmem %s1, %s253
        %s255 = sadd.s32 %s20, 1
        %s256 = smul.u32 %s255, 16
      $region28: #{up_block_forward.2} parent=19 // pred_fallthru
        _
      // Predicated region
      $region29: #{up_block_forward.2} parent=19 // pred_check
        %p257 = pneg %p112
      $region30: #{up_block_forward.2} parent=19 // pred_check_branch
        %259 = sbr.rel (%p257) target = $region32
      $region31: #{up_block_forward.2} parent=19 // pred_region
        %s260 = sadd.s32 %s20, 1
        %s261 = smul.u32 %s260, 16
        %s262 = sadd.s32 %s261, 1
        %p263 = scmp.lt.s32.totalorder %s19, 1
        %s264 = scalar_select %p263, %s19, 1
        %p265 = scmp.lt.s32.totalorder %s262, 17
        %s266 = scalar_select %p265, %s262, 17
        %s267 = smul.addr %s266, 3
        %s268 = smul.addr %s264, 54
        %s269 = sadd.s32 %s267, %s268
        %s270 = smul.addr %s269, 8
        %s271 = scalar_lea.vmem %s2, %s270
        %s272 = sadd.s32 %s20, 1
        %s273 = smul.u32 %s272, 16
        %s274 = sadd.s32 %s273, 1
      $region32: #{up_block_forward.2} parent=19 // pred_fallthru
        _
    $region20: #{up_block_forward.2} parent=5 // pred_fallthru
      _
    %p275 = scmp.le.s32.totalorder 1, %s12
    %p276 = scmp.lt.s32.totalorder %s12, 3
    %p277 = pnand %p275, %p276
    %p278 = pneg %p277
    // Predicated region
    $region33: #{up_block_forward.2} parent=5 // pred_check
      _
    $region34: #{up_block_forward.2} parent=5 // pred_check_branch
      %280 = sbr.rel (%p277) target = $region36
    $region35: #{up_block_forward.2} parent=5 // pred_region
      %s281 = ssub.s32 %s12, 1
      %s282 = smul.u32 16, %s22
      %s283 = ssub.s32 18, %s282
      %p284 = scmp.lt.s32.totalorder %s283, 16
      %s285 = scalar_select %p284, %s283, 16
      %s286 = smul.u32 128, %s285
      %s287 = smul.u32 %s286, 3
      %p288 = scmp.lt.s32.totalorder %s21, 1
      %s289 = scalar_select %p288, %s21, 1
      %p290 = scmp.lt.s32.totalorder %s282, 17
      %s291 = scalar_select %p290, %s282, 17
      %s292 = smul.addr %s291, 3
      %s293 = smul.addr %s289, 54
      %s294 = sadd.s32 %s292, %s293
      %s295 = smul.addr %s294, 8
      %s296 = scalar_lea.vmem %s0, %s295
      %p297 = pneg %p52
      %p298 = pneg %p49
      %s299 = sadd.s32 %s22, 1
      %s300 = smul.u32 %s299, 16
      %p301 = scmp.lt.s32.totalorder %s21, 1
      %s302 = scalar_select %p301, %s21, 1
      %p303 = scmp.lt.s32.totalorder %s300, 17
      %s304 = scalar_select %p303, %s300, 17
      %s305 = smul.addr %s304, 3
      %s306 = smul.addr %s302, 54
      %s307 = sadd.s32 %s305, %s306
      %s308 = smul.addr %s307, 8
      %s309 = scalar_lea.vmem %s1, %s308
      %p310 = pneg %p84
      %p311 = pneg %p81
      %s312 = sadd.s32 %s22, 1
      %s313 = smul.u32 %s312, 16
      %s314 = sadd.s32 %s313, 1
      %p315 = scmp.lt.s32.totalorder %s21, 1
      %s316 = scalar_select %p315, %s21, 1
      %p317 = scmp.lt.s32.totalorder %s314, 17
      %s318 = scalar_select %p317, %s314, 17
      %s319 = smul.addr %s318, 3
      %s320 = smul.addr %s316, 54
      %s321 = sadd.s32 %s319, %s320
      %s322 = smul.addr %s321, 8
      %s323 = scalar_lea.vmem %s2, %s322
      %p324 = pneg %p118
      %p325 = pneg %p115
      %p326 = pneg %p139
      %p327 = pneg %p136
      %p328 = pneg %p167
      %p329 = pneg %p164
      %s330 = smul.u32 16, %s22
      %p331 = scmp.lt.s32.totalorder %s21, 1
      %s332 = scalar_select %p331, %s21, 1
      %p333 = scmp.lt.s32.totalorder %s330, 15
      %s334 = scalar_select %p333, %s330, 15
      %s335 = smul.addr %s334, 4
      %s336 = smul.addr %s332, 64
      %s337 = sadd.s32 %s335, %s336
      %s338 = smul.addr %s337, 8
      %s339 = scalar_lea.vmem %s4, %s338
      %p340 = pneg %p195
      %p341 = pneg %p192
      %p342 = scmp.lt.s32.totalorder %s21, 1
      %s343 = scalar_select %p342, %s21, 1
      %p344 = scmp.lt.s32.totalorder %s22, 0
      %s345 = scalar_select %p344, %s22, 0
      %s346 = sadd.s32 %s345, %s343
      %s347 = smul.addr %s346, 2
      %s348 = scalar_lea.vmem %s5, %s347
      %s349 = smul.u32 16, %s22
      %s350 = ssub.s32 18, %s349
      %p351 = scmp.lt.s32.totalorder %s350, 16
      %s352 = scalar_select %p351, %s350, 16
      %s353 = smul.u32 128, %s352
      %s354 = smul.u32 %s353, 3
      %p355 = scmp.lt.s32.totalorder %s21, 1
      %s356 = scalar_select %p355, %s21, 1
      %p357 = scmp.lt.s32.totalorder %s349, 17
      %s358 = scalar_select %p357, %s349, 17
      %s359 = smul.addr %s358, 3
      %s360 = smul.addr %s356, 54
      %s361 = sadd.s32 %s359, %s360
      %s362 = smul.addr %s361, 8
      %s363 = scalar_lea.vmem %s0, %s362
      %s364 = smul.u32 16, %s22
      %s365 = ssub.s32 18, %s364
      %p366 = scmp.lt.s32.totalorder %s365, 16
      %s367 = scalar_select %p366, %s365, 16
      %s368 = smul.u32 128, %s367
      %s369 = smul.u32 %s368, 3
      %s370 = sadd.s32 %s22, 1
      %s371 = smul.u32 %s370, 16
      %p372 = scmp.lt.s32.totalorder %s21, 1
      %s373 = scalar_select %p372, %s21, 1
      %p374 = scmp.lt.s32.totalorder %s371, 17
      %s375 = scalar_select %p374, %s371, 17
      %s376 = smul.addr %s375, 3
      %s377 = smul.addr %s373, 54
      %s378 = sadd.s32 %s376, %s377
      %s379 = smul.addr %s378, 8
      %s380 = scalar_lea.vmem %s1, %s379
      %s381 = sadd.s32 %s22, 1
      %s382 = smul.u32 %s381, 16
      %s383 = sadd.s32 %s22, 1
      %s384 = smul.u32 %s383, 16
      %s385 = sadd.s32 %s384, 1
      %p386 = scmp.lt.s32.totalorder %s21, 1
      %s387 = scalar_select %p386, %s21, 1
      %p388 = scmp.lt.s32.totalorder %s385, 17
      %s389 = scalar_select %p388, %s385, 17
      %s390 = smul.addr %s389, 3
      %s391 = smul.addr %s387, 54
      %s392 = sadd.s32 %s390, %s391
      %s393 = smul.addr %s392, 8
      %s394 = scalar_lea.vmem %s2, %s393
      %s395 = sadd.s32 %s22, 1
      %s396 = smul.u32 %s395, 16
      %s397 = sadd.s32 %s396, 1
      %s398 = smul.u32 16, %s22
      %p399 = scmp.lt.s32.totalorder %s21, 1
      %s400 = scalar_select %p399, %s21, 1
      %p401 = scmp.lt.s32.totalorder %s398, 15
      %s402 = scalar_select %p401, %s398, 15
      %s403 = smul.addr %s402, 4
      %s404 = smul.addr %s400, 64
      %s405 = sadd.s32 %s403, %s404
      %s406 = smul.addr %s405, 8
      %s407 = scalar_lea.vmem %s4, %s406
      %s408 = smul.u32 16, %s22
      %p409 = scmp.lt.s32.totalorder %s21, 1
      %s410 = scalar_select %p409, %s21, 1
      %p411 = scmp.lt.s32.totalorder %s22, 0
      %s412 = scalar_select %p411, %s22, 0
      %s413 = sadd.s32 %s412, %s410
      %s414 = smul.addr %s413, 2
      %s415 = scalar_lea.vmem %s5, %s414
      %v416 = vld [vmem:[%s363] sm:$0xff]
      %v417 = vld [vmem:[%s363 + $0x8] sm:$0xff]
      %v418 = vld [vmem:[%s363 + $0x10] sm:$0x3]
      %v419 = vld [vmem:[%s363 + $0x18] sm:$0xff]
      %v420 = vld [vmem:[%s363 + $0x20] sm:$0xff]
      %v421 = vld [vmem:[%s363 + $0x28] sm:$0x3]
      %v422 = vld [vmem:[%s363 + $0x30] sm:$0xff]
      %v423 = vld [vmem:[%s363 + $0x38] sm:$0xff]
      %v424 = vld [vmem:[%s363 + $0x40] sm:$0x3]
      %v425 = vld [vmem:[%s363 + $0x48] sm:$0xff]
      %v426 = vld [vmem:[%s363 + $0x50] sm:$0xff]
      %v427 = vld [vmem:[%s363 + $0x58] sm:$0x3]
      %v428 = vld [vmem:[%s363 + $0x60] sm:$0xff]
      %v429 = vld [vmem:[%s363 + $0x68] sm:$0xff]
      %v430 = vld [vmem:[%s363 + $0x70] sm:$0x3]
      %v431 = vld [vmem:[%s363 + $0x78] sm:$0xff]
      %v432 = vld [vmem:[%s363 + $0x80] sm:$0xff]
      %v433 = vld [vmem:[%s363 + $0x88] sm:$0x3]
      %v434 = vld [vmem:[%s363 + $0x90] sm:$0xff]
      %v435 = vld [vmem:[%s363 + $0x98] sm:$0xff]
      %v436 = vld [vmem:[%s363 + $0xa0] sm:$0x3]
      %v437 = vld [vmem:[%s363 + $0xa8] sm:$0xff]
      %v438 = vld [vmem:[%s363 + $0xb0] sm:$0xff]
      %v439 = vld [vmem:[%s363 + $0xb8] sm:$0x3]
      %v440 = vld [vmem:[%s363 + $0xc0] sm:$0xff]
      %v441 = vld [vmem:[%s363 + $0xc8] sm:$0xff]
      %v442 = vld [vmem:[%s363 + $0xd0] sm:$0x3]
      %v443 = vld [vmem:[%s363 + $0xd8] sm:$0xff]
      %v444 = vld [vmem:[%s363 + $0xe0] sm:$0xff]
      %v445 = vld [vmem:[%s363 + $0xe8] sm:$0x3]
      %v446 = vld [vmem:[%s363 + $0xf0] sm:$0xff]
      %v447 = vld [vmem:[%s363 + $0xf8] sm:$0xff]
      %v448 = vld [vmem:[%s363 + $0x100] sm:$0x3]
      %v449 = vld [vmem:[%s363 + $0x108] sm:$0xff]
      %v450 = vld [vmem:[%s363 + $0x110] sm:$0xff]
      %v451 = vld [vmem:[%s363 + $0x118] sm:$0x3]
      %v452 = vld [vmem:[%s363 + $0x120] sm:$0xff]
      %v453 = vld [vmem:[%s363 + $0x128] sm:$0xff]
      %v454 = vld [vmem:[%s363 + $0x130] sm:$0x3]
      %v455 = vld [vmem:[%s363 + $0x138] sm:$0xff]
      %v456 = vld [vmem:[%s363 + $0x140] sm:$0xff]
      %v457 = vld [vmem:[%s363 + $0x148] sm:$0x3]
      %v458 = vld [vmem:[%s363 + $0x150] sm:$0xff]
      %v459 = vld [vmem:[%s363 + $0x158] sm:$0xff]
      %v460 = vld [vmem:[%s363 + $0x160] sm:$0x3]
      %v461 = vld [vmem:[%s363 + $0x168] sm:$0xff]
      %v462 = vld [vmem:[%s363 + $0x170] sm:$0xff]
      %v463 = vld [vmem:[%s363 + $0x178] sm:$0x3]
      %v464 = vld [vmem:[%s380] sm:$0xff]
      %v465 = vld [vmem:[%s380 + $0x8] sm:$0xff]
      %v466 = vld [vmem:[%s380 + $0x10] sm:$0x3]
      %v467 = vld [vmem:[%s394] sm:$0xff]
      %v468 = vld [vmem:[%s394 + $0x8] sm:$0xff]
      %v469 = vld [vmem:[%s394 + $0x10] sm:$0x3]
      %vm518 = vcmask 1046528
      %v519 = vrot.slane %v416, 1
      %v520 = vrot.slane %v417, 1
      %v521 = vsel %vm518, %v519, %v520
      %v522 = vrot.slane %v418, 1
      %v523 = vsel %vm518, %v520, %v522
      %v524 = vrot.slane %v419, 1
      %v525 = vrot.slane %v420, 1
      %v526 = vsel %vm518, %v524, %v525
      %v527 = vrot.slane %v421, 1
      %v528 = vsel %vm518, %v525, %v527
      %v529 = vrot.slane %v422, 1
      %v530 = vrot.slane %v423, 1
      %v531 = vsel %vm518, %v529, %v530
      %v532 = vrot.slane %v424, 1
      %v533 = vsel %vm518, %v530, %v532
      %v534 = vrot.slane %v425, 1
      %v535 = vrot.slane %v426, 1
      %v536 = vsel %vm518, %v534, %v535
      %v537 = vrot.slane %v427, 1
      %v538 = vsel %vm518, %v535, %v537
      %v539 = vrot.slane %v428, 1
      %v540 = vrot.slane %v429, 1
      %v541 = vsel %vm518, %v539, %v540
      %v542 = vrot.slane %v430, 1
      %v543 = vsel %vm518, %v540, %v542
      %v544 = vrot.slane %v431, 1
      %v545 = vrot.slane %v432, 1
      %v546 = vsel %vm518, %v544, %v545
      %v547 = vrot.slane %v433, 1
      %v548 = vsel %vm518, %v545, %v547
      %v549 = vrot.slane %v434, 1
      %v550 = vrot.slane %v435, 1
      %v551 = vsel %vm518, %v549, %v550
      %v552 = vrot.slane %v436, 1
      %v553 = vsel %vm518, %v550, %v552
      %v554 = vrot.slane %v437, 1
      %v555 = vrot.slane %v438, 1
      %v556 = vsel %vm518, %v554, %v555
      %v557 = vrot.slane %v439, 1
      %v558 = vsel %vm518, %v555, %v557
      %v559 = vrot.slane %v440, 1
      %v560 = vrot.slane %v441, 1
      %v561 = vsel %vm518, %v559, %v560
      %v562 = vrot.slane %v442, 1
      %v563 = vsel %vm518, %v560, %v562
      %v564 = vrot.slane %v443, 1
      %v565 = vrot.slane %v444, 1
      %v566 = vsel %vm518, %v564, %v565
      %v567 = vrot.slane %v445, 1
      %v568 = vsel %vm518, %v565, %v567
      %v569 = vrot.slane %v446, 1
      %v570 = vrot.slane %v447, 1
      %v571 = vsel %vm518, %v569, %v570
      %v572 = vrot.slane %v448, 1
      %v573 = vsel %vm518, %v570, %v572
      %v574 = vrot.slane %v449, 1
      %v575 = vrot.slane %v450, 1
      %v576 = vsel %vm518, %v574, %v575
      %v577 = vrot.slane %v451, 1
      %v578 = vsel %vm518, %v575, %v577
      %v579 = vrot.slane %v452, 1
      %v580 = vrot.slane %v453, 1
      %v581 = vsel %vm518, %v579, %v580
      %v582 = vrot.slane %v454, 1
      %v583 = vsel %vm518, %v580, %v582
      %v584 = vrot.slane %v455, 1
      %v585 = vrot.slane %v456, 1
      %v586 = vsel %vm518, %v584, %v585
      %v587 = vrot.slane %v457, 1
      %v588 = vsel %vm518, %v585, %v587
      %v589 = vrot.slane %v458, 1
      %v590 = vrot.slane %v459, 1
      %v591 = vsel %vm518, %v589, %v590
      %v592 = vrot.slane %v460, 1
      %v593 = vsel %vm518, %v590, %v592
      %v594 = vrot.slane %v461, 1
      %v595 = vrot.slane %v462, 1
      %v596 = vsel %vm518, %v594, %v595
      %v597 = vrot.slane %v463, 1
      %v598 = vsel %vm518, %v595, %v597
      %599 = vrot.lane.b32.xlu0 %v521, 4
      %v600 = vpop.permute.xlu0 %599
      %601 = vrot.lane.b32.xlu0 %v523, 4
      %v602 = vpop.permute.xlu0 %601
      %603 = vrot.lane.b32.xlu0 %v526, 4
      %v604 = vpop.permute.xlu0 %603
      %605 = vrot.lane.b32.xlu0 %v528, 4
      %v606 = vpop.permute.xlu0 %605
      %607 = vrot.lane.b32.xlu0 %v531, 4
      %v608 = vpop.permute.xlu0 %607
      %609 = vrot.lane.b32.xlu0 %v533, 4
      %v610 = vpop.permute.xlu0 %609
      %611 = vrot.lane.b32.xlu0 %v536, 4
      %v612 = vpop.permute.xlu0 %611
      %613 = vrot.lane.b32.xlu0 %v538, 4
      %v614 = vpop.permute.xlu0 %613
      %615 = vrot.lane.b32.xlu0 %v541, 4
      %v616 = vpop.permute.xlu0 %615
      %617 = vrot.lane.b32.xlu0 %v543, 4
      %v618 = vpop.permute.xlu0 %617
      %619 = vrot.lane.b32.xlu0 %v546, 4
      %v620 = vpop.permute.xlu0 %619
      %621 = vrot.lane.b32.xlu0 %v548, 4
      %v622 = vpop.permute.xlu0 %621
      %623 = vrot.lane.b32.xlu0 %v551, 4
      %v624 = vpop.permute.xlu0 %623
      %625 = vrot.lane.b32.xlu0 %v553, 4
      %v626 = vpop.permute.xlu0 %625
      %627 = vrot.lane.b32.xlu0 %v556, 4
      %v628 = vpop.permute.xlu0 %627
      %629 = vrot.lane.b32.xlu0 %v558, 4
      %v630 = vpop.permute.xlu0 %629
      %631 = vrot.lane.b32.xlu0 %v561, 4
      %v632 = vpop.permute.xlu0 %631
      %633 = vrot.lane.b32.xlu0 %v563, 4
      %v634 = vpop.permute.xlu0 %633
      %635 = vrot.lane.b32.xlu0 %v566, 4
      %v636 = vpop.permute.xlu0 %635
      %637 = vrot.lane.b32.xlu0 %v568, 4
      %v638 = vpop.permute.xlu0 %637
      %639 = vrot.lane.b32.xlu0 %v571, 4
      %v640 = vpop.permute.xlu0 %639
      %641 = vrot.lane.b32.xlu0 %v573, 4
      %v642 = vpop.permute.xlu0 %641
      %643 = vrot.lane.b32.xlu0 %v576, 4
      %v644 = vpop.permute.xlu0 %643
      %645 = vrot.lane.b32.xlu0 %v578, 4
      %v646 = vpop.permute.xlu0 %645
      %647 = vrot.lane.b32.xlu0 %v581, 4
      %v648 = vpop.permute.xlu0 %647
      %649 = vrot.lane.b32.xlu0 %v583, 4
      %v650 = vpop.permute.xlu0 %649
      %651 = vrot.lane.b32.xlu0 %v586, 4
      %v652 = vpop.permute.xlu0 %651
      %653 = vrot.lane.b32.xlu0 %v588, 4
      %v654 = vpop.permute.xlu0 %653
      %655 = vrot.lane.b32.xlu0 %v591, 4
      %v656 = vpop.permute.xlu0 %655
      %657 = vrot.lane.b32.xlu0 %v593, 4
      %v658 = vpop.permute.xlu0 %657
      %659 = vrot.lane.b32.xlu0 %v596, 4
      %v660 = vpop.permute.xlu0 %659
      %661 = vrot.lane.b32.xlu0 %v598, 4
      %v662 = vpop.permute.xlu0 %661
      %697 = vrot.lane.b32.xlu0 %v419, 8
      %v698 = vpop.permute.xlu0 %697
      %699 = vrot.lane.b32.xlu0 %v420, 8
      %v700 = vpop.permute.xlu0 %699
      %701 = vrot.lane.b32.xlu0 %v422, 8
      %v702 = vpop.permute.xlu0 %701
      %703 = vrot.lane.b32.xlu0 %v423, 8
      %v704 = vpop.permute.xlu0 %703
      %705 = vrot.lane.b32.xlu0 %v425, 8
      %v706 = vpop.permute.xlu0 %705
      %707 = vrot.lane.b32.xlu0 %v426, 8
      %v708 = vpop.permute.xlu0 %707
      %709 = vrot.lane.b32.xlu0 %v428, 8
      %v710 = vpop.permute.xlu0 %709
      %711 = vrot.lane.b32.xlu0 %v429, 8
      %v712 = vpop.permute.xlu0 %711
      %713 = vrot.lane.b32.xlu0 %v431, 8
      %v714 = vpop.permute.xlu0 %713
      %715 = vrot.lane.b32.xlu0 %v432, 8
      %v716 = vpop.permute.xlu0 %715
      %717 = vrot.lane.b32.xlu0 %v434, 8
      %v718 = vpop.permute.xlu0 %717
      %719 = vrot.lane.b32.xlu0 %v435, 8
      %v720 = vpop.permute.xlu0 %719
      %721 = vrot.lane.b32.xlu0 %v437, 8
      %v722 = vpop.permute.xlu0 %721
      %723 = vrot.lane.b32.xlu0 %v438, 8
      %v724 = vpop.permute.xlu0 %723
      %725 = vrot.lane.b32.xlu0 %v440, 8
      %v726 = vpop.permute.xlu0 %725
      %727 = vrot.lane.b32.xlu0 %v441, 8
      %v728 = vpop.permute.xlu0 %727
      %729 = vrot.lane.b32.xlu0 %v443, 8
      %v730 = vpop.permute.xlu0 %729
      %731 = vrot.lane.b32.xlu0 %v444, 8
      %v732 = vpop.permute.xlu0 %731
      %733 = vrot.lane.b32.xlu0 %v446, 8
      %v734 = vpop.permute.xlu0 %733
      %735 = vrot.lane.b32.xlu0 %v447, 8
      %v736 = vpop.permute.xlu0 %735
      %737 = vrot.lane.b32.xlu0 %v449, 8
      %v738 = vpop.permute.xlu0 %737
      %739 = vrot.lane.b32.xlu0 %v450, 8
      %v740 = vpop.permute.xlu0 %739
      %741 = vrot.lane.b32.xlu0 %v452, 8
      %v742 = vpop.permute.xlu0 %741
      %743 = vrot.lane.b32.xlu0 %v453, 8
      %v744 = vpop.permute.xlu0 %743
      %745 = vrot.lane.b32.xlu0 %v455, 8
      %v746 = vpop.permute.xlu0 %745
      %747 = vrot.lane.b32.xlu0 %v456, 8
      %v748 = vpop.permute.xlu0 %747
      %749 = vrot.lane.b32.xlu0 %v458, 8
      %v750 = vpop.permute.xlu0 %749
      %751 = vrot.lane.b32.xlu0 %v459, 8
      %v752 = vpop.permute.xlu0 %751
      %753 = vrot.lane.b32.xlu0 %v461, 8
      %v754 = vpop.permute.xlu0 %753
      %755 = vrot.lane.b32.xlu0 %v462, 8
      %v756 = vpop.permute.xlu0 %755
      %757 = vrot.lane.b32.xlu0 %v464, 8
      %v758 = vpop.permute.xlu0 %757
      %759 = vrot.lane.b32.xlu0 %v465, 8
      %v760 = vpop.permute.xlu0 %759
      %v794 = vrot.slane %v464, 1
      %v795 = vrot.slane %v465, 1
      %v796 = vsel %vm518, %v794, %v795
      %v797 = vrot.slane %v466, 1
      %v798 = vsel %vm518, %v795, %v797
      %799 = vrot.lane.b32.xlu0 %v526, 12
      %v800 = vpop.permute.xlu0 %799
      %801 = vrot.lane.b32.xlu0 %v528, 12
      %v802 = vpop.permute.xlu0 %801
      %803 = vrot.lane.b32.xlu0 %v531, 12
      %v804 = vpop.permute.xlu0 %803
      %805 = vrot.lane.b32.xlu0 %v533, 12
      %v806 = vpop.permute.xlu0 %805
      %807 = vrot.lane.b32.xlu0 %v536, 12
      %v808 = vpop.permute.xlu0 %807
      %809 = vrot.lane.b32.xlu0 %v538, 12
      %v810 = vpop.permute.xlu0 %809
      %811 = vrot.lane.b32.xlu0 %v541, 12
      %v812 = vpop.permute.xlu0 %811
      %813 = vrot.lane.b32.xlu0 %v543, 12
      %v814 = vpop.permute.xlu0 %813
      %815 = vrot.lane.b32.xlu0 %v546, 12
      %v816 = vpop.permute.xlu0 %815
      %817 = vrot.lane.b32.xlu0 %v548, 12
      %v818 = vpop.permute.xlu0 %817
      %819 = vrot.lane.b32.xlu0 %v551, 12
      %v820 = vpop.permute.xlu0 %819
      %821 = vrot.lane.b32.xlu0 %v553, 12
      %v822 = vpop.permute.xlu0 %821
      %823 = vrot.lane.b32.xlu0 %v556, 12
      %v824 = vpop.permute.xlu0 %823
      %825 = vrot.lane.b32.xlu0 %v558, 12
      %v826 = vpop.permute.xlu0 %825
      %827 = vrot.lane.b32.xlu0 %v561, 12
      %v828 = vpop.permute.xlu0 %827
      %829 = vrot.lane.b32.xlu0 %v563, 12
      %v830 = vpop.permute.xlu0 %829
      %831 = vrot.lane.b32.xlu0 %v566, 12
      %v832 = vpop.permute.xlu0 %831
      %833 = vrot.lane.b32.xlu0 %v568, 12
      %v834 = vpop.permute.xlu0 %833
      %835 = vrot.lane.b32.xlu0 %v571, 12
      %v836 = vpop.permute.xlu0 %835
      %837 = vrot.lane.b32.xlu0 %v573, 12
      %v838 = vpop.permute.xlu0 %837
      %839 = vrot.lane.b32.xlu0 %v576, 12
      %v840 = vpop.permute.xlu0 %839
      %841 = vrot.lane.b32.xlu0 %v578, 12
      %v842 = vpop.permute.xlu0 %841
      %843 = vrot.lane.b32.xlu0 %v581, 12
      %v844 = vpop.permute.xlu0 %843
      %845 = vrot.lane.b32.xlu0 %v583, 12
      %v846 = vpop.permute.xlu0 %845
      %847 = vrot.lane.b32.xlu0 %v586, 12
      %v848 = vpop.permute.xlu0 %847
      %849 = vrot.lane.b32.xlu0 %v588, 12
      %v850 = vpop.permute.xlu0 %849
      %851 = vrot.lane.b32.xlu0 %v591, 12
      %v852 = vpop.permute.xlu0 %851
      %853 = vrot.lane.b32.xlu0 %v593, 12
      %v854 = vpop.permute.xlu0 %853
      %855 = vrot.lane.b32.xlu0 %v596, 12
      %v856 = vpop.permute.xlu0 %855
      %857 = vrot.lane.b32.xlu0 %v598, 12
      %v858 = vpop.permute.xlu0 %857
      %859 = vrot.lane.b32.xlu0 %v796, 12
      %v860 = vpop.permute.xlu0 %859
      %861 = vrot.lane.b32.xlu0 %v798, 12
      %v862 = vpop.permute.xlu0 %861
      %vm895 = vcmask 31744
      %v896 = vsel %vm895, %v416, %v600
      %v897 = vsel %vm895, %v417, %v602
      %v898 = vsel %vm895, %v419, %v604
      %v899 = vsel %vm895, %v420, %v606
      %v900 = vsel %vm895, %v422, %v608
      %v901 = vsel %vm895, %v423, %v610
      %v902 = vsel %vm895, %v425, %v612
      %v903 = vsel %vm895, %v426, %v614
      %v904 = vsel %vm895, %v428, %v616
      %v905 = vsel %vm895, %v429, %v618
      %v906 = vsel %vm895, %v431, %v620
      %v907 = vsel %vm895, %v432, %v622
      %v908 = vsel %vm895, %v434, %v624
      %v909 = vsel %vm895, %v435, %v626
      %v910 = vsel %vm895, %v437, %v628
      %v911 = vsel %vm895, %v438, %v630
      %v912 = vsel %vm895, %v440, %v632
      %v913 = vsel %vm895, %v441, %v634
      %v914 = vsel %vm895, %v443, %v636
      %v915 = vsel %vm895, %v444, %v638
      %v916 = vsel %vm895, %v446, %v640
      %v917 = vsel %vm895, %v447, %v642
      %v918 = vsel %vm895, %v449, %v644
      %v919 = vsel %vm895, %v450, %v646
      %v920 = vsel %vm895, %v452, %v648
      %v921 = vsel %vm895, %v453, %v650
      %v922 = vsel %vm895, %v455, %v652
      %v923 = vsel %vm895, %v456, %v654
      %v924 = vsel %vm895, %v458, %v656
      %v925 = vsel %vm895, %v459, %v658
      %v926 = vsel %vm895, %v461, %v660
      %v927 = vsel %vm895, %v462, %v662
      %vm928 = vcmask 64512
      %v929 = vsel %vm928, %v896, %v698
      %v930 = vsel %vm928, %v897, %v700
      %v931 = vsel %vm928, %v898, %v702
      %v932 = vsel %vm928, %v899, %v704
      %v933 = vsel %vm928, %v900, %v706
      %v934 = vsel %vm928, %v901, %v708
      %v935 = vsel %vm928, %v902, %v710
      %v936 = vsel %vm928, %v903, %v712
      %v937 = vsel %vm928, %v904, %v714
      %v938 = vsel %vm928, %v905, %v716
      %v939 = vsel %vm928, %v906, %v718
      %v940 = vsel %vm928, %v907, %v720
      %v941 = vsel %vm928, %v908, %v722
      %v942 = vsel %vm928, %v909, %v724
      %v943 = vsel %vm928, %v910, %v726
      %v944 = vsel %vm928, %v911, %v728
      %v945 = vsel %vm928, %v912, %v730
      %v946 = vsel %vm928, %v913, %v732
      %v947 = vsel %vm928, %v914, %v734
      %v948 = vsel %vm928, %v915, %v736
      %v949 = vsel %vm928, %v916, %v738
      %v950 = vsel %vm928, %v917, %v740
      %v951 = vsel %vm928, %v918, %v742
      %v952 = vsel %vm928, %v919, %v744
      %v953 = vsel %vm928, %v920, %v746
      %v954 = vsel %vm928, %v921, %v748
      %v955 = vsel %vm928, %v922, %v750
      %v956 = vsel %vm928, %v923, %v752
      %v957 = vsel %vm928, %v924, %v754
      %v958 = vsel %vm928, %v925, %v756
      %v959 = vsel %vm928, %v926, %v758
      %v960 = vsel %vm928, %v927, %v760
      %vm961 = vcmask 97280
      %v962 = vsel %vm961, %v929, %v800
      %v963 = vsel %vm961, %v930, %v802
      %v964 = vsel %vm961, %v931, %v804
      %v965 = vsel %vm961, %v932, %v806
      %v966 = vsel %vm961, %v933, %v808
      %v967 = vsel %vm961, %v934, %v810
      %v968 = vsel %vm961, %v935, %v812
      %v969 = vsel %vm961, %v936, %v814
      %v970 = vsel %vm961, %v937, %v816
      %v971 = vsel %vm961, %v938, %v818
      %v972 = vsel %vm961, %v939, %v820
      %v973 = vsel %vm961, %v940, %v822
      %v974 = vsel %vm961, %v941, %v824
      %v975 = vsel %vm961, %v942, %v826
      %v976 = vsel %vm961, %v943, %v828
      %v977 = vsel %vm961, %v944, %v830
      %v978 = vsel %vm961, %v945, %v832
      %v979 = vsel %vm961, %v946, %v834
      %v980 = vsel %vm961, %v947, %v836
      %v981 = vsel %vm961, %v948, %v838
      %v982 = vsel %vm961, %v949, %v840
      %v983 = vsel %vm961, %v950, %v842
      %v984 = vsel %vm961, %v951, %v844
      %v985 = vsel %vm961, %v952, %v846
      %v986 = vsel %vm961, %v953, %v848
      %v987 = vsel %vm961, %v954, %v850
      %v988 = vsel %vm961, %v955, %v852
      %v989 = vsel %vm961, %v956, %v854
      %v990 = vsel %vm961, %v957, %v856
      %v991 = vsel %vm961, %v958, %v858
      %v992 = vsel %vm961, %v959, %v860
      %v993 = vsel %vm961, %v960, %v862
      %v994 = vld [vmem:[%s3] sm:$0xf]
      %v995 = vld [vmem:[%s3 + $0x4] sm:$0xf]
      %v996 = vld [vmem:[%s3 + $0x8] sm:$0xf]
      %v997 = vld [vmem:[%s3 + $0xc] sm:$0xf]
      %v1002 = vcombine.low %v994, %v995
      %v1003 = vcombine.low %v996, %v997
      %vm1006 = vcmask 130048
      %v1008 = vsel %vm1006, %v962, 0
      %v1011 = vsel %vm1006, %v963, 0
      %v1014 = vsel %vm1006, %v964, 0
      %v1017 = vsel %vm1006, %v965, 0
      %v1020 = vsel %vm1006, %v966, 0
      %v1023 = vsel %vm1006, %v967, 0
      %v1026 = vsel %vm1006, %v968, 0
      %v1029 = vsel %vm1006, %v969, 0
      %v1032 = vsel %vm1006, %v970, 0
      %v1035 = vsel %vm1006, %v971, 0
      %v1038 = vsel %vm1006, %v972, 0
      %v1041 = vsel %vm1006, %v973, 0
      %v1044 = vsel %vm1006, %v974, 0
      %v1047 = vsel %vm1006, %v975, 0
      %v1050 = vsel %vm1006, %v976, 0
      %v1053 = vsel %vm1006, %v977, 0
      %v1056 = vsel %vm1006, %v978, 0
      %v1059 = vsel %vm1006, %v979, 0
      %v1062 = vsel %vm1006, %v980, 0
      %v1065 = vsel %vm1006, %v981, 0
      %v1068 = vsel %vm1006, %v982, 0
      %v1071 = vsel %vm1006, %v983, 0
      %v1074 = vsel %vm1006, %v984, 0
      %v1077 = vsel %vm1006, %v985, 0
      %v1080 = vsel %vm1006, %v986, 0
      %v1083 = vsel %vm1006, %v987, 0
      %v1086 = vsel %vm1006, %v988, 0
      %v1089 = vsel %vm1006, %v989, 0
      %v1092 = vsel %vm1006, %v990, 0
      %v1095 = vsel %vm1006, %v991, 0
      %v1098 = vsel %vm1006, %v992, 0
      %v1101 = vsel %vm1006, %v993, 0
      %1103 = vmatprep.subr.mxu0 0.0
      %1104 = vmatpush1.msra.mxu0 0.0
      %1105 = vmatprep.subr.mxu0 0.0
      %1106 = vmatpush1.msra.mxu0 0.0
      %1107 = vmatprep.subr.mxu0 0.0
      %1108 = vmatpush1.msra.mxu0 0.0
      %1109 = vmatprep.subr.mxu0 0.0
      %1110 = vmatpush1.msra.mxu0 0.0
      %1111 = vmatprep.subr.mxu0 0.0
      %1112 = vmatpush1.msra.mxu0 0.0
      %1113 = vmatprep.subr.mxu0 0.0
      %1114 = vmatpush1.msra.mxu0 0.0
      %1115 = vmatprep.subr.mxu0 0.0
      %1116 = vmatpush1.msra.mxu0 0.0
      %1117 = vmatprep.subr.mxu0 0.0
      %1118 = vmatpush1.msra.mxu0 0.0
      %1119 = vmatprep.subr.mxu0 0.0
      %1120 = vmatpush1.msra.mxu0 0.0
      %1121 = vmatprep.subr.mxu0 0.0
      %1122 = vmatpush1.msra.mxu0 0.0
      %1123 = vmatprep.subr.mxu0 0.0
      %1124 = vmatpush1.msra.mxu0 0.0
      %1125 = vmatprep.subr.mxu0 0.0
      %1126 = vmatpush1.msra.mxu0 0.0
      %1127 = vmatprep.subr.mxu0 0.0
      %1128 = vmatpush1.msra.mxu0 0.0
      %1129 = vmatprep.subr.mxu0 0.0
      %1130 = vmatpush1.msra.mxu0 0.0
      %1131 = vmatprep.subr.mxu0 0.0
      %1132 = vmatpush1.msra.mxu0 %v1003
      %1133 = vmatprep.subr.mxu0 0.0
      %1134 = vmatpush1.msra.mxu0 %v1002
      %1135 = vmatprep.subr.mxu0 0.0
      %1136 = vmatpush2.msra.mxu0 0.0
      %1137 = vmatprep.subr.mxu0 0.0
      %1138 = vmatpush2.msra.mxu0 0.0
      %1139 = vmatprep.subr.mxu0 0.0
      %1140 = vmatpush2.msra.mxu0 0.0
      %1141 = vmatprep.subr.mxu0 0.0
      %1142 = vmatpush2.msra.mxu0 0.0
      %1143 = vmatprep.subr.mxu0 0.0
      %1144 = vmatpush2.msra.mxu0 0.0
      %1145 = vmatprep.subr.mxu0 0.0
      %1146 = vmatpush2.msra.mxu0 0.0
      %1147 = vmatprep.subr.mxu0 0.0
      %1148 = vmatpush2.msra.mxu0 0.0
      %1149 = vmatprep.subr.mxu0 0.0
      %1150 = vmatpush2.msra.mxu0 0.0
      %1151 = vmatprep.subr.mxu0 0.0
      %1152 = vmatpush2.msra.mxu0 0.0
      %1153 = vmatprep.subr.mxu0 0.0
      %1154 = vmatpush2.msra.mxu0 0.0
      %1155 = vmatprep.subr.mxu0 0.0
      %1156 = vmatpush2.msra.mxu0 0.0
      %1157 = vmatprep.subr.mxu0 0.0
      %1158 = vmatpush2.msra.mxu0 0.0
      %1159 = vmatprep.subr.mxu0 0.0
      %1160 = vmatpush2.msra.mxu0 0.0
      %1161 = vmatprep.subr.mxu0 0.0
      %1162 = vmatpush2.msra.mxu0 0.0
      %1163 = vmatprep.subr.mxu0 0.0
      %1164 = vmatpush2.msra.mxu0 0.0
      %1165 = vmatprep.subr.mxu0 0.0
      %1166 = vmatpush2.msra.mxu0 0.0
      %1167 = vmatprep.mubr.f32.mxu0 0.0
      %1168 = vmatmul.mubr.f32.gmra.mxu0 %v1008
      %v1169 = vpop.f32.mrf.mxu0
      %v1170 = vadd.f32 0.0, %v1169
      %v1171 = vpop.f32.mrf.mxu0
      %1172 = vmatprep.mubr.f32.mxu0 0.0
      %1173 = vmatmul.mubr.f32.gmra.mxu0 %v1011
      %v1174 = vpop.f32.mrf.mxu0
      %v1175 = vadd.f32 0.0, %v1174
      %v1176 = vpop.f32.mrf.mxu0
      %1177 = vmatprep.mubr.f32.mxu0 0.0
      %1178 = vmatmul.mubr.f32.gmra.mxu0 %v1014
      %v1179 = vpop.f32.mrf.mxu0
      %v1180 = vadd.f32 0.0, %v1179
      %v1181 = vpop.f32.mrf.mxu0
      %1182 = vmatprep.mubr.f32.mxu0 0.0
      %1183 = vmatmul.mubr.f32.gmra.mxu0 %v1017
      %v1184 = vpop.f32.mrf.mxu0
      %v1185 = vadd.f32 0.0, %v1184
      %v1186 = vpop.f32.mrf.mxu0
      %1187 = vmatprep.mubr.f32.mxu0 0.0
      %1188 = vmatmul.mubr.f32.gmra.mxu0 %v1020
      %v1189 = vpop.f32.mrf.mxu0
      %v1190 = vadd.f32 0.0, %v1189
      %v1191 = vpop.f32.mrf.mxu0
      %1192 = vmatprep.mubr.f32.mxu0 0.0
      %1193 = vmatmul.mubr.f32.gmra.mxu0 %v1023
      %v1194 = vpop.f32.mrf.mxu0
      %v1195 = vadd.f32 0.0, %v1194
      %v1196 = vpop.f32.mrf.mxu0
      %1197 = vmatprep.mubr.f32.mxu0 0.0
      %1198 = vmatmul.mubr.f32.gmra.mxu0 %v1026
      %v1199 = vpop.f32.mrf.mxu0
      %v1200 = vadd.f32 0.0, %v1199
      %v1201 = vpop.f32.mrf.mxu0
      %1202 = vmatprep.mubr.f32.mxu0 0.0
      %1203 = vmatmul.mubr.f32.gmra.mxu0 %v1029
      %v1204 = vpop.f32.mrf.mxu0
      %v1205 = vadd.f32 0.0, %v1204
      %v1206 = vpop.f32.mrf.mxu0
      %1207 = vmatprep.mubr.f32.mxu0 0.0
      %1208 = vmatmul.mubr.f32.gmra.mxu0 %v1032
      %v1209 = vpop.f32.mrf.mxu0
      %v1210 = vadd.f32 0.0, %v1209
      %v1211 = vpop.f32.mrf.mxu0
      %1212 = vmatprep.mubr.f32.mxu0 0.0
      %1213 = vmatmul.mubr.f32.gmra.mxu0 %v1035
      %v1214 = vpop.f32.mrf.mxu0
      %v1215 = vadd.f32 0.0, %v1214
      %v1216 = vpop.f32.mrf.mxu0
      %1217 = vmatprep.mubr.f32.mxu0 0.0
      %1218 = vmatmul.mubr.f32.gmra.mxu0 %v1038
      %v1219 = vpop.f32.mrf.mxu0
      %v1220 = vadd.f32 0.0, %v1219
      %v1221 = vpop.f32.mrf.mxu0
      %1222 = vmatprep.mubr.f32.mxu0 0.0
      %1223 = vmatmul.mubr.f32.gmra.mxu0 %v1041
      %v1224 = vpop.f32.mrf.mxu0
      %v1225 = vadd.f32 0.0, %v1224
      %v1226 = vpop.f32.mrf.mxu0
      %1227 = vmatprep.mubr.f32.mxu0 0.0
      %1228 = vmatmul.mubr.f32.gmra.mxu0 %v1044
      %v1229 = vpop.f32.mrf.mxu0
      %v1230 = vadd.f32 0.0, %v1229
      %v1231 = vpop.f32.mrf.mxu0
      %1232 = vmatprep.mubr.f32.mxu0 0.0
      %1233 = vmatmul.mubr.f32.gmra.mxu0 %v1047
      %v1234 = vpop.f32.mrf.mxu0
      %v1235 = vadd.f32 0.0, %v1234
      %v1236 = vpop.f32.mrf.mxu0
      %1237 = vmatprep.mubr.f32.mxu0 0.0
      %1238 = vmatmul.mubr.f32.gmra.mxu0 %v1050
      %v1239 = vpop.f32.mrf.mxu0
      %v1240 = vadd.f32 0.0, %v1239
      %v1241 = vpop.f32.mrf.mxu0
      %1242 = vmatprep.mubr.f32.mxu0 0.0
      %1243 = vmatmul.mubr.f32.gmra.mxu0 %v1053
      %v1244 = vpop.f32.mrf.mxu0
      %v1245 = vadd.f32 0.0, %v1244
      %v1246 = vpop.f32.mrf.mxu0
      %1247 = vmatprep.mubr.f32.mxu0 0.0
      %1248 = vmatmul.mubr.f32.gmra.mxu0 %v1056
      %v1249 = vpop.f32.mrf.mxu0
      %v1250 = vadd.f32 0.0, %v1249
      %v1251 = vpop.f32.mrf.mxu0
      %1252 = vmatprep.mubr.f32.mxu0 0.0
      %1253 = vmatmul.mubr.f32.gmra.mxu0 %v1059
      %v1254 = vpop.f32.mrf.mxu0
      %v1255 = vadd.f32 0.0, %v1254
      %v1256 = vpop.f32.mrf.mxu0
      %1257 = vmatprep.mubr.f32.mxu0 0.0
      %1258 = vmatmul.mubr.f32.gmra.mxu0 %v1062
      %v1259 = vpop.f32.mrf.mxu0
      %v1260 = vadd.f32 0.0, %v1259
      %v1261 = vpop.f32.mrf.mxu0
      %1262 = vmatprep.mubr.f32.mxu0 0.0
      %1263 = vmatmul.mubr.f32.gmra.mxu0 %v1065
      %v1264 = vpop.f32.mrf.mxu0
      %v1265 = vadd.f32 0.0, %v1264
      %v1266 = vpop.f32.mrf.mxu0
      %1267 = vmatprep.mubr.f32.mxu0 0.0
      %1268 = vmatmul.mubr.f32.gmra.mxu0 %v1068
      %v1269 = vpop.f32.mrf.mxu0
      %v1270 = vadd.f32 0.0, %v1269
      %v1271 = vpop.f32.mrf.mxu0
      %1272 = vmatprep.mubr.f32.mxu0 0.0
      %1273 = vmatmul.mubr.f32.gmra.mxu0 %v1071
      %v1274 = vpop.f32.mrf.mxu0
      %v1275 = vadd.f32 0.0, %v1274
      %v1276 = vpop.f32.mrf.mxu0
      %1277 = vmatprep.mubr.f32.mxu0 0.0
      %1278 = vmatmul.mubr.f32.gmra.mxu0 %v1074
      %v1279 = vpop.f32.mrf.mxu0
      %v1280 = vadd.f32 0.0, %v1279
      %v1281 = vpop.f32.mrf.mxu0
      %1282 = vmatprep.mubr.f32.mxu0 0.0
      %1283 = vmatmul.mubr.f32.gmra.mxu0 %v1077
      %v1284 = vpop.f32.mrf.mxu0
      %v1285 = vadd.f32 0.0, %v1284
      %v1286 = vpop.f32.mrf.mxu0
      %1287 = vmatprep.mubr.f32.mxu0 0.0
      %1288 = vmatmul.mubr.f32.gmra.mxu0 %v1080
      %v1289 = vpop.f32.mrf.mxu0
      %v1290 = vadd.f32 0.0, %v1289
      %v1291 = vpop.f32.mrf.mxu0
      %1292 = vmatprep.mubr.f32.mxu0 0.0
      %1293 = vmatmul.mubr.f32.gmra.mxu0 %v1083
      %v1294 = vpop.f32.mrf.mxu0
      %v1295 = vadd.f32 0.0, %v1294
      %v1296 = vpop.f32.mrf.mxu0
      %1297 = vmatprep.mubr.f32.mxu0 0.0
      %1298 = vmatmul.mubr.f32.gmra.mxu0 %v1086
      %v1299 = vpop.f32.mrf.mxu0
      %v1300 = vadd.f32 0.0, %v1299
      %v1301 = vpop.f32.mrf.mxu0
      %1302 = vmatprep.mubr.f32.mxu0 0.0
      %1303 = vmatmul.mubr.f32.gmra.mxu0 %v1089
      %v1304 = vpop.f32.mrf.mxu0
      %v1305 = vadd.f32 0.0, %v1304
      %v1306 = vpop.f32.mrf.mxu0
      %1307 = vmatprep.mubr.f32.mxu0 0.0
      %1308 = vmatmul.mubr.f32.gmra.mxu0 %v1092
      %v1309 = vpop.f32.mrf.mxu0
      %v1310 = vadd.f32 0.0, %v1309
      %v1311 = vpop.f32.mrf.mxu0
      %1312 = vmatprep.mubr.f32.mxu0 0.0
      %1313 = vmatmul.mubr.f32.gmra.mxu0 %v1095
      %v1314 = vpop.f32.mrf.mxu0
      %v1315 = vadd.f32 0.0, %v1314
      %v1316 = vpop.f32.mrf.mxu0
      %1317 = vmatprep.mubr.f32.mxu0 0.0
      %1318 = vmatmul.mubr.f32.gmra.mxu0 %v1098
      %v1319 = vpop.f32.mrf.mxu0
      %v1320 = vadd.f32 0.0, %v1319
      %v1321 = vpop.f32.mrf.mxu0
      %1322 = vmatprep.mubr.f32.mxu0 0.0
      %1323 = vmatmul.mubr.f32.gmra.mxu0 %v1101
      %v1324 = vpop.f32.mrf.mxu0
      %v1325 = vadd.f32 0.0, %v1324
      %v1326 = vpop.f32.mrf.mxu0
      %1327 = vdwg.mxu0
      %v1328 = vsel %vm928, %v1170, 0.0
      %v1329 = vsel %vm928, %v1175, 0.0
      %v1330 = vadd.f32 %v1328, %v1329
      %v1331 = vsel %vm928, %v1180, 0.0
      %v1332 = vadd.f32 %v1330, %v1331
      %v1333 = vsel %vm928, %v1185, 0.0
      %v1334 = vadd.f32 %v1332, %v1333
      %v1335 = vsel %vm928, %v1190, 0.0
      %v1336 = vadd.f32 %v1334, %v1335
      %v1337 = vsel %vm928, %v1195, 0.0
      %v1338 = vadd.f32 %v1336, %v1337
      %v1339 = vsel %vm928, %v1200, 0.0
      %v1340 = vadd.f32 %v1338, %v1339
      %v1341 = vsel %vm928, %v1205, 0.0
      %v1342 = vadd.f32 %v1340, %v1341
      %v1343 = vsel %vm928, %v1210, 0.0
      %v1344 = vadd.f32 %v1342, %v1343
      %v1345 = vsel %vm928, %v1215, 0.0
      %v1346 = vadd.f32 %v1344, %v1345
      %v1347 = vsel %vm928, %v1220, 0.0
      %v1348 = vadd.f32 %v1346, %v1347
      %v1349 = vsel %vm928, %v1225, 0.0
      %v1350 = vadd.f32 %v1348, %v1349
      %v1351 = vsel %vm928, %v1230, 0.0
      %v1352 = vadd.f32 %v1350, %v1351
      %v1353 = vsel %vm928, %v1235, 0.0
      %v1354 = vadd.f32 %v1352, %v1353
      %v1355 = vsel %vm928, %v1240, 0.0
      %v1356 = vadd.f32 %v1354, %v1355
      %v1357 = vsel %vm928, %v1245, 0.0
      %v1358 = vadd.f32 %v1356, %v1357
      %v1359 = vsel %vm928, %v1250, 0.0
      %v1360 = vadd.f32 %v1358, %v1359
      %v1361 = vsel %vm928, %v1255, 0.0
      %v1362 = vadd.f32 %v1360, %v1361
      %v1363 = vsel %vm928, %v1260, 0.0
      %v1364 = vadd.f32 %v1362, %v1363
      %v1365 = vsel %vm928, %v1265, 0.0
      %v1366 = vadd.f32 %v1364, %v1365
      %v1367 = vsel %vm928, %v1270, 0.0
      %v1368 = vadd.f32 %v1366, %v1367
      %v1369 = vsel %vm928, %v1275, 0.0
      %v1370 = vadd.f32 %v1368, %v1369
      %v1371 = vsel %vm928, %v1280, 0.0
      %v1372 = vadd.f32 %v1370, %v1371
      %v1373 = vsel %vm928, %v1285, 0.0
      %v1374 = vadd.f32 %v1372, %v1373
      %v1375 = vsel %vm928, %v1290, 0.0
      %v1376 = vadd.f32 %v1374, %v1375
      %v1377 = vsel %vm928, %v1295, 0.0
      %v1378 = vadd.f32 %v1376, %v1377
      %v1379 = vsel %vm928, %v1300, 0.0
      %v1380 = vadd.f32 %v1378, %v1379
      %v1381 = vsel %vm928, %v1305, 0.0
      %v1382 = vadd.f32 %v1380, %v1381
      %v1383 = vsel %vm928, %v1310, 0.0
      %v1384 = vadd.f32 %v1382, %v1383
      %v1385 = vsel %vm928, %v1315, 0.0
      %v1386 = vadd.f32 %v1384, %v1385
      %v1387 = vsel %vm928, %v1320, 0.0
      %v1388 = vadd.f32 %v1386, %v1387
      %v1389 = vsel %vm928, %v1325, 0.0
      %v1390 = vadd.f32 %v1388, %v1389
      %v1391 = vrot.slane %v1390, 4
      %v1392 = vadd.f32 %v1390, %v1391
      %v1393 = vrot.slane %v1392, 2
      %v1394 = vadd.f32 %v1392, %v1393
      %v1395 = vrot.slane %v1394, 1
      %v1396 = vadd.f32 %v1394, %v1395
      %v1397 = vadd.f32 %v1396, 0.0
      %v1398 = vmul.f32 %v1170, %v1170
      %v1399 = vmul.f32 %v1175, %v1175
      %v1400 = vmul.f32 %v1180, %v1180
      %v1401 = vmul.f32 %v1185, %v1185
      %v1402 = vmul.f32 %v1190, %v1190
      %v1403 = vmul.f32 %v1195, %v1195
      %v1404 = vmul.f32 %v1200, %v1200
      %v1405 = vmul.f32 %v1205, %v1205
      %v1406 = vmul.f32 %v1210, %v1210
      %v1407 = vmul.f32 %v1215, %v1215
      %v1408 = vmul.f32 %v1220, %v1220
      %v1409 = vmul.f32 %v1225, %v1225
      %v1410 = vmul.f32 %v1230, %v1230
      %v1411 = vmul.f32 %v1235, %v1235
      %v1412 = vmul.f32 %v1240, %v1240
      %v1413 = vmul.f32 %v1245, %v1245
      %v1414 = vmul.f32 %v1250, %v1250
      %v1415 = vmul.f32 %v1255, %v1255
      %v1416 = vmul.f32 %v1260, %v1260
      %v1417 = vmul.f32 %v1265, %v1265
      %v1418 = vmul.f32 %v1270, %v1270
      %v1419 = vmul.f32 %v1275, %v1275
      %v1420 = vmul.f32 %v1280, %v1280
      %v1421 = vmul.f32 %v1285, %v1285
      %v1422 = vmul.f32 %v1290, %v1290
      %v1423 = vmul.f32 %v1295, %v1295
      %v1424 = vmul.f32 %v1300, %v1300
      %v1425 = vmul.f32 %v1305, %v1305
      %v1426 = vmul.f32 %v1310, %v1310
      %v1427 = vmul.f32 %v1315, %v1315
      %v1428 = vmul.f32 %v1320, %v1320
      %v1429 = vmul.f32 %v1325, %v1325
      %v1430 = vsel %vm928, %v1398, 0.0
      %v1431 = vsel %vm928, %v1399, 0.0
      %v1432 = vadd.f32 %v1430, %v1431
      %v1433 = vsel %vm928, %v1400, 0.0
      %v1434 = vadd.f32 %v1432, %v1433
      %v1435 = vsel %vm928, %v1401, 0.0
      %v1436 = vadd.f32 %v1434, %v1435
      %v1437 = vsel %vm928, %v1402, 0.0
      %v1438 = vadd.f32 %v1436, %v1437
      %v1439 = vsel %vm928, %v1403, 0.0
      %v1440 = vadd.f32 %v1438, %v1439
      %v1441 = vsel %vm928, %v1404, 0.0
      %v1442 = vadd.f32 %v1440, %v1441
      %v1443 = vsel %vm928, %v1405, 0.0
      %v1444 = vadd.f32 %v1442, %v1443
      %v1445 = vsel %vm928, %v1406, 0.0
      %v1446 = vadd.f32 %v1444, %v1445
      %v1447 = vsel %vm928, %v1407, 0.0
      %v1448 = vadd.f32 %v1446, %v1447
      %v1449 = vsel %vm928, %v1408, 0.0
      %v1450 = vadd.f32 %v1448, %v1449
      %v1451 = vsel %vm928, %v1409, 0.0
      %v1452 = vadd.f32 %v1450, %v1451
      %v1453 = vsel %vm928, %v1410, 0.0
      %v1454 = vadd.f32 %v1452, %v1453
      %v1455 = vsel %vm928, %v1411, 0.0
      %v1456 = vadd.f32 %v1454, %v1455
      %v1457 = vsel %vm928, %v1412, 0.0
      %v1458 = vadd.f32 %v1456, %v1457
      %v1459 = vsel %vm928, %v1413, 0.0
      %v1460 = vadd.f32 %v1458, %v1459
      %v1461 = vsel %vm928, %v1414, 0.0
      %v1462 = vadd.f32 %v1460, %v1461
      %v1463 = vsel %vm928, %v1415, 0.0
      %v1464 = vadd.f32 %v1462, %v1463
      %v1465 = vsel %vm928, %v1416, 0.0
      %v1466 = vadd.f32 %v1464, %v1465
      %v1467 = vsel %vm928, %v1417, 0.0
      %v1468 = vadd.f32 %v1466, %v1467
      %v1469 = vsel %vm928, %v1418, 0.0
      %v1470 = vadd.f32 %v1468, %v1469
      %v1471 = vsel %vm928, %v1419, 0.0
      %v1472 = vadd.f32 %v1470, %v1471
      %v1473 = vsel %vm928, %v1420, 0.0
      %v1474 = vadd.f32 %v1472, %v1473
      %v1475 = vsel %vm928, %v1421, 0.0
      %v1476 = vadd.f32 %v1474, %v1475
      %v1477 = vsel %vm928, %v1422, 0.0
      %v1478 = vadd.f32 %v1476, %v1477
      %v1479 = vsel %vm928, %v1423, 0.0
      %v1480 = vadd.f32 %v1478, %v1479
      %v1481 = vsel %vm928, %v1424, 0.0
      %v1482 = vadd.f32 %v1480, %v1481
      %v1483 = vsel %vm928, %v1425, 0.0
      %v1484 = vadd.f32 %v1482, %v1483
      %v1485 = vsel %vm928, %v1426, 0.0
      %v1486 = vadd.f32 %v1484, %v1485
      %v1487 = vsel %vm928, %v1427, 0.0
      %v1488 = vadd.f32 %v1486, %v1487
      %v1489 = vsel %vm928, %v1428, 0.0
      %v1490 = vadd.f32 %v1488, %v1489
      %v1491 = vsel %vm928, %v1429, 0.0
      %v1492 = vadd.f32 %v1490, %v1491
      %v1493 = vrot.slane %v1492, 4
      %v1494 = vadd.f32 %v1492, %v1493
      %v1495 = vrot.slane %v1494, 2
      %v1496 = vadd.f32 %v1494, %v1495
      %v1497 = vrot.slane %v1496, 1
      %v1498 = vadd.f32 %v1496, %v1497
      %v1499 = vadd.f32 %v1498, 0.0
      %1500 = vrot.lane.b32.xlu0 %v522, 4
      %v1501 = vpop.permute.xlu0 %1500
      %1502 = vrot.lane.b32.xlu0 %v527, 4
      %v1503 = vpop.permute.xlu0 %1502
      %1504 = vrot.lane.b32.xlu0 %v532, 4
      %v1505 = vpop.permute.xlu0 %1504
      %1506 = vrot.lane.b32.xlu0 %v537, 4
      %v1507 = vpop.permute.xlu0 %1506
      %1508 = vrot.lane.b32.xlu0 %v542, 4
      %v1509 = vpop.permute.xlu0 %1508
      %1510 = vrot.lane.b32.xlu0 %v547, 4
      %v1511 = vpop.permute.xlu0 %1510
      %1512 = vrot.lane.b32.xlu0 %v552, 4
      %v1513 = vpop.permute.xlu0 %1512
      %1514 = vrot.lane.b32.xlu0 %v557, 4
      %v1515 = vpop.permute.xlu0 %1514
      %1516 = vrot.lane.b32.xlu0 %v562, 4
      %v1517 = vpop.permute.xlu0 %1516
      %1518 = vrot.lane.b32.xlu0 %v567, 4
      %v1519 = vpop.permute.xlu0 %1518
      %1520 = vrot.lane.b32.xlu0 %v572, 4
      %v1521 = vpop.permute.xlu0 %1520
      %1522 = vrot.lane.b32.xlu0 %v577, 4
      %v1523 = vpop.permute.xlu0 %1522
      %1524 = vrot.lane.b32.xlu0 %v582, 4
      %v1525 = vpop.permute.xlu0 %1524
      %1526 = vrot.lane.b32.xlu0 %v587, 4
      %v1527 = vpop.permute.xlu0 %1526
      %1528 = vrot.lane.b32.xlu0 %v592, 4
      %v1529 = vpop.permute.xlu0 %1528
      %1530 = vrot.lane.b32.xlu0 %v597, 4
      %v1531 = vpop.permute.xlu0 %1530
      %1548 = vrot.lane.b32.xlu0 %v421, 8
      %v1549 = vpop.permute.xlu0 %1548
      %1550 = vrot.lane.b32.xlu0 %v424, 8
      %v1551 = vpop.permute.xlu0 %1550
      %1552 = vrot.lane.b32.xlu0 %v427, 8
      %v1553 = vpop.permute.xlu0 %1552
      %1554 = vrot.lane.b32.xlu0 %v430, 8
      %v1555 = vpop.permute.xlu0 %1554
      %1556 = vrot.lane.b32.xlu0 %v433, 8
      %v1557 = vpop.permute.xlu0 %1556
      %1558 = vrot.lane.b32.xlu0 %v436, 8
      %v1559 = vpop.permute.xlu0 %1558
      %1560 = vrot.lane.b32.xlu0 %v439, 8
      %v1561 = vpop.permute.xlu0 %1560
      %1562 = vrot.lane.b32.xlu0 %v442, 8
      %v1563 = vpop.permute.xlu0 %1562
      %1564 = vrot.lane.b32.xlu0 %v445, 8
      %v1565 = vpop.permute.xlu0 %1564
      %1566 = vrot.lane.b32.xlu0 %v448, 8
      %v1567 = vpop.permute.xlu0 %1566
      %1568 = vrot.lane.b32.xlu0 %v451, 8
      %v1569 = vpop.permute.xlu0 %1568
      %1570 = vrot.lane.b32.xlu0 %v454, 8
      %v1571 = vpop.permute.xlu0 %1570
      %1572 = vrot.lane.b32.xlu0 %v457, 8
      %v1573 = vpop.permute.xlu0 %1572
      %1574 = vrot.lane.b32.xlu0 %v460, 8
      %v1575 = vpop.permute.xlu0 %1574
      %1576 = vrot.lane.b32.xlu0 %v463, 8
      %v1577 = vpop.permute.xlu0 %1576
      %1578 = vrot.lane.b32.xlu0 %v466, 8
      %v1579 = vpop.permute.xlu0 %1578
      %1596 = vrot.lane.b32.xlu0 %v527, 12
      %v1597 = vpop.permute.xlu0 %1596
      %1598 = vrot.lane.b32.xlu0 %v532, 12
      %v1599 = vpop.permute.xlu0 %1598
      %1600 = vrot.lane.b32.xlu0 %v537, 12
      %v1601 = vpop.permute.xlu0 %1600
      %1602 = vrot.lane.b32.xlu0 %v542, 12
      %v1603 = vpop.permute.xlu0 %1602
      %1604 = vrot.lane.b32.xlu0 %v547, 12
      %v1605 = vpop.permute.xlu0 %1604
      %1606 = vrot.lane.b32.xlu0 %v552, 12
      %v1607 = vpop.permute.xlu0 %1606
      %1608 = vrot.lane.b32.xlu0 %v557, 12
      %v1609 = vpop.permute.xlu0 %1608
      %1610 = vrot.lane.b32.xlu0 %v562, 12
      %v1611 = vpop.permute.xlu0 %1610
      %1612 = vrot.lane.b32.xlu0 %v567, 12
      %v1613 = vpop.permute.xlu0 %1612
      %1614 = vrot.lane.b32.xlu0 %v572, 12
      %v1615 = vpop.permute.xlu0 %1614
      %1616 = vrot.lane.b32.xlu0 %v577, 12
      %v1617 = vpop.permute.xlu0 %1616
      %1618 = vrot.lane.b32.xlu0 %v582, 12
      %v1619 = vpop.permute.xlu0 %1618
      %1620 = vrot.lane.b32.xlu0 %v587, 12
      %v1621 = vpop.permute.xlu0 %1620
      %1622 = vrot.lane.b32.xlu0 %v592, 12
      %v1623 = vpop.permute.xlu0 %1622
      %1624 = vrot.lane.b32.xlu0 %v597, 12
      %v1625 = vpop.permute.xlu0 %1624
      %1626 = vrot.lane.b32.xlu0 %v797, 12
      %v1627 = vpop.permute.xlu0 %1626
      %v1644 = vsel %vm895, %v418, %v1501
      %v1645 = vsel %vm895, %v421, %v1503
      %v1646 = vsel %vm895, %v424, %v1505
      %v1647 = vsel %vm895, %v427, %v1507
      %v1648 = vsel %vm895, %v430, %v1509
      %v1649 = vsel %vm895, %v433, %v1511
      %v1650 = vsel %vm895, %v436, %v1513
      %v1651 = vsel %vm895, %v439, %v1515
      %v1652 = vsel %vm895, %v442, %v1517
      %v1653 = vsel %vm895, %v445, %v1519
      %v1654 = vsel %vm895, %v448, %v1521
      %v1655 = vsel %vm895, %v451, %v1523
      %v1656 = vsel %vm895, %v454, %v1525
      %v1657 = vsel %vm895, %v457, %v1527
      %v1658 = vsel %vm895, %v460, %v1529
      %v1659 = vsel %vm895, %v463, %v1531
      %v1660 = vsel %vm928, %v1644, %v1549
      %v1661 = vsel %vm928, %v1645, %v1551
      %v1662 = vsel %vm928, %v1646, %v1553
      %v1663 = vsel %vm928, %v1647, %v1555
      %v1664 = vsel %vm928, %v1648, %v1557
      %v1665 = vsel %vm928, %v1649, %v1559
      %v1666 = vsel %vm928, %v1650, %v1561
      %v1667 = vsel %vm928, %v1651, %v1563
      %v1668 = vsel %vm928, %v1652, %v1565
      %v1669 = vsel %vm928, %v1653, %v1567
      %v1670 = vsel %vm928, %v1654, %v1569
      %v1671 = vsel %vm928, %v1655, %v1571
      %v1672 = vsel %vm928, %v1656, %v1573
      %v1673 = vsel %vm928, %v1657, %v1575
      %v1674 = vsel %vm928, %v1658, %v1577
      %v1675 = vsel %vm928, %v1659, %v1579
      %v1676 = vsel %vm961, %v1660, %v1597
      %v1677 = vsel %vm961, %v1661, %v1599
      %v1678 = vsel %vm961, %v1662, %v1601
      %v1679 = vsel %vm961, %v1663, %v1603
      %v1680 = vsel %vm961, %v1664, %v1605
      %v1681 = vsel %vm961, %v1665, %v1607
      %v1682 = vsel %vm961, %v1666, %v1609
      %v1683 = vsel %vm961, %v1667, %v1611
      %v1684 = vsel %vm961, %v1668, %v1613
      %v1685 = vsel %vm961, %v1669, %v1615
      %v1686 = vsel %vm961, %v1670, %v1617
      %v1687 = vsel %vm961, %v1671, %v1619
      %v1688 = vsel %vm961, %v1672, %v1621
      %v1689 = vsel %vm961, %v1673, %v1623
      %v1690 = vsel %vm961, %v1674, %v1625
      %v1691 = vsel %vm961, %v1675, %v1627
      %v1708 = vrot.slane %v962, 1
      %v1709 = vrot.slane %v963, 1
      %v1710 = vsel %vm518, %v1708, %v1709
      %v1711 = vrot.slane %v1676, 1
      %v1712 = vsel %vm518, %v1709, %v1711
      %v1713 = vrot.slane %v964, 1
      %v1714 = vrot.slane %v965, 1
      %v1715 = vsel %vm518, %v1713, %v1714
      %v1716 = vrot.slane %v1677, 1
      %v1717 = vsel %vm518, %v1714, %v1716
      %v1718 = vrot.slane %v966, 1
      %v1719 = vrot.slane %v967, 1
      %v1720 = vsel %vm518, %v1718, %v1719
      %v1721 = vrot.slane %v1678, 1
      %v1722 = vsel %vm518, %v1719, %v1721
      %v1723 = vrot.slane %v968, 1
      %v1724 = vrot.slane %v969, 1
      %v1725 = vsel %vm518, %v1723, %v1724
      %v1726 = vrot.slane %v1679, 1
      %v1727 = vsel %vm518, %v1724, %v1726
      %v1728 = vrot.slane %v970, 1
      %v1729 = vrot.slane %v971, 1
      %v1730 = vsel %vm518, %v1728, %v1729
      %v1731 = vrot.slane %v1680, 1
      %v1732 = vsel %vm518, %v1729, %v1731
      %v1733 = vrot.slane %v972, 1
      %v1734 = vrot.slane %v973, 1
      %v1735 = vsel %vm518, %v1733, %v1734
      %v1736 = vrot.slane %v1681, 1
      %v1737 = vsel %vm518, %v1734, %v1736
      %v1738 = vrot.slane %v974, 1
      %v1739 = vrot.slane %v975, 1
      %v1740 = vsel %vm518, %v1738, %v1739
      %v1741 = vrot.slane %v1682, 1
      %v1742 = vsel %vm518, %v1739, %v1741
      %v1743 = vrot.slane %v976, 1
      %v1744 = vrot.slane %v977, 1
      %v1745 = vsel %vm518, %v1743, %v1744
      %v1746 = vrot.slane %v1683, 1
      %v1747 = vsel %vm518, %v1744, %v1746
      %v1748 = vrot.slane %v978, 1
      %v1749 = vrot.slane %v979, 1
      %v1750 = vsel %vm518, %v1748, %v1749
      %v1751 = vrot.slane %v1684, 1
      %v1752 = vsel %vm518, %v1749, %v1751
      %v1753 = vrot.slane %v980, 1
      %v1754 = vrot.slane %v981, 1
      %v1755 = vsel %vm518, %v1753, %v1754
      %v1756 = vrot.slane %v1685, 1
      %v1757 = vsel %vm518, %v1754, %v1756
      %v1758 = vrot.slane %v982, 1
      %v1759 = vrot.slane %v983, 1
      %v1760 = vsel %vm518, %v1758, %v1759
      %v1761 = vrot.slane %v1686, 1
      %v1762 = vsel %vm518, %v1759, %v1761
      %v1763 = vrot.slane %v984, 1
      %v1764 = vrot.slane %v985, 1
      %v1765 = vsel %vm518, %v1763, %v1764
      %v1766 = vrot.slane %v1687, 1
      %v1767 = vsel %vm518, %v1764, %v1766
      %v1768 = vrot.slane %v986, 1
      %v1769 = vrot.slane %v987, 1
      %v1770 = vsel %vm518, %v1768, %v1769
      %v1771 = vrot.slane %v1688, 1
      %v1772 = vsel %vm518, %v1769, %v1771
      %v1773 = vrot.slane %v988, 1
      %v1774 = vrot.slane %v989, 1
      %v1775 = vsel %vm518, %v1773, %v1774
      %v1776 = vrot.slane %v1689, 1
      %v1777 = vsel %vm518, %v1774, %v1776
      %v1778 = vrot.slane %v990, 1
      %v1779 = vrot.slane %v991, 1
      %v1780 = vsel %vm518, %v1778, %v1779
      %v1781 = vrot.slane %v1690, 1
      %v1782 = vsel %vm518, %v1779, %v1781
      %v1783 = vrot.slane %v992, 1
      %v1784 = vrot.slane %v993, 1
      %v1785 = vsel %vm518, %v1783, %v1784
      %v1786 = vrot.slane %v1691, 1
      %v1787 = vsel %vm518, %v1784, %v1786
      %s1788 = scalar_lea.vmem %s3, 16
      %v1789 = vld [vmem:[%s1788] sm:$0xf]
      %v1790 = vld [vmem:[%s1788 + $0x4] sm:$0xf]
      %v1791 = vld [vmem:[%s1788 + $0x8] sm:$0xf]
      %v1792 = vld [vmem:[%s1788 + $0xc] sm:$0xf]
      %v1797 = vcombine.low %v1789, %v1790
      %v1798 = vcombine.low %v1791, %v1792
      %v1801 = vsel %vm1006, %v1710, 0
      %v1803 = vsel %vm1006, %v1712, 0
      %v1805 = vsel %vm1006, %v1715, 0
      %v1807 = vsel %vm1006, %v1717, 0
      %v1809 = vsel %vm1006, %v1720, 0
      %v1811 = vsel %vm1006, %v1722, 0
      %v1813 = vsel %vm1006, %v1725, 0
      %v1815 = vsel %vm1006, %v1727, 0
      %v1817 = vsel %vm1006, %v1730, 0
      %v1819 = vsel %vm1006, %v1732, 0
      %v1821 = vsel %vm1006, %v1735, 0
      %v1823 = vsel %vm1006, %v1737, 0
      %v1825 = vsel %vm1006, %v1740, 0
      %v1827 = vsel %vm1006, %v1742, 0
      %v1829 = vsel %vm1006, %v1745, 0
      %v1831 = vsel %vm1006, %v1747, 0
      %v1833 = vsel %vm1006, %v1750, 0
      %v1835 = vsel %vm1006, %v1752, 0
      %v1837 = vsel %vm1006, %v1755, 0
      %v1839 = vsel %vm1006, %v1757, 0
      %v1841 = vsel %vm1006, %v1760, 0
      %v1843 = vsel %vm1006, %v1762, 0
      %v1845 = vsel %vm1006, %v1765, 0
      %v1847 = vsel %vm1006, %v1767, 0
      %v1849 = vsel %vm1006, %v1770, 0
      %v1851 = vsel %vm1006, %v1772, 0
      %v1853 = vsel %vm1006, %v1775, 0
      %v1855 = vsel %vm1006, %v1777, 0
      %v1857 = vsel %vm1006, %v1780, 0
      %v1859 = vsel %vm1006, %v1782, 0
      %v1861 = vsel %vm1006, %v1785, 0
      %v1863 = vsel %vm1006, %v1787, 0
      %1865 = vmatprep.subr.mxu0 0.0
      %1866 = vmatpush1.msra.mxu0 0.0
      %1867 = vmatprep.subr.mxu0 0.0
      %1868 = vmatpush1.msra.mxu0 0.0
      %1869 = vmatprep.subr.mxu0 0.0
      %1870 = vmatpush1.msra.mxu0 0.0
      %1871 = vmatprep.subr.mxu0 0.0
      %1872 = vmatpush1.msra.mxu0 0.0
      %1873 = vmatprep.subr.mxu0 0.0
      %1874 = vmatpush1.msra.mxu0 0.0
      %1875 = vmatprep.subr.mxu0 0.0
      %1876 = vmatpush1.msra.mxu0 0.0
      %1877 = vmatprep.subr.mxu0 0.0
      %1878 = vmatpush1.msra.mxu0 0.0
      %1879 = vmatprep.subr.mxu0 0.0
      %1880 = vmatpush1.msra.mxu0 0.0
      %1881 = vmatprep.subr.mxu0 0.0
      %1882 = vmatpush1.msra.mxu0 0.0
      %1883 = vmatprep.subr.mxu0 0.0
      %1884 = vmatpush1.msra.mxu0 0.0
      %1885 = vmatprep.subr.mxu0 0.0
      %1886 = vmatpush1.msra.mxu0 0.0
      %1887 = vmatprep.subr.mxu0 0.0
      %1888 = vmatpush1.msra.mxu0 0.0
      %1889 = vmatprep.subr.mxu0 0.0
      %1890 = vmatpush1.msra.mxu0 0.0
      %1891 = vmatprep.subr.mxu0 0.0
      %1892 = vmatpush1.msra.mxu0 0.0
      %1893 = vmatprep.subr.mxu0 0.0
      %1894 = vmatpush1.msra.mxu0 %v1798
      %1895 = vmatprep.subr.mxu0 0.0
      %1896 = vmatpush1.msra.mxu0 %v1797
      %1897 = vmatprep.subr.mxu0 0.0
      %1898 = vmatpush2.msra.mxu0 0.0
      %1899 = vmatprep.subr.mxu0 0.0
      %1900 = vmatpush2.msra.mxu0 0.0
      %1901 = vmatprep.subr.mxu0 0.0
      %1902 = vmatpush2.msra.mxu0 0.0
      %1903 = vmatprep.subr.mxu0 0.0
      %1904 = vmatpush2.msra.mxu0 0.0
      %1905 = vmatprep.subr.mxu0 0.0
      %1906 = vmatpush2.msra.mxu0 0.0
      %1907 = vmatprep.subr.mxu0 0.0
      %1908 = vmatpush2.msra.mxu0 0.0
      %1909 = vmatprep.subr.mxu0 0.0
      %1910 = vmatpush2.msra.mxu0 0.0
      %1911 = vmatprep.subr.mxu0 0.0
      %1912 = vmatpush2.msra.mxu0 0.0
      %1913 = vmatprep.subr.mxu0 0.0
      %1914 = vmatpush2.msra.mxu0 0.0
      %1915 = vmatprep.subr.mxu0 0.0
      %1916 = vmatpush2.msra.mxu0 0.0
      %1917 = vmatprep.subr.mxu0 0.0
      %1918 = vmatpush2.msra.mxu0 0.0
      %1919 = vmatprep.subr.mxu0 0.0
      %1920 = vmatpush2.msra.mxu0 0.0
      %1921 = vmatprep.subr.mxu0 0.0
      %1922 = vmatpush2.msra.mxu0 0.0
      %1923 = vmatprep.subr.mxu0 0.0
      %1924 = vmatpush2.msra.mxu0 0.0
      %1925 = vmatprep.subr.mxu0 0.0
      %1926 = vmatpush2.msra.mxu0 0.0
      %1927 = vmatprep.subr.mxu0 0.0
      %1928 = vmatpush2.msra.mxu0 0.0
      %1929 = vmatprep.mubr.f32.mxu0 0.0
      %1930 = vmatmul.mubr.f32.gmra.mxu0 %v1801
      %v1931 = vpop.f32.mrf.mxu0
      %v1932 = vadd.f32 0.0, %v1931
      %v1933 = vpop.f32.mrf.mxu0
      %1934 = vmatprep.mubr.f32.mxu0 0.0
      %1935 = vmatmul.mubr.f32.gmra.mxu0 %v1803
      %v1936 = vpop.f32.mrf.mxu0
      %v1937 = vadd.f32 0.0, %v1936
      %v1938 = vpop.f32.mrf.mxu0
      %1939 = vmatprep.mubr.f32.mxu0 0.0
      %1940 = vmatmul.mubr.f32.gmra.mxu0 %v1805
      %v1941 = vpop.f32.mrf.mxu0
      %v1942 = vadd.f32 0.0, %v1941
      %v1943 = vpop.f32.mrf.mxu0
      %1944 = vmatprep.mubr.f32.mxu0 0.0
      %1945 = vmatmul.mubr.f32.gmra.mxu0 %v1807
      %v1946 = vpop.f32.mrf.mxu0
      %v1947 = vadd.f32 0.0, %v1946
      %v1948 = vpop.f32.mrf.mxu0
      %1949 = vmatprep.mubr.f32.mxu0 0.0
      %1950 = vmatmul.mubr.f32.gmra.mxu0 %v1809
      %v1951 = vpop.f32.mrf.mxu0
      %v1952 = vadd.f32 0.0, %v1951
      %v1953 = vpop.f32.mrf.mxu0
      %1954 = vmatprep.mubr.f32.mxu0 0.0
      %1955 = vmatmul.mubr.f32.gmra.mxu0 %v1811
      %v1956 = vpop.f32.mrf.mxu0
      %v1957 = vadd.f32 0.0, %v1956
      %v1958 = vpop.f32.mrf.mxu0
      %1959 = vmatprep.mubr.f32.mxu0 0.0
      %1960 = vmatmul.mubr.f32.gmra.mxu0 %v1813
      %v1961 = vpop.f32.mrf.mxu0
      %v1962 = vadd.f32 0.0, %v1961
      %v1963 = vpop.f32.mrf.mxu0
      %1964 = vmatprep.mubr.f32.mxu0 0.0
      %1965 = vmatmul.mubr.f32.gmra.mxu0 %v1815
      %v1966 = vpop.f32.mrf.mxu0
      %v1967 = vadd.f32 0.0, %v1966
      %v1968 = vpop.f32.mrf.mxu0
      %1969 = vmatprep.mubr.f32.mxu0 0.0
      %1970 = vmatmul.mubr.f32.gmra.mxu0 %v1817
      %v1971 = vpop.f32.mrf.mxu0
      %v1972 = vadd.f32 0.0, %v1971
      %v1973 = vpop.f32.mrf.mxu0
      %1974 = vmatprep.mubr.f32.mxu0 0.0
      %1975 = vmatmul.mubr.f32.gmra.mxu0 %v1819
      %v1976 = vpop.f32.mrf.mxu0
      %v1977 = vadd.f32 0.0, %v1976
      %v1978 = vpop.f32.mrf.mxu0
      %1979 = vmatprep.mubr.f32.mxu0 0.0
      %1980 = vmatmul.mubr.f32.gmra.mxu0 %v1821
      %v1981 = vpop.f32.mrf.mxu0
      %v1982 = vadd.f32 0.0, %v1981
      %v1983 = vpop.f32.mrf.mxu0
      %1984 = vmatprep.mubr.f32.mxu0 0.0
      %1985 = vmatmul.mubr.f32.gmra.mxu0 %v1823
      %v1986 = vpop.f32.mrf.mxu0
      %v1987 = vadd.f32 0.0, %v1986
      %v1988 = vpop.f32.mrf.mxu0
      %1989 = vmatprep.mubr.f32.mxu0 0.0
      %1990 = vmatmul.mubr.f32.gmra.mxu0 %v1825
      %v1991 = vpop.f32.mrf.mxu0
      %v1992 = vadd.f32 0.0, %v1991
      %v1993 = vpop.f32.mrf.mxu0
      %1994 = vmatprep.mubr.f32.mxu0 0.0
      %1995 = vmatmul.mubr.f32.gmra.mxu0 %v1827
      %v1996 = vpop.f32.mrf.mxu0
      %v1997 = vadd.f32 0.0, %v1996
      %v1998 = vpop.f32.mrf.mxu0
      %1999 = vmatprep.mubr.f32.mxu0 0.0
      %2000 = vmatmul.mubr.f32.gmra.mxu0 %v1829
      %v2001 = vpop.f32.mrf.mxu0
      %v2002 = vadd.f32 0.0, %v2001
      %v2003 = vpop.f32.mrf.mxu0
      %2004 = vmatprep.mubr.f32.mxu0 0.0
      %2005 = vmatmul.mubr.f32.gmra.mxu0 %v1831
      %v2006 = vpop.f32.mrf.mxu0
      %v2007 = vadd.f32 0.0, %v2006
      %v2008 = vpop.f32.mrf.mxu0
      %2009 = vmatprep.mubr.f32.mxu0 0.0
      %2010 = vmatmul.mubr.f32.gmra.mxu0 %v1833
      %v2011 = vpop.f32.mrf.mxu0
      %v2012 = vadd.f32 0.0, %v2011
      %v2013 = vpop.f32.mrf.mxu0
      %2014 = vmatprep.mubr.f32.mxu0 0.0
      %2015 = vmatmul.mubr.f32.gmra.mxu0 %v1835
      %v2016 = vpop.f32.mrf.mxu0
      %v2017 = vadd.f32 0.0, %v2016
      %v2018 = vpop.f32.mrf.mxu0
      %2019 = vmatprep.mubr.f32.mxu0 0.0
      %2020 = vmatmul.mubr.f32.gmra.mxu0 %v1837
      %v2021 = vpop.f32.mrf.mxu0
      %v2022 = vadd.f32 0.0, %v2021
      %v2023 = vpop.f32.mrf.mxu0
      %2024 = vmatprep.mubr.f32.mxu0 0.0
      %2025 = vmatmul.mubr.f32.gmra.mxu0 %v1839
      %v2026 = vpop.f32.mrf.mxu0
      %v2027 = vadd.f32 0.0, %v2026
      %v2028 = vpop.f32.mrf.mxu0
      %2029 = vmatprep.mubr.f32.mxu0 0.0
      %2030 = vmatmul.mubr.f32.gmra.mxu0 %v1841
      %v2031 = vpop.f32.mrf.mxu0
      %v2032 = vadd.f32 0.0, %v2031
      %v2033 = vpop.f32.mrf.mxu0
      %2034 = vmatprep.mubr.f32.mxu0 0.0
      %2035 = vmatmul.mubr.f32.gmra.mxu0 %v1843
      %v2036 = vpop.f32.mrf.mxu0
      %v2037 = vadd.f32 0.0, %v2036
      %v2038 = vpop.f32.mrf.mxu0
      %2039 = vmatprep.mubr.f32.mxu0 0.0
      %2040 = vmatmul.mubr.f32.gmra.mxu0 %v1845
      %v2041 = vpop.f32.mrf.mxu0
      %v2042 = vadd.f32 0.0, %v2041
      %v2043 = vpop.f32.mrf.mxu0
      %2044 = vmatprep.mubr.f32.mxu0 0.0
      %2045 = vmatmul.mubr.f32.gmra.mxu0 %v1847
      %v2046 = vpop.f32.mrf.mxu0
      %v2047 = vadd.f32 0.0, %v2046
      %v2048 = vpop.f32.mrf.mxu0
      %2049 = vmatprep.mubr.f32.mxu0 0.0
      %2050 = vmatmul.mubr.f32.gmra.mxu0 %v1849
      %v2051 = vpop.f32.mrf.mxu0
      %v2052 = vadd.f32 0.0, %v2051
      %v2053 = vpop.f32.mrf.mxu0
      %2054 = vmatprep.mubr.f32.mxu0 0.0
      %2055 = vmatmul.mubr.f32.gmra.mxu0 %v1851
      %v2056 = vpop.f32.mrf.mxu0
      %v2057 = vadd.f32 0.0, %v2056
      %v2058 = vpop.f32.mrf.mxu0
      %2059 = vmatprep.mubr.f32.mxu0 0.0
      %2060 = vmatmul.mubr.f32.gmra.mxu0 %v1853
      %v2061 = vpop.f32.mrf.mxu0
      %v2062 = vadd.f32 0.0, %v2061
      %v2063 = vpop.f32.mrf.mxu0
      %2064 = vmatprep.mubr.f32.mxu0 0.0
      %2065 = vmatmul.mubr.f32.gmra.mxu0 %v1855
      %v2066 = vpop.f32.mrf.mxu0
      %v2067 = vadd.f32 0.0, %v2066
      %v2068 = vpop.f32.mrf.mxu0
      %2069 = vmatprep.mubr.f32.mxu0 0.0
      %2070 = vmatmul.mubr.f32.gmra.mxu0 %v1857
      %v2071 = vpop.f32.mrf.mxu0
      %v2072 = vadd.f32 0.0, %v2071
      %v2073 = vpop.f32.mrf.mxu0
      %2074 = vmatprep.mubr.f32.mxu0 0.0
      %2075 = vmatmul.mubr.f32.gmra.mxu0 %v1859
      %v2076 = vpop.f32.mrf.mxu0
      %v2077 = vadd.f32 0.0, %v2076
      %v2078 = vpop.f32.mrf.mxu0
      %2079 = vmatprep.mubr.f32.mxu0 0.0
      %2080 = vmatmul.mubr.f32.gmra.mxu0 %v1861
      %v2081 = vpop.f32.mrf.mxu0
      %v2082 = vadd.f32 0.0, %v2081
      %v2083 = vpop.f32.mrf.mxu0
      %2084 = vmatprep.mubr.f32.mxu0 0.0
      %2085 = vmatmul.mubr.f32.gmra.mxu0 %v1863
      %v2086 = vpop.f32.mrf.mxu0
      %v2087 = vadd.f32 0.0, %v2086
      %v2088 = vpop.f32.mrf.mxu0
      %2089 = vdwg.mxu0
      %v2090 = vsel %vm928, %v1932, 0.0
      %v2091 = vsel %vm928, %v1937, 0.0
      %v2092 = vadd.f32 %v2090, %v2091
      %v2093 = vsel %vm928, %v1942, 0.0
      %v2094 = vadd.f32 %v2092, %v2093
      %v2095 = vsel %vm928, %v1947, 0.0
      %v2096 = vadd.f32 %v2094, %v2095
      %v2097 = vsel %vm928, %v1952, 0.0
      %v2098 = vadd.f32 %v2096, %v2097
      %v2099 = vsel %vm928, %v1957, 0.0
      %v2100 = vadd.f32 %v2098, %v2099
      %v2101 = vsel %vm928, %v1962, 0.0
      %v2102 = vadd.f32 %v2100, %v2101
      %v2103 = vsel %vm928, %v1967, 0.0
      %v2104 = vadd.f32 %v2102, %v2103
      %v2105 = vsel %vm928, %v1972, 0.0
      %v2106 = vadd.f32 %v2104, %v2105
      %v2107 = vsel %vm928, %v1977, 0.0
      %v2108 = vadd.f32 %v2106, %v2107
      %v2109 = vsel %vm928, %v1982, 0.0
      %v2110 = vadd.f32 %v2108, %v2109
      %v2111 = vsel %vm928, %v1987, 0.0
      %v2112 = vadd.f32 %v2110, %v2111
      %v2113 = vsel %vm928, %v1992, 0.0
      %v2114 = vadd.f32 %v2112, %v2113
      %v2115 = vsel %vm928, %v1997, 0.0
      %v2116 = vadd.f32 %v2114, %v2115
      %v2117 = vsel %vm928, %v2002, 0.0
      %v2118 = vadd.f32 %v2116, %v2117
      %v2119 = vsel %vm928, %v2007, 0.0
      %v2120 = vadd.f32 %v2118, %v2119
      %v2121 = vsel %vm928, %v2012, 0.0
      %v2122 = vadd.f32 %v2120, %v2121
      %v2123 = vsel %vm928, %v2017, 0.0
      %v2124 = vadd.f32 %v2122, %v2123
      %v2125 = vsel %vm928, %v2022, 0.0
      %v2126 = vadd.f32 %v2124, %v2125
      %v2127 = vsel %vm928, %v2027, 0.0
      %v2128 = vadd.f32 %v2126, %v2127
      %v2129 = vsel %vm928, %v2032, 0.0
      %v2130 = vadd.f32 %v2128, %v2129
      %v2131 = vsel %vm928, %v2037, 0.0
      %v2132 = vadd.f32 %v2130, %v2131
      %v2133 = vsel %vm928, %v2042, 0.0
      %v2134 = vadd.f32 %v2132, %v2133
      %v2135 = vsel %vm928, %v2047, 0.0
      %v2136 = vadd.f32 %v2134, %v2135
      %v2137 = vsel %vm928, %v2052, 0.0
      %v2138 = vadd.f32 %v2136, %v2137
      %v2139 = vsel %vm928, %v2057, 0.0
      %v2140 = vadd.f32 %v2138, %v2139
      %v2141 = vsel %vm928, %v2062, 0.0
      %v2142 = vadd.f32 %v2140, %v2141
      %v2143 = vsel %vm928, %v2067, 0.0
      %v2144 = vadd.f32 %v2142, %v2143
      %v2145 = vsel %vm928, %v2072, 0.0
      %v2146 = vadd.f32 %v2144, %v2145
      %v2147 = vsel %vm928, %v2077, 0.0
      %v2148 = vadd.f32 %v2146, %v2147
      %v2149 = vsel %vm928, %v2082, 0.0
      %v2150 = vadd.f32 %v2148, %v2149
      %v2151 = vsel %vm928, %v2087, 0.0
      %v2152 = vadd.f32 %v2150, %v2151
      %v2153 = vrot.slane %v2152, 4
      %v2154 = vadd.f32 %v2152, %v2153
      %v2155 = vrot.slane %v2154, 2
      %v2156 = vadd.f32 %v2154, %v2155
      %v2157 = vrot.slane %v2156, 1
      %v2158 = vadd.f32 %v2156, %v2157
      %v2159 = vadd.f32 %v1397, %v2158
      %v2160 = vmul.f32 %v1932, %v1932
      %v2161 = vmul.f32 %v1937, %v1937
      %v2162 = vmul.f32 %v1942, %v1942
      %v2163 = vmul.f32 %v1947, %v1947
      %v2164 = vmul.f32 %v1952, %v1952
      %v2165 = vmul.f32 %v1957, %v1957
      %v2166 = vmul.f32 %v1962, %v1962
      %v2167 = vmul.f32 %v1967, %v1967
      %v2168 = vmul.f32 %v1972, %v1972
      %v2169 = vmul.f32 %v1977, %v1977
      %v2170 = vmul.f32 %v1982, %v1982
      %v2171 = vmul.f32 %v1987, %v1987
      %v2172 = vmul.f32 %v1992, %v1992
      %v2173 = vmul.f32 %v1997, %v1997
      %v2174 = vmul.f32 %v2002, %v2002
      %v2175 = vmul.f32 %v2007, %v2007
      %v2176 = vmul.f32 %v2012, %v2012
      %v2177 = vmul.f32 %v2017, %v2017
      %v2178 = vmul.f32 %v2022, %v2022
      %v2179 = vmul.f32 %v2027, %v2027
      %v2180 = vmul.f32 %v2032, %v2032
      %v2181 = vmul.f32 %v2037, %v2037
      %v2182 = vmul.f32 %v2042, %v2042
      %v2183 = vmul.f32 %v2047, %v2047
      %v2184 = vmul.f32 %v2052, %v2052
      %v2185 = vmul.f32 %v2057, %v2057
      %v2186 = vmul.f32 %v2062, %v2062
      %v2187 = vmul.f32 %v2067, %v2067
      %v2188 = vmul.f32 %v2072, %v2072
      %v2189 = vmul.f32 %v2077, %v2077
      %v2190 = vmul.f32 %v2082, %v2082
      %v2191 = vmul.f32 %v2087, %v2087
      %v2192 = vsel %vm928, %v2160, 0.0
      %v2193 = vsel %vm928, %v2161, 0.0
      %v2194 = vadd.f32 %v2192, %v2193
      %v2195 = vsel %vm928, %v2162, 0.0
      %v2196 = vadd.f32 %v2194, %v2195
      %v2197 = vsel %vm928, %v2163, 0.0
      %v2198 = vadd.f32 %v2196, %v2197
      %v2199 = vsel %vm928, %v2164, 0.0
      %v2200 = vadd.f32 %v2198, %v2199
      %v2201 = vsel %vm928, %v2165, 0.0
      %v2202 = vadd.f32 %v2200, %v2201
      %v2203 = vsel %vm928, %v2166, 0.0
      %v2204 = vadd.f32 %v2202, %v2203
      %v2205 = vsel %vm928, %v2167, 0.0
      %v2206 = vadd.f32 %v2204, %v2205
      %v2207 = vsel %vm928, %v2168, 0.0
      %v2208 = vadd.f32 %v2206, %v2207
      %v2209 = vsel %vm928, %v2169, 0.0
      %v2210 = vadd.f32 %v2208, %v2209
      %v2211 = vsel %vm928, %v2170, 0.0
      %v2212 = vadd.f32 %v2210, %v2211
      %v2213 = vsel %vm928, %v2171, 0.0
      %v2214 = vadd.f32 %v2212, %v2213
      %v2215 = vsel %vm928, %v2172, 0.0
      %v2216 = vadd.f32 %v2214, %v2215
      %v2217 = vsel %vm928, %v2173, 0.0
      %v2218 = vadd.f32 %v2216, %v2217
      %v2219 = vsel %vm928, %v2174, 0.0
      %v2220 = vadd.f32 %v2218, %v2219
      %v2221 = vsel %vm928, %v2175, 0.0
      %v2222 = vadd.f32 %v2220, %v2221
      %v2223 = vsel %vm928, %v2176, 0.0
      %v2224 = vadd.f32 %v2222, %v2223
      %v2225 = vsel %vm928, %v2177, 0.0
      %v2226 = vadd.f32 %v2224, %v2225
      %v2227 = vsel %vm928, %v2178, 0.0
      %v2228 = vadd.f32 %v2226, %v2227
      %v2229 = vsel %vm928, %v2179, 0.0
      %v2230 = vadd.f32 %v2228, %v2229
      %v2231 = vsel %vm928, %v2180, 0.0
      %v2232 = vadd.f32 %v2230, %v2231
      %v2233 = vsel %vm928, %v2181, 0.0
      %v2234 = vadd.f32 %v2232, %v2233
      %v2235 = vsel %vm928, %v2182, 0.0
      %v2236 = vadd.f32 %v2234, %v2235
      %v2237 = vsel %vm928, %v2183, 0.0
      %v2238 = vadd.f32 %v2236, %v2237
      %v2239 = vsel %vm928, %v2184, 0.0
      %v2240 = vadd.f32 %v2238, %v2239
      %v2241 = vsel %vm928, %v2185, 0.0
      %v2242 = vadd.f32 %v2240, %v2241
      %v2243 = vsel %vm928, %v2186, 0.0
      %v2244 = vadd.f32 %v2242, %v2243
      %v2245 = vsel %vm928, %v2187, 0.0
      %v2246 = vadd.f32 %v2244, %v2245
      %v2247 = vsel %vm928, %v2188, 0.0
      %v2248 = vadd.f32 %v2246, %v2247
      %v2249 = vsel %vm928, %v2189, 0.0
      %v2250 = vadd.f32 %v2248, %v2249
      %v2251 = vsel %vm928, %v2190, 0.0
      %v2252 = vadd.f32 %v2250, %v2251
      %v2253 = vsel %vm928, %v2191, 0.0
      %v2254 = vadd.f32 %v2252, %v2253
      %v2255 = vrot.slane %v2254, 4
      %v2256 = vadd.f32 %v2254, %v2255
      %v2257 = vrot.slane %v2256, 2
      %v2258 = vadd.f32 %v2256, %v2257
      %v2259 = vrot.slane %v2258, 1
      %v2260 = vadd.f32 %v2258, %v2259
      %v2261 = vadd.f32 %v1499, %v2260
      %2294 = vrot.lane.b32.xlu0 %v1932, 8
      %v2295 = vpop.permute.xlu0 %2294
      %2296 = vrot.lane.b32.xlu0 %v1937, 8
      %v2297 = vpop.permute.xlu0 %2296
      %2298 = vrot.lane.b32.xlu0 %v1942, 8
      %v2299 = vpop.permute.xlu0 %2298
      %2300 = vrot.lane.b32.xlu0 %v1947, 8
      %v2301 = vpop.permute.xlu0 %2300
      %2302 = vrot.lane.b32.xlu0 %v1952, 8
      %v2303 = vpop.permute.xlu0 %2302
      %2304 = vrot.lane.b32.xlu0 %v1957, 8
      %v2305 = vpop.permute.xlu0 %2304
      %2306 = vrot.lane.b32.xlu0 %v1962, 8
      %v2307 = vpop.permute.xlu0 %2306
      %2308 = vrot.lane.b32.xlu0 %v1967, 8
      %v2309 = vpop.permute.xlu0 %2308
      %2310 = vrot.lane.b32.xlu0 %v1972, 8
      %v2311 = vpop.permute.xlu0 %2310
      %2312 = vrot.lane.b32.xlu0 %v1977, 8
      %v2313 = vpop.permute.xlu0 %2312
      %2314 = vrot.lane.b32.xlu0 %v1982, 8
      %v2315 = vpop.permute.xlu0 %2314
      %2316 = vrot.lane.b32.xlu0 %v1987, 8
      %v2317 = vpop.permute.xlu0 %2316
      %2318 = vrot.lane.b32.xlu0 %v1992, 8
      %v2319 = vpop.permute.xlu0 %2318
      %2320 = vrot.lane.b32.xlu0 %v1997, 8
      %v2321 = vpop.permute.xlu0 %2320
      %2322 = vrot.lane.b32.xlu0 %v2002, 8
      %v2323 = vpop.permute.xlu0 %2322
      %2324 = vrot.lane.b32.xlu0 %v2007, 8
      %v2325 = vpop.permute.xlu0 %2324
      %2326 = vrot.lane.b32.xlu0 %v2012, 8
      %v2327 = vpop.permute.xlu0 %2326
      %2328 = vrot.lane.b32.xlu0 %v2017, 8
      %v2329 = vpop.permute.xlu0 %2328
      %2330 = vrot.lane.b32.xlu0 %v2022, 8
      %v2331 = vpop.permute.xlu0 %2330
      %2332 = vrot.lane.b32.xlu0 %v2027, 8
      %v2333 = vpop.permute.xlu0 %2332
      %2334 = vrot.lane.b32.xlu0 %v2032, 8
      %v2335 = vpop.permute.xlu0 %2334
      %2336 = vrot.lane.b32.xlu0 %v2037, 8
      %v2337 = vpop.permute.xlu0 %2336
      %2338 = vrot.lane.b32.xlu0 %v2042, 8
      %v2339 = vpop.permute.xlu0 %2338
      %2340 = vrot.lane.b32.xlu0 %v2047, 8
      %v2341 = vpop.permute.xlu0 %2340
      %2342 = vrot.lane.b32.xlu0 %v2052, 8
      %v2343 = vpop.permute.xlu0 %2342
      %2344 = vrot.lane.b32.xlu0 %v2057, 8
      %v2345 = vpop.permute.xlu0 %2344
      %2346 = vrot.lane.b32.xlu0 %v2062, 8
      %v2347 = vpop.permute.xlu0 %2346
      %2348 = vrot.lane.b32.xlu0 %v2067, 8
      %v2349 = vpop.permute.xlu0 %2348
      %2350 = vrot.lane.b32.xlu0 %v2072, 8
      %v2351 = vpop.permute.xlu0 %2350
      %2352 = vrot.lane.b32.xlu0 %v2077, 8
      %v2353 = vpop.permute.xlu0 %2352
      %2354 = vrot.lane.b32.xlu0 %v2082, 8
      %v2355 = vpop.permute.xlu0 %2354
      %2356 = vrot.lane.b32.xlu0 %v2087, 8
      %v2357 = vpop.permute.xlu0 %2356
      %v2390 = vsel %vm928, %v1170, %v2295
      %v2391 = vsel %vm928, %v1175, %v2297
      %v2392 = vsel %vm928, %v1180, %v2299
      %v2393 = vsel %vm928, %v1185, %v2301
      %v2394 = vsel %vm928, %v1190, %v2303
      %v2395 = vsel %vm928, %v1195, %v2305
      %v2396 = vsel %vm928, %v1200, %v2307
      %v2397 = vsel %vm928, %v1205, %v2309
      %v2398 = vsel %vm928, %v1210, %v2311
      %v2399 = vsel %vm928, %v1215, %v2313
      %v2400 = vsel %vm928, %v1220, %v2315
      %v2401 = vsel %vm928, %v1225, %v2317
      %v2402 = vsel %vm928, %v1230, %v2319
      %v2403 = vsel %vm928, %v1235, %v2321
      %v2404 = vsel %vm928, %v1240, %v2323
      %v2405 = vsel %vm928, %v1245, %v2325
      %v2406 = vsel %vm928, %v1250, %v2327
      %v2407 = vsel %vm928, %v1255, %v2329
      %v2408 = vsel %vm928, %v1260, %v2331
      %v2409 = vsel %vm928, %v1265, %v2333
      %v2410 = vsel %vm928, %v1270, %v2335
      %v2411 = vsel %vm928, %v1275, %v2337
      %v2412 = vsel %vm928, %v1280, %v2339
      %v2413 = vsel %vm928, %v1285, %v2341
      %v2414 = vsel %vm928, %v1290, %v2343
      %v2415 = vsel %vm928, %v1295, %v2345
      %v2416 = vsel %vm928, %v1300, %v2347
      %v2417 = vsel %vm928, %v1305, %v2349
      %v2418 = vsel %vm928, %v1310, %v2351
      %v2419 = vsel %vm928, %v1315, %v2353
      %v2420 = vsel %vm928, %v1320, %v2355
      %v2421 = vsel %vm928, %v1325, %v2357
      %2422 = vst.msk [vmem:[%s407] sm:$0xff] %vm1006, %v2390
      %2423 = vst.msk [vmem:[%s407 + $0x8] sm:$0xff] %vm1006, %v2391
      %2424 = vst.msk [vmem:[%s407 + $0x20] sm:$0xff] %vm1006, %v2392
      %2425 = vst.msk [vmem:[%s407 + $0x28] sm:$0xff] %vm1006, %v2393
      %2426 = vst.msk [vmem:[%s407 + $0x40] sm:$0xff] %vm1006, %v2394
      %2427 = vst.msk [vmem:[%s407 + $0x48] sm:$0xff] %vm1006, %v2395
      %2428 = vst.msk [vmem:[%s407 + $0x60] sm:$0xff] %vm1006, %v2396
      %2429 = vst.msk [vmem:[%s407 + $0x68] sm:$0xff] %vm1006, %v2397
      %2430 = vst.msk [vmem:[%s407 + $0x80] sm:$0xff] %vm1006, %v2398
      %2431 = vst.msk [vmem:[%s407 + $0x88] sm:$0xff] %vm1006, %v2399
      %2432 = vst.msk [vmem:[%s407 + $0xa0] sm:$0xff] %vm1006, %v2400
      %2433 = vst.msk [vmem:[%s407 + $0xa8] sm:$0xff] %vm1006, %v2401
      %2434 = vst.msk [vmem:[%s407 + $0xc0] sm:$0xff] %vm1006, %v2402
      %2435 = vst.msk [vmem:[%s407 + $0xc8] sm:$0xff] %vm1006, %v2403
      %2436 = vst.msk [vmem:[%s407 + $0xe0] sm:$0xff] %vm1006, %v2404
      %2437 = vst.msk [vmem:[%s407 + $0xe8] sm:$0xff] %vm1006, %v2405
      %2438 = vst.msk [vmem:[%s407 + $0x100] sm:$0xff] %vm1006, %v2406
      %2439 = vst.msk [vmem:[%s407 + $0x108] sm:$0xff] %vm1006, %v2407
      %2440 = vst.msk [vmem:[%s407 + $0x120] sm:$0xff] %vm1006, %v2408
      %2441 = vst.msk [vmem:[%s407 + $0x128] sm:$0xff] %vm1006, %v2409
      %2442 = vst.msk [vmem:[%s407 + $0x140] sm:$0xff] %vm1006, %v2410
      %2443 = vst.msk [vmem:[%s407 + $0x148] sm:$0xff] %vm1006, %v2411
      %2444 = vst.msk [vmem:[%s407 + $0x160] sm:$0xff] %vm1006, %v2412
      %2445 = vst.msk [vmem:[%s407 + $0x168] sm:$0xff] %vm1006, %v2413
      %2446 = vst.msk [vmem:[%s407 + $0x180] sm:$0xff] %vm1006, %v2414
      %2447 = vst.msk [vmem:[%s407 + $0x188] sm:$0xff] %vm1006, %v2415
      %2448 = vst.msk [vmem:[%s407 + $0x1a0] sm:$0xff] %vm1006, %v2416
      %2449 = vst.msk [vmem:[%s407 + $0x1a8] sm:$0xff] %vm1006, %v2417
      %2450 = vst.msk [vmem:[%s407 + $0x1c0] sm:$0xff] %vm1006, %v2418
      %2451 = vst.msk [vmem:[%s407 + $0x1c8] sm:$0xff] %vm1006, %v2419
      %2452 = vst.msk [vmem:[%s407 + $0x1e0] sm:$0xff] %vm1006, %v2420
      %2453 = vst.msk [vmem:[%s407 + $0x1e8] sm:$0xff] %vm1006, %v2421
      %2454 = vrot.lane.b32.xlu0 %v796, 4
      %v2455 = vpop.permute.xlu0 %2454
      %2456 = vrot.lane.b32.xlu0 %v798, 4
      %v2457 = vpop.permute.xlu0 %2456
      %2462 = vrot.lane.b32.xlu0 %v467, 8
      %v2463 = vpop.permute.xlu0 %2462
      %2464 = vrot.lane.b32.xlu0 %v468, 8
      %v2465 = vpop.permute.xlu0 %2464
      %v2469 = vrot.slane %v467, 1
      %v2470 = vrot.slane %v468, 1
      %v2471 = vsel %vm518, %v2469, %v2470
      %v2472 = vrot.slane %v469, 1
      %v2473 = vsel %vm518, %v2470, %v2472
      %2474 = vrot.lane.b32.xlu0 %v2471, 12
      %v2475 = vpop.permute.xlu0 %2474
      %2476 = vrot.lane.b32.xlu0 %v2473, 12
      %v2477 = vpop.permute.xlu0 %2476
      %v2480 = vsel %vm895, %v464, %v2455
      %v2481 = vsel %vm895, %v465, %v2457
      %v2482 = vsel %vm928, %v2480, %v2463
      %v2483 = vsel %vm928, %v2481, %v2465
      %v2484 = vsel %vm961, %v2482, %v2475
      %v2485 = vsel %vm961, %v2483, %v2477
      %s2486 = scalar_lea.vmem %s3, 32
      %v2487 = vld [vmem:[%s2486] sm:$0xf]
      %v2488 = vld [vmem:[%s2486 + $0x4] sm:$0xf]
      %v2489 = vld [vmem:[%s2486 + $0x8] sm:$0xf]
      %v2490 = vld [vmem:[%s2486 + $0xc] sm:$0xf]
      %v2495 = vcombine.low %v2487, %v2488
      %v2496 = vcombine.low %v2489, %v2490
      %v2500 = vsel %vm1006, %v2484, 0
      %v2503 = vsel %vm1006, %v2485, 0
      %2505 = vmatprep.subr.mxu0 0.0
      %2506 = vmatpush1.msra.mxu0 0.0
      %2507 = vmatprep.subr.mxu0 0.0
      %2508 = vmatpush1.msra.mxu0 0.0
      %2509 = vmatprep.subr.mxu0 0.0
      %2510 = vmatpush1.msra.mxu0 0.0
      %2511 = vmatprep.subr.mxu0 0.0
      %2512 = vmatpush1.msra.mxu0 0.0
      %2513 = vmatprep.subr.mxu0 0.0
      %2514 = vmatpush1.msra.mxu0 0.0
      %2515 = vmatprep.subr.mxu0 0.0
      %2516 = vmatpush1.msra.mxu0 0.0
      %2517 = vmatprep.subr.mxu0 0.0
      %2518 = vmatpush1.msra.mxu0 0.0
      %2519 = vmatprep.subr.mxu0 0.0
      %2520 = vmatpush1.msra.mxu0 0.0
      %2521 = vmatprep.subr.mxu0 0.0
      %2522 = vmatpush1.msra.mxu0 0.0
      %2523 = vmatprep.subr.mxu0 0.0
      %2524 = vmatpush1.msra.mxu0 0.0
      %2525 = vmatprep.subr.mxu0 0.0
      %2526 = vmatpush1.msra.mxu0 0.0
      %2527 = vmatprep.subr.mxu0 0.0
      %2528 = vmatpush1.msra.mxu0 0.0
      %2529 = vmatprep.subr.mxu0 0.0
      %2530 = vmatpush1.msra.mxu0 0.0
      %2531 = vmatprep.subr.mxu0 0.0
      %2532 = vmatpush1.msra.mxu0 0.0
      %2533 = vmatprep.subr.mxu0 0.0
      %2534 = vmatpush1.msra.mxu0 %v2496
      %2535 = vmatprep.subr.mxu0 0.0
      %2536 = vmatpush1.msra.mxu0 %v2495
      %2537 = vmatprep.subr.mxu0 0.0
      %2538 = vmatpush2.msra.mxu0 0.0
      %2539 = vmatprep.subr.mxu0 0.0
      %2540 = vmatpush2.msra.mxu0 0.0
      %2541 = vmatprep.subr.mxu0 0.0
      %2542 = vmatpush2.msra.mxu0 0.0
      %2543 = vmatprep.subr.mxu0 0.0
      %2544 = vmatpush2.msra.mxu0 0.0
      %2545 = vmatprep.subr.mxu0 0.0
      %2546 = vmatpush2.msra.mxu0 0.0
      %2547 = vmatprep.subr.mxu0 0.0
      %2548 = vmatpush2.msra.mxu0 0.0
      %2549 = vmatprep.subr.mxu0 0.0
      %2550 = vmatpush2.msra.mxu0 0.0
      %2551 = vmatprep.subr.mxu0 0.0
      %2552 = vmatpush2.msra.mxu0 0.0
      %2553 = vmatprep.subr.mxu0 0.0
      %2554 = vmatpush2.msra.mxu0 0.0
      %2555 = vmatprep.subr.mxu0 0.0
      %2556 = vmatpush2.msra.mxu0 0.0
      %2557 = vmatprep.subr.mxu0 0.0
      %2558 = vmatpush2.msra.mxu0 0.0
      %2559 = vmatprep.subr.mxu0 0.0
      %2560 = vmatpush2.msra.mxu0 0.0
      %2561 = vmatprep.subr.mxu0 0.0
      %2562 = vmatpush2.msra.mxu0 0.0
      %2563 = vmatprep.subr.mxu0 0.0
      %2564 = vmatpush2.msra.mxu0 0.0
      %2565 = vmatprep.subr.mxu0 0.0
      %2566 = vmatpush2.msra.mxu0 0.0
      %2567 = vmatprep.subr.mxu0 0.0
      %2568 = vmatpush2.msra.mxu0 0.0
      %2569 = vmatprep.mubr.f32.mxu0 0.0
      %2570 = vmatmul.mubr.f32.gmra.mxu0 %v1014
      %v2571 = vpop.f32.mrf.mxu0
      %v2572 = vadd.f32 0.0, %v2571
      %v2573 = vpop.f32.mrf.mxu0
      %2574 = vmatprep.mubr.f32.mxu0 0.0
      %2575 = vmatmul.mubr.f32.gmra.mxu0 %v1017
      %v2576 = vpop.f32.mrf.mxu0
      %v2577 = vadd.f32 0.0, %v2576
      %v2578 = vpop.f32.mrf.mxu0
      %2579 = vmatprep.mubr.f32.mxu0 0.0
      %2580 = vmatmul.mubr.f32.gmra.mxu0 %v1020
      %v2581 = vpop.f32.mrf.mxu0
      %v2582 = vadd.f32 0.0, %v2581
      %v2583 = vpop.f32.mrf.mxu0
      %2584 = vmatprep.mubr.f32.mxu0 0.0
      %2585 = vmatmul.mubr.f32.gmra.mxu0 %v1023
      %v2586 = vpop.f32.mrf.mxu0
      %v2587 = vadd.f32 0.0, %v2586
      %v2588 = vpop.f32.mrf.mxu0
      %2589 = vmatprep.mubr.f32.mxu0 0.0
      %2590 = vmatmul.mubr.f32.gmra.mxu0 %v1026
      %v2591 = vpop.f32.mrf.mxu0
      %v2592 = vadd.f32 0.0, %v2591
      %v2593 = vpop.f32.mrf.mxu0
      %2594 = vmatprep.mubr.f32.mxu0 0.0
      %2595 = vmatmul.mubr.f32.gmra.mxu0 %v1029
      %v2596 = vpop.f32.mrf.mxu0
      %v2597 = vadd.f32 0.0, %v2596
      %v2598 = vpop.f32.mrf.mxu0
      %2599 = vmatprep.mubr.f32.mxu0 0.0
      %2600 = vmatmul.mubr.f32.gmra.mxu0 %v1032
      %v2601 = vpop.f32.mrf.mxu0
      %v2602 = vadd.f32 0.0, %v2601
      %v2603 = vpop.f32.mrf.mxu0
      %2604 = vmatprep.mubr.f32.mxu0 0.0
      %2605 = vmatmul.mubr.f32.gmra.mxu0 %v1035
      %v2606 = vpop.f32.mrf.mxu0
      %v2607 = vadd.f32 0.0, %v2606
      %v2608 = vpop.f32.mrf.mxu0
      %2609 = vmatprep.mubr.f32.mxu0 0.0
      %2610 = vmatmul.mubr.f32.gmra.mxu0 %v1038
      %v2611 = vpop.f32.mrf.mxu0
      %v2612 = vadd.f32 0.0, %v2611
      %v2613 = vpop.f32.mrf.mxu0
      %2614 = vmatprep.mubr.f32.mxu0 0.0
      %2615 = vmatmul.mubr.f32.gmra.mxu0 %v1041
      %v2616 = vpop.f32.mrf.mxu0
      %v2617 = vadd.f32 0.0, %v2616
      %v2618 = vpop.f32.mrf.mxu0
      %2619 = vmatprep.mubr.f32.mxu0 0.0
      %2620 = vmatmul.mubr.f32.gmra.mxu0 %v1044
      %v2621 = vpop.f32.mrf.mxu0
      %v2622 = vadd.f32 0.0, %v2621
      %v2623 = vpop.f32.mrf.mxu0
      %2624 = vmatprep.mubr.f32.mxu0 0.0
      %2625 = vmatmul.mubr.f32.gmra.mxu0 %v1047
      %v2626 = vpop.f32.mrf.mxu0
      %v2627 = vadd.f32 0.0, %v2626
      %v2628 = vpop.f32.mrf.mxu0
      %2629 = vmatprep.mubr.f32.mxu0 0.0
      %2630 = vmatmul.mubr.f32.gmra.mxu0 %v1050
      %v2631 = vpop.f32.mrf.mxu0
      %v2632 = vadd.f32 0.0, %v2631
      %v2633 = vpop.f32.mrf.mxu0
      %2634 = vmatprep.mubr.f32.mxu0 0.0
      %2635 = vmatmul.mubr.f32.gmra.mxu0 %v1053
      %v2636 = vpop.f32.mrf.mxu0
      %v2637 = vadd.f32 0.0, %v2636
      %v2638 = vpop.f32.mrf.mxu0
      %2639 = vmatprep.mubr.f32.mxu0 0.0
      %2640 = vmatmul.mubr.f32.gmra.mxu0 %v1056
      %v2641 = vpop.f32.mrf.mxu0
      %v2642 = vadd.f32 0.0, %v2641
      %v2643 = vpop.f32.mrf.mxu0
      %2644 = vmatprep.mubr.f32.mxu0 0.0
      %2645 = vmatmul.mubr.f32.gmra.mxu0 %v1059
      %v2646 = vpop.f32.mrf.mxu0
      %v2647 = vadd.f32 0.0, %v2646
      %v2648 = vpop.f32.mrf.mxu0
      %2649 = vmatprep.mubr.f32.mxu0 0.0
      %2650 = vmatmul.mubr.f32.gmra.mxu0 %v1062
      %v2651 = vpop.f32.mrf.mxu0
      %v2652 = vadd.f32 0.0, %v2651
      %v2653 = vpop.f32.mrf.mxu0
      %2654 = vmatprep.mubr.f32.mxu0 0.0
      %2655 = vmatmul.mubr.f32.gmra.mxu0 %v1065
      %v2656 = vpop.f32.mrf.mxu0
      %v2657 = vadd.f32 0.0, %v2656
      %v2658 = vpop.f32.mrf.mxu0
      %2659 = vmatprep.mubr.f32.mxu0 0.0
      %2660 = vmatmul.mubr.f32.gmra.mxu0 %v1068
      %v2661 = vpop.f32.mrf.mxu0
      %v2662 = vadd.f32 0.0, %v2661
      %v2663 = vpop.f32.mrf.mxu0
      %2664 = vmatprep.mubr.f32.mxu0 0.0
      %2665 = vmatmul.mubr.f32.gmra.mxu0 %v1071
      %v2666 = vpop.f32.mrf.mxu0
      %v2667 = vadd.f32 0.0, %v2666
      %v2668 = vpop.f32.mrf.mxu0
      %2669 = vmatprep.mubr.f32.mxu0 0.0
      %2670 = vmatmul.mubr.f32.gmra.mxu0 %v1074
      %v2671 = vpop.f32.mrf.mxu0
      %v2672 = vadd.f32 0.0, %v2671
      %v2673 = vpop.f32.mrf.mxu0
      %2674 = vmatprep.mubr.f32.mxu0 0.0
      %2675 = vmatmul.mubr.f32.gmra.mxu0 %v1077
      %v2676 = vpop.f32.mrf.mxu0
      %v2677 = vadd.f32 0.0, %v2676
      %v2678 = vpop.f32.mrf.mxu0
      %2679 = vmatprep.mubr.f32.mxu0 0.0
      %2680 = vmatmul.mubr.f32.gmra.mxu0 %v1080
      %v2681 = vpop.f32.mrf.mxu0
      %v2682 = vadd.f32 0.0, %v2681
      %v2683 = vpop.f32.mrf.mxu0
      %2684 = vmatprep.mubr.f32.mxu0 0.0
      %2685 = vmatmul.mubr.f32.gmra.mxu0 %v1083
      %v2686 = vpop.f32.mrf.mxu0
      %v2687 = vadd.f32 0.0, %v2686
      %v2688 = vpop.f32.mrf.mxu0
      %2689 = vmatprep.mubr.f32.mxu0 0.0
      %2690 = vmatmul.mubr.f32.gmra.mxu0 %v1086
      %v2691 = vpop.f32.mrf.mxu0
      %v2692 = vadd.f32 0.0, %v2691
      %v2693 = vpop.f32.mrf.mxu0
      %2694 = vmatprep.mubr.f32.mxu0 0.0
      %2695 = vmatmul.mubr.f32.gmra.mxu0 %v1089
      %v2696 = vpop.f32.mrf.mxu0
      %v2697 = vadd.f32 0.0, %v2696
      %v2698 = vpop.f32.mrf.mxu0
      %2699 = vmatprep.mubr.f32.mxu0 0.0
      %2700 = vmatmul.mubr.f32.gmra.mxu0 %v1092
      %v2701 = vpop.f32.mrf.mxu0
      %v2702 = vadd.f32 0.0, %v2701
      %v2703 = vpop.f32.mrf.mxu0
      %2704 = vmatprep.mubr.f32.mxu0 0.0
      %2705 = vmatmul.mubr.f32.gmra.mxu0 %v1095
      %v2706 = vpop.f32.mrf.mxu0
      %v2707 = vadd.f32 0.0, %v2706
      %v2708 = vpop.f32.mrf.mxu0
      %2709 = vmatprep.mubr.f32.mxu0 0.0
      %2710 = vmatmul.mubr.f32.gmra.mxu0 %v1098
      %v2711 = vpop.f32.mrf.mxu0
      %v2712 = vadd.f32 0.0, %v2711
      %v2713 = vpop.f32.mrf.mxu0
      %2714 = vmatprep.mubr.f32.mxu0 0.0
      %2715 = vmatmul.mubr.f32.gmra.mxu0 %v1101
      %v2716 = vpop.f32.mrf.mxu0
      %v2717 = vadd.f32 0.0, %v2716
      %v2718 = vpop.f32.mrf.mxu0
      %2719 = vmatprep.mubr.f32.mxu0 0.0
      %2720 = vmatmul.mubr.f32.gmra.mxu0 %v2500
      %v2721 = vpop.f32.mrf.mxu0
      %v2722 = vadd.f32 0.0, %v2721
      %v2723 = vpop.f32.mrf.mxu0
      %2724 = vmatprep.mubr.f32.mxu0 0.0
      %2725 = vmatmul.mubr.f32.gmra.mxu0 %v2503
      %v2726 = vpop.f32.mrf.mxu0
      %v2727 = vadd.f32 0.0, %v2726
      %v2728 = vpop.f32.mrf.mxu0
      %2729 = vdwg.mxu0
      %v2730 = vsel %vm928, %v2572, 0.0
      %v2731 = vsel %vm928, %v2577, 0.0
      %v2732 = vadd.f32 %v2730, %v2731
      %v2733 = vsel %vm928, %v2582, 0.0
      %v2734 = vadd.f32 %v2732, %v2733
      %v2735 = vsel %vm928, %v2587, 0.0
      %v2736 = vadd.f32 %v2734, %v2735
      %v2737 = vsel %vm928, %v2592, 0.0
      %v2738 = vadd.f32 %v2736, %v2737
      %v2739 = vsel %vm928, %v2597, 0.0
      %v2740 = vadd.f32 %v2738, %v2739
      %v2741 = vsel %vm928, %v2602, 0.0
      %v2742 = vadd.f32 %v2740, %v2741
      %v2743 = vsel %vm928, %v2607, 0.0
      %v2744 = vadd.f32 %v2742, %v2743
      %v2745 = vsel %vm928, %v2612, 0.0
      %v2746 = vadd.f32 %v2744, %v2745
      %v2747 = vsel %vm928, %v2617, 0.0
      %v2748 = vadd.f32 %v2746, %v2747
      %v2749 = vsel %vm928, %v2622, 0.0
      %v2750 = vadd.f32 %v2748, %v2749
      %v2751 = vsel %vm928, %v2627, 0.0
      %v2752 = vadd.f32 %v2750, %v2751
      %v2753 = vsel %vm928, %v2632, 0.0
      %v2754 = vadd.f32 %v2752, %v2753
      %v2755 = vsel %vm928, %v2637, 0.0
      %v2756 = vadd.f32 %v2754, %v2755
      %v2757 = vsel %vm928, %v2642, 0.0
      %v2758 = vadd.f32 %v2756, %v2757
      %v2759 = vsel %vm928, %v2647, 0.0
      %v2760 = vadd.f32 %v2758, %v2759
      %v2761 = vsel %vm928, %v2652, 0.0
      %v2762 = vadd.f32 %v2760, %v2761
      %v2763 = vsel %vm928, %v2657, 0.0
      %v2764 = vadd.f32 %v2762, %v2763
      %v2765 = vsel %vm928, %v2662, 0.0
      %v2766 = vadd.f32 %v2764, %v2765
      %v2767 = vsel %vm928, %v2667, 0.0
      %v2768 = vadd.f32 %v2766, %v2767
      %v2769 = vsel %vm928, %v2672, 0.0
      %v2770 = vadd.f32 %v2768, %v2769
      %v2771 = vsel %vm928, %v2677, 0.0
      %v2772 = vadd.f32 %v2770, %v2771
      %v2773 = vsel %vm928, %v2682, 0.0
      %v2774 = vadd.f32 %v2772, %v2773
      %v2775 = vsel %vm928, %v2687, 0.0
      %v2776 = vadd.f32 %v2774, %v2775
      %v2777 = vsel %vm928, %v2692, 0.0
      %v2778 = vadd.f32 %v2776, %v2777
      %v2779 = vsel %vm928, %v2697, 0.0
      %v2780 = vadd.f32 %v2778, %v2779
      %v2781 = vsel %vm928, %v2702, 0.0
      %v2782 = vadd.f32 %v2780, %v2781
      %v2783 = vsel %vm928, %v2707, 0.0
      %v2784 = vadd.f32 %v2782, %v2783
      %v2785 = vsel %vm928, %v2712, 0.0
      %v2786 = vadd.f32 %v2784, %v2785
      %v2787 = vsel %vm928, %v2717, 0.0
      %v2788 = vadd.f32 %v2786, %v2787
      %v2789 = vsel %vm928, %v2722, 0.0
      %v2790 = vadd.f32 %v2788, %v2789
      %v2791 = vsel %vm928, %v2727, 0.0
      %v2792 = vadd.f32 %v2790, %v2791
      %v2793 = vrot.slane %v2792, 4
      %v2794 = vadd.f32 %v2792, %v2793
      %v2795 = vrot.slane %v2794, 2
      %v2796 = vadd.f32 %v2794, %v2795
      %v2797 = vrot.slane %v2796, 1
      %v2798 = vadd.f32 %v2796, %v2797
      %v2799 = vadd.f32 %v2159, %v2798
      %v2800 = vmul.f32 %v2572, %v2572
      %v2801 = vmul.f32 %v2577, %v2577
      %v2802 = vmul.f32 %v2582, %v2582
      %v2803 = vmul.f32 %v2587, %v2587
      %v2804 = vmul.f32 %v2592, %v2592
      %v2805 = vmul.f32 %v2597, %v2597
      %v2806 = vmul.f32 %v2602, %v2602
      %v2807 = vmul.f32 %v2607, %v2607
      %v2808 = vmul.f32 %v2612, %v2612
      %v2809 = vmul.f32 %v2617, %v2617
      %v2810 = vmul.f32 %v2622, %v2622
      %v2811 = vmul.f32 %v2627, %v2627
      %v2812 = vmul.f32 %v2632, %v2632
      %v2813 = vmul.f32 %v2637, %v2637
      %v2814 = vmul.f32 %v2642, %v2642
      %v2815 = vmul.f32 %v2647, %v2647
      %v2816 = vmul.f32 %v2652, %v2652
      %v2817 = vmul.f32 %v2657, %v2657
      %v2818 = vmul.f32 %v2662, %v2662
      %v2819 = vmul.f32 %v2667, %v2667
      %v2820 = vmul.f32 %v2672, %v2672
      %v2821 = vmul.f32 %v2677, %v2677
      %v2822 = vmul.f32 %v2682, %v2682
      %v2823 = vmul.f32 %v2687, %v2687
      %v2824 = vmul.f32 %v2692, %v2692
      %v2825 = vmul.f32 %v2697, %v2697
      %v2826 = vmul.f32 %v2702, %v2702
      %v2827 = vmul.f32 %v2707, %v2707
      %v2828 = vmul.f32 %v2712, %v2712
      %v2829 = vmul.f32 %v2717, %v2717
      %v2830 = vmul.f32 %v2722, %v2722
      %v2831 = vmul.f32 %v2727, %v2727
      %v2832 = vsel %vm928, %v2800, 0.0
      %v2833 = vsel %vm928, %v2801, 0.0
      %v2834 = vadd.f32 %v2832, %v2833
      %v2835 = vsel %vm928, %v2802, 0.0
      %v2836 = vadd.f32 %v2834, %v2835
      %v2837 = vsel %vm928, %v2803, 0.0
      %v2838 = vadd.f32 %v2836, %v2837
      %v2839 = vsel %vm928, %v2804, 0.0
      %v2840 = vadd.f32 %v2838, %v2839
      %v2841 = vsel %vm928, %v2805, 0.0
      %v2842 = vadd.f32 %v2840, %v2841
      %v2843 = vsel %vm928, %v2806, 0.0
      %v2844 = vadd.f32 %v2842, %v2843
      %v2845 = vsel %vm928, %v2807, 0.0
      %v2846 = vadd.f32 %v2844, %v2845
      %v2847 = vsel %vm928, %v2808, 0.0
      %v2848 = vadd.f32 %v2846, %v2847
      %v2849 = vsel %vm928, %v2809, 0.0
      %v2850 = vadd.f32 %v2848, %v2849
      %v2851 = vsel %vm928, %v2810, 0.0
      %v2852 = vadd.f32 %v2850, %v2851
      %v2853 = vsel %vm928, %v2811, 0.0
      %v2854 = vadd.f32 %v2852, %v2853
      %v2855 = vsel %vm928, %v2812, 0.0
      %v2856 = vadd.f32 %v2854, %v2855
      %v2857 = vsel %vm928, %v2813, 0.0
      %v2858 = vadd.f32 %v2856, %v2857
      %v2859 = vsel %vm928, %v2814, 0.0
      %v2860 = vadd.f32 %v2858, %v2859
      %v2861 = vsel %vm928, %v2815, 0.0
      %v2862 = vadd.f32 %v2860, %v2861
      %v2863 = vsel %vm928, %v2816, 0.0
      %v2864 = vadd.f32 %v2862, %v2863
      %v2865 = vsel %vm928, %v2817, 0.0
      %v2866 = vadd.f32 %v2864, %v2865
      %v2867 = vsel %vm928, %v2818, 0.0
      %v2868 = vadd.f32 %v2866, %v2867
      %v2869 = vsel %vm928, %v2819, 0.0
      %v2870 = vadd.f32 %v2868, %v2869
      %v2871 = vsel %vm928, %v2820, 0.0
      %v2872 = vadd.f32 %v2870, %v2871
      %v2873 = vsel %vm928, %v2821, 0.0
      %v2874 = vadd.f32 %v2872, %v2873
      %v2875 = vsel %vm928, %v2822, 0.0
      %v2876 = vadd.f32 %v2874, %v2875
      %v2877 = vsel %vm928, %v2823, 0.0
      %v2878 = vadd.f32 %v2876, %v2877
      %v2879 = vsel %vm928, %v2824, 0.0
      %v2880 = vadd.f32 %v2878, %v2879
      %v2881 = vsel %vm928, %v2825, 0.0
      %v2882 = vadd.f32 %v2880, %v2881
      %v2883 = vsel %vm928, %v2826, 0.0
      %v2884 = vadd.f32 %v2882, %v2883
      %v2885 = vsel %vm928, %v2827, 0.0
      %v2886 = vadd.f32 %v2884, %v2885
      %v2887 = vsel %vm928, %v2828, 0.0
      %v2888 = vadd.f32 %v2886, %v2887
      %v2889 = vsel %vm928, %v2829, 0.0
      %v2890 = vadd.f32 %v2888, %v2889
      %v2891 = vsel %vm928, %v2830, 0.0
      %v2892 = vadd.f32 %v2890, %v2891
      %v2893 = vsel %vm928, %v2831, 0.0
      %v2894 = vadd.f32 %v2892, %v2893
      %v2895 = vrot.slane %v2894, 4
      %v2896 = vadd.f32 %v2894, %v2895
      %v2897 = vrot.slane %v2896, 2
      %v2898 = vadd.f32 %v2896, %v2897
      %v2899 = vrot.slane %v2898, 1
      %v2900 = vadd.f32 %v2898, %v2899
      %v2901 = vadd.f32 %v2261, %v2900
      %2902 = vrot.lane.b32.xlu0 %v797, 4
      %v2903 = vpop.permute.xlu0 %2902
      %2905 = vrot.lane.b32.xlu0 %v469, 8
      %v2906 = vpop.permute.xlu0 %2905
      %2908 = vrot.lane.b32.xlu0 %v2472, 12
      %v2909 = vpop.permute.xlu0 %2908
      %v2911 = vsel %vm895, %v466, %v2903
      %v2912 = vsel %vm928, %v2911, %v2906
      %v2913 = vsel %vm961, %v2912, %v2909
      %v2915 = vrot.slane %v2484, 1
      %v2916 = vrot.slane %v2485, 1
      %v2917 = vsel %vm518, %v2915, %v2916
      %v2918 = vrot.slane %v2913, 1
      %v2919 = vsel %vm518, %v2916, %v2918
      %s2920 = scalar_lea.vmem %s3, 48
      %v2921 = vld [vmem:[%s2920] sm:$0xf]
      %v2922 = vld [vmem:[%s2920 + $0x4] sm:$0xf]
      %v2923 = vld [vmem:[%s2920 + $0x8] sm:$0xf]
      %v2924 = vld [vmem:[%s2920 + $0xc] sm:$0xf]
      %v2929 = vcombine.low %v2921, %v2922
      %v2930 = vcombine.low %v2923, %v2924
      %v2933 = vsel %vm1006, %v2917, 0
      %v2935 = vsel %vm1006, %v2919, 0
      %2937 = vmatprep.subr.mxu0 0.0
      %2938 = vmatpush1.msra.mxu0 0.0
      %2939 = vmatprep.subr.mxu0 0.0
      %2940 = vmatpush1.msra.mxu0 0.0
      %2941 = vmatprep.subr.mxu0 0.0
      %2942 = vmatpush1.msra.mxu0 0.0
      %2943 = vmatprep.subr.mxu0 0.0
      %2944 = vmatpush1.msra.mxu0 0.0
      %2945 = vmatprep.subr.mxu0 0.0
      %2946 = vmatpush1.msra.mxu0 0.0
      %2947 = vmatprep.subr.mxu0 0.0
      %2948 = vmatpush1.msra.mxu0 0.0
      %2949 = vmatprep.subr.mxu0 0.0
      %2950 = vmatpush1.msra.mxu0 0.0
      %2951 = vmatprep.subr.mxu0 0.0
      %2952 = vmatpush1.msra.mxu0 0.0
      %2953 = vmatprep.subr.mxu0 0.0
      %2954 = vmatpush1.msra.mxu0 0.0
      %2955 = vmatprep.subr.mxu0 0.0
      %2956 = vmatpush1.msra.mxu0 0.0
      %2957 = vmatprep.subr.mxu0 0.0
      %2958 = vmatpush1.msra.mxu0 0.0
      %2959 = vmatprep.subr.mxu0 0.0
      %2960 = vmatpush1.msra.mxu0 0.0
      %2961 = vmatprep.subr.mxu0 0.0
      %2962 = vmatpush1.msra.mxu0 0.0
      %2963 = vmatprep.subr.mxu0 0.0
      %2964 = vmatpush1.msra.mxu0 0.0
      %2965 = vmatprep.subr.mxu0 0.0
      %2966 = vmatpush1.msra.mxu0 %v2930
      %2967 = vmatprep.subr.mxu0 0.0
      %2968 = vmatpush1.msra.mxu0 %v2929
      %2969 = vmatprep.subr.mxu0 0.0
      %2970 = vmatpush2.msra.mxu0 0.0
      %2971 = vmatprep.subr.mxu0 0.0
      %2972 = vmatpush2.msra.mxu0 0.0
      %2973 = vmatprep.subr.mxu0 0.0
      %2974 = vmatpush2.msra.mxu0 0.0
      %2975 = vmatprep.subr.mxu0 0.0
      %2976 = vmatpush2.msra.mxu0 0.0
      %2977 = vmatprep.subr.mxu0 0.0
      %2978 = vmatpush2.msra.mxu0 0.0
      %2979 = vmatprep.subr.mxu0 0.0
      %2980 = vmatpush2.msra.mxu0 0.0
      %2981 = vmatprep.subr.mxu0 0.0
      %2982 = vmatpush2.msra.mxu0 0.0
      %2983 = vmatprep.subr.mxu0 0.0
      %2984 = vmatpush2.msra.mxu0 0.0
      %2985 = vmatprep.subr.mxu0 0.0
      %2986 = vmatpush2.msra.mxu0 0.0
      %2987 = vmatprep.subr.mxu0 0.0
      %2988 = vmatpush2.msra.mxu0 0.0
      %2989 = vmatprep.subr.mxu0 0.0
      %2990 = vmatpush2.msra.mxu0 0.0
      %2991 = vmatprep.subr.mxu0 0.0
      %2992 = vmatpush2.msra.mxu0 0.0
      %2993 = vmatprep.subr.mxu0 0.0
      %2994 = vmatpush2.msra.mxu0 0.0
      %2995 = vmatprep.subr.mxu0 0.0
      %2996 = vmatpush2.msra.mxu0 0.0
      %2997 = vmatprep.subr.mxu0 0.0
      %2998 = vmatpush2.msra.mxu0 0.0
      %2999 = vmatprep.subr.mxu0 0.0
      %3000 = vmatpush2.msra.mxu0 0.0
      %3001 = vmatprep.mubr.f32.mxu0 0.0
      %3002 = vmatmul.mubr.f32.gmra.mxu0 %v1805
      %v3003 = vpop.f32.mrf.mxu0
      %v3004 = vadd.f32 0.0, %v3003
      %v3005 = vpop.f32.mrf.mxu0
      %3006 = vmatprep.mubr.f32.mxu0 0.0
      %3007 = vmatmul.mubr.f32.gmra.mxu0 %v1807
      %v3008 = vpop.f32.mrf.mxu0
      %v3009 = vadd.f32 0.0, %v3008
      %v3010 = vpop.f32.mrf.mxu0
      %3011 = vmatprep.mubr.f32.mxu0 0.0
      %3012 = vmatmul.mubr.f32.gmra.mxu0 %v1809
      %v3013 = vpop.f32.mrf.mxu0
      %v3014 = vadd.f32 0.0, %v3013
      %v3015 = vpop.f32.mrf.mxu0
      %3016 = vmatprep.mubr.f32.mxu0 0.0
      %3017 = vmatmul.mubr.f32.gmra.mxu0 %v1811
      %v3018 = vpop.f32.mrf.mxu0
      %v3019 = vadd.f32 0.0, %v3018
      %v3020 = vpop.f32.mrf.mxu0
      %3021 = vmatprep.mubr.f32.mxu0 0.0
      %3022 = vmatmul.mubr.f32.gmra.mxu0 %v1813
      %v3023 = vpop.f32.mrf.mxu0
      %v3024 = vadd.f32 0.0, %v3023
      %v3025 = vpop.f32.mrf.mxu0
      %3026 = vmatprep.mubr.f32.mxu0 0.0
      %3027 = vmatmul.mubr.f32.gmra.mxu0 %v1815
      %v3028 = vpop.f32.mrf.mxu0
      %v3029 = vadd.f32 0.0, %v3028
      %v3030 = vpop.f32.mrf.mxu0
      %3031 = vmatprep.mubr.f32.mxu0 0.0
      %3032 = vmatmul.mubr.f32.gmra.mxu0 %v1817
      %v3033 = vpop.f32.mrf.mxu0
      %v3034 = vadd.f32 0.0, %v3033
      %v3035 = vpop.f32.mrf.mxu0
      %3036 = vmatprep.mubr.f32.mxu0 0.0
      %3037 = vmatmul.mubr.f32.gmra.mxu0 %v1819
      %v3038 = vpop.f32.mrf.mxu0
      %v3039 = vadd.f32 0.0, %v3038
      %v3040 = vpop.f32.mrf.mxu0
      %3041 = vmatprep.mubr.f32.mxu0 0.0
      %3042 = vmatmul.mubr.f32.gmra.mxu0 %v1821
      %v3043 = vpop.f32.mrf.mxu0
      %v3044 = vadd.f32 0.0, %v3043
      %v3045 = vpop.f32.mrf.mxu0
      %3046 = vmatprep.mubr.f32.mxu0 0.0
      %3047 = vmatmul.mubr.f32.gmra.mxu0 %v1823
      %v3048 = vpop.f32.mrf.mxu0
      %v3049 = vadd.f32 0.0, %v3048
      %v3050 = vpop.f32.mrf.mxu0
      %3051 = vmatprep.mubr.f32.mxu0 0.0
      %3052 = vmatmul.mubr.f32.gmra.mxu0 %v1825
      %v3053 = vpop.f32.mrf.mxu0
      %v3054 = vadd.f32 0.0, %v3053
      %v3055 = vpop.f32.mrf.mxu0
      %3056 = vmatprep.mubr.f32.mxu0 0.0
      %3057 = vmatmul.mubr.f32.gmra.mxu0 %v1827
      %v3058 = vpop.f32.mrf.mxu0
      %v3059 = vadd.f32 0.0, %v3058
      %v3060 = vpop.f32.mrf.mxu0
      %3061 = vmatprep.mubr.f32.mxu0 0.0
      %3062 = vmatmul.mubr.f32.gmra.mxu0 %v1829
      %v3063 = vpop.f32.mrf.mxu0
      %v3064 = vadd.f32 0.0, %v3063
      %v3065 = vpop.f32.mrf.mxu0
      %3066 = vmatprep.mubr.f32.mxu0 0.0
      %3067 = vmatmul.mubr.f32.gmra.mxu0 %v1831
      %v3068 = vpop.f32.mrf.mxu0
      %v3069 = vadd.f32 0.0, %v3068
      %v3070 = vpop.f32.mrf.mxu0
      %3071 = vmatprep.mubr.f32.mxu0 0.0
      %3072 = vmatmul.mubr.f32.gmra.mxu0 %v1833
      %v3073 = vpop.f32.mrf.mxu0
      %v3074 = vadd.f32 0.0, %v3073
      %v3075 = vpop.f32.mrf.mxu0
      %3076 = vmatprep.mubr.f32.mxu0 0.0
      %3077 = vmatmul.mubr.f32.gmra.mxu0 %v1835
      %v3078 = vpop.f32.mrf.mxu0
      %v3079 = vadd.f32 0.0, %v3078
      %v3080 = vpop.f32.mrf.mxu0
      %3081 = vmatprep.mubr.f32.mxu0 0.0
      %3082 = vmatmul.mubr.f32.gmra.mxu0 %v1837
      %v3083 = vpop.f32.mrf.mxu0
      %v3084 = vadd.f32 0.0, %v3083
      %v3085 = vpop.f32.mrf.mxu0
      %3086 = vmatprep.mubr.f32.mxu0 0.0
      %3087 = vmatmul.mubr.f32.gmra.mxu0 %v1839
      %v3088 = vpop.f32.mrf.mxu0
      %v3089 = vadd.f32 0.0, %v3088
      %v3090 = vpop.f32.mrf.mxu0
      %3091 = vmatprep.mubr.f32.mxu0 0.0
      %3092 = vmatmul.mubr.f32.gmra.mxu0 %v1841
      %v3093 = vpop.f32.mrf.mxu0
      %v3094 = vadd.f32 0.0, %v3093
      %v3095 = vpop.f32.mrf.mxu0
      %3096 = vmatprep.mubr.f32.mxu0 0.0
      %3097 = vmatmul.mubr.f32.gmra.mxu0 %v1843
      %v3098 = vpop.f32.mrf.mxu0
      %v3099 = vadd.f32 0.0, %v3098
      %v3100 = vpop.f32.mrf.mxu0
      %3101 = vmatprep.mubr.f32.mxu0 0.0
      %3102 = vmatmul.mubr.f32.gmra.mxu0 %v1845
      %v3103 = vpop.f32.mrf.mxu0
      %v3104 = vadd.f32 0.0, %v3103
      %v3105 = vpop.f32.mrf.mxu0
      %3106 = vmatprep.mubr.f32.mxu0 0.0
      %3107 = vmatmul.mubr.f32.gmra.mxu0 %v1847
      %v3108 = vpop.f32.mrf.mxu0
      %v3109 = vadd.f32 0.0, %v3108
      %v3110 = vpop.f32.mrf.mxu0
      %3111 = vmatprep.mubr.f32.mxu0 0.0
      %3112 = vmatmul.mubr.f32.gmra.mxu0 %v1849
      %v3113 = vpop.f32.mrf.mxu0
      %v3114 = vadd.f32 0.0, %v3113
      %v3115 = vpop.f32.mrf.mxu0
      %3116 = vmatprep.mubr.f32.mxu0 0.0
      %3117 = vmatmul.mubr.f32.gmra.mxu0 %v1851
      %v3118 = vpop.f32.mrf.mxu0
      %v3119 = vadd.f32 0.0, %v3118
      %v3120 = vpop.f32.mrf.mxu0
      %3121 = vmatprep.mubr.f32.mxu0 0.0
      %3122 = vmatmul.mubr.f32.gmra.mxu0 %v1853
      %v3123 = vpop.f32.mrf.mxu0
      %v3124 = vadd.f32 0.0, %v3123
      %v3125 = vpop.f32.mrf.mxu0
      %3126 = vmatprep.mubr.f32.mxu0 0.0
      %3127 = vmatmul.mubr.f32.gmra.mxu0 %v1855
      %v3128 = vpop.f32.mrf.mxu0
      %v3129 = vadd.f32 0.0, %v3128
      %v3130 = vpop.f32.mrf.mxu0
      %3131 = vmatprep.mubr.f32.mxu0 0.0
      %3132 = vmatmul.mubr.f32.gmra.mxu0 %v1857
      %v3133 = vpop.f32.mrf.mxu0
      %v3134 = vadd.f32 0.0, %v3133
      %v3135 = vpop.f32.mrf.mxu0
      %3136 = vmatprep.mubr.f32.mxu0 0.0
      %3137 = vmatmul.mubr.f32.gmra.mxu0 %v1859
      %v3138 = vpop.f32.mrf.mxu0
      %v3139 = vadd.f32 0.0, %v3138
      %v3140 = vpop.f32.mrf.mxu0
      %3141 = vmatprep.mubr.f32.mxu0 0.0
      %3142 = vmatmul.mubr.f32.gmra.mxu0 %v1861
      %v3143 = vpop.f32.mrf.mxu0
      %v3144 = vadd.f32 0.0, %v3143
      %v3145 = vpop.f32.mrf.mxu0
      %3146 = vmatprep.mubr.f32.mxu0 0.0
      %3147 = vmatmul.mubr.f32.gmra.mxu0 %v1863
      %v3148 = vpop.f32.mrf.mxu0
      %v3149 = vadd.f32 0.0, %v3148
      %v3150 = vpop.f32.mrf.mxu0
      %3151 = vmatprep.mubr.f32.mxu0 0.0
      %3152 = vmatmul.mubr.f32.gmra.mxu0 %v2933
      %v3153 = vpop.f32.mrf.mxu0
      %v3154 = vadd.f32 0.0, %v3153
      %v3155 = vpop.f32.mrf.mxu0
      %3156 = vmatprep.mubr.f32.mxu0 0.0
      %3157 = vmatmul.mubr.f32.gmra.mxu0 %v2935
      %v3158 = vpop.f32.mrf.mxu0
      %v3159 = vadd.f32 0.0, %v3158
      %v3160 = vpop.f32.mrf.mxu0
      %3161 = vdwg.mxu0
      %v3162 = vsel %vm928, %v3004, 0.0
      %v3163 = vsel %vm928, %v3009, 0.0
      %v3164 = vadd.f32 %v3162, %v3163
      %v3165 = vsel %vm928, %v3014, 0.0
      %v3166 = vadd.f32 %v3164, %v3165
      %v3167 = vsel %vm928, %v3019, 0.0
      %v3168 = vadd.f32 %v3166, %v3167
      %v3169 = vsel %vm928, %v3024, 0.0
      %v3170 = vadd.f32 %v3168, %v3169
      %v3171 = vsel %vm928, %v3029, 0.0
      %v3172 = vadd.f32 %v3170, %v3171
      %v3173 = vsel %vm928, %v3034, 0.0
      %v3174 = vadd.f32 %v3172, %v3173
      %v3175 = vsel %vm928, %v3039, 0.0
      %v3176 = vadd.f32 %v3174, %v3175
      %v3177 = vsel %vm928, %v3044, 0.0
      %v3178 = vadd.f32 %v3176, %v3177
      %v3179 = vsel %vm928, %v3049, 0.0
      %v3180 = vadd.f32 %v3178, %v3179
      %v3181 = vsel %vm928, %v3054, 0.0
      %v3182 = vadd.f32 %v3180, %v3181
      %v3183 = vsel %vm928, %v3059, 0.0
      %v3184 = vadd.f32 %v3182, %v3183
      %v3185 = vsel %vm928, %v3064, 0.0
      %v3186 = vadd.f32 %v3184, %v3185
      %v3187 = vsel %vm928, %v3069, 0.0
      %v3188 = vadd.f32 %v3186, %v3187
      %v3189 = vsel %vm928, %v3074, 0.0
      %v3190 = vadd.f32 %v3188, %v3189
      %v3191 = vsel %vm928, %v3079, 0.0
      %v3192 = vadd.f32 %v3190, %v3191
      %v3193 = vsel %vm928, %v3084, 0.0
      %v3194 = vadd.f32 %v3192, %v3193
      %v3195 = vsel %vm928, %v3089, 0.0
      %v3196 = vadd.f32 %v3194, %v3195
      %v3197 = vsel %vm928, %v3094, 0.0
      %v3198 = vadd.f32 %v3196, %v3197
      %v3199 = vsel %vm928, %v3099, 0.0
      %v3200 = vadd.f32 %v3198, %v3199
      %v3201 = vsel %vm928, %v3104, 0.0
      %v3202 = vadd.f32 %v3200, %v3201
      %v3203 = vsel %vm928, %v3109, 0.0
      %v3204 = vadd.f32 %v3202, %v3203
      %v3205 = vsel %vm928, %v3114, 0.0
      %v3206 = vadd.f32 %v3204, %v3205
      %v3207 = vsel %vm928, %v3119, 0.0
      %v3208 = vadd.f32 %v3206, %v3207
      %v3209 = vsel %vm928, %v3124, 0.0
      %v3210 = vadd.f32 %v3208, %v3209
      %v3211 = vsel %vm928, %v3129, 0.0
      %v3212 = vadd.f32 %v3210, %v3211
      %v3213 = vsel %vm928, %v3134, 0.0
      %v3214 = vadd.f32 %v3212, %v3213
      %v3215 = vsel %vm928, %v3139, 0.0
      %v3216 = vadd.f32 %v3214, %v3215
      %v3217 = vsel %vm928, %v3144, 0.0
      %v3218 = vadd.f32 %v3216, %v3217
      %v3219 = vsel %vm928, %v3149, 0.0
      %v3220 = vadd.f32 %v3218, %v3219
      %v3221 = vsel %vm928, %v3154, 0.0
      %v3222 = vadd.f32 %v3220, %v3221
      %v3223 = vsel %vm928, %v3159, 0.0
      %v3224 = vadd.f32 %v3222, %v3223
      %v3225 = vrot.slane %v3224, 4
      %v3226 = vadd.f32 %v3224, %v3225
      %v3227 = vrot.slane %v3226, 2
      %v3228 = vadd.f32 %v3226, %v3227
      %v3229 = vrot.slane %v3228, 1
      %v3230 = vadd.f32 %v3228, %v3229
      %v3231 = vadd.f32 %v2799, %v3230
      %v3232 = vmul.f32 %v3004, %v3004
      %v3233 = vmul.f32 %v3009, %v3009
      %v3234 = vmul.f32 %v3014, %v3014
      %v3235 = vmul.f32 %v3019, %v3019
      %v3236 = vmul.f32 %v3024, %v3024
      %v3237 = vmul.f32 %v3029, %v3029
      %v3238 = vmul.f32 %v3034, %v3034
      %v3239 = vmul.f32 %v3039, %v3039
      %v3240 = vmul.f32 %v3044, %v3044
      %v3241 = vmul.f32 %v3049, %v3049
      %v3242 = vmul.f32 %v3054, %v3054
      %v3243 = vmul.f32 %v3059, %v3059
      %v3244 = vmul.f32 %v3064, %v3064
      %v3245 = vmul.f32 %v3069, %v3069
      %v3246 = vmul.f32 %v3074, %v3074
      %v3247 = vmul.f32 %v3079, %v3079
      %v3248 = vmul.f32 %v3084, %v3084
      %v3249 = vmul.f32 %v3089, %v3089
      %v3250 = vmul.f32 %v3094, %v3094
      %v3251 = vmul.f32 %v3099, %v3099
      %v3252 = vmul.f32 %v3104, %v3104
      %v3253 = vmul.f32 %v3109, %v3109
      %v3254 = vmul.f32 %v3114, %v3114
      %v3255 = vmul.f32 %v3119, %v3119
      %v3256 = vmul.f32 %v3124, %v3124
      %v3257 = vmul.f32 %v3129, %v3129
      %v3258 = vmul.f32 %v3134, %v3134
      %v3259 = vmul.f32 %v3139, %v3139
      %v3260 = vmul.f32 %v3144, %v3144
      %v3261 = vmul.f32 %v3149, %v3149
      %v3262 = vmul.f32 %v3154, %v3154
      %v3263 = vmul.f32 %v3159, %v3159
      %v3264 = vsel %vm928, %v3232, 0.0
      %v3265 = vsel %vm928, %v3233, 0.0
      %v3266 = vadd.f32 %v3264, %v3265
      %v3267 = vsel %vm928, %v3234, 0.0
      %v3268 = vadd.f32 %v3266, %v3267
      %v3269 = vsel %vm928, %v3235, 0.0
      %v3270 = vadd.f32 %v3268, %v3269
      %v3271 = vsel %vm928, %v3236, 0.0
      %v3272 = vadd.f32 %v3270, %v3271
      %v3273 = vsel %vm928, %v3237, 0.0
      %v3274 = vadd.f32 %v3272, %v3273
      %v3275 = vsel %vm928, %v3238, 0.0
      %v3276 = vadd.f32 %v3274, %v3275
      %v3277 = vsel %vm928, %v3239, 0.0
      %v3278 = vadd.f32 %v3276, %v3277
      %v3279 = vsel %vm928, %v3240, 0.0
      %v3280 = vadd.f32 %v3278, %v3279
      %v3281 = vsel %vm928, %v3241, 0.0
      %v3282 = vadd.f32 %v3280, %v3281
      %v3283 = vsel %vm928, %v3242, 0.0
      %v3284 = vadd.f32 %v3282, %v3283
      %v3285 = vsel %vm928, %v3243, 0.0
      %v3286 = vadd.f32 %v3284, %v3285
      %v3287 = vsel %vm928, %v3244, 0.0
      %v3288 = vadd.f32 %v3286, %v3287
      %v3289 = vsel %vm928, %v3245, 0.0
      %v3290 = vadd.f32 %v3288, %v3289
      %v3291 = vsel %vm928, %v3246, 0.0
      %v3292 = vadd.f32 %v3290, %v3291
      %v3293 = vsel %vm928, %v3247, 0.0
      %v3294 = vadd.f32 %v3292, %v3293
      %v3295 = vsel %vm928, %v3248, 0.0
      %v3296 = vadd.f32 %v3294, %v3295
      %v3297 = vsel %vm928, %v3249, 0.0
      %v3298 = vadd.f32 %v3296, %v3297
      %v3299 = vsel %vm928, %v3250, 0.0
      %v3300 = vadd.f32 %v3298, %v3299
      %v3301 = vsel %vm928, %v3251, 0.0
      %v3302 = vadd.f32 %v3300, %v3301
      %v3303 = vsel %vm928, %v3252, 0.0
      %v3304 = vadd.f32 %v3302, %v3303
      %v3305 = vsel %vm928, %v3253, 0.0
      %v3306 = vadd.f32 %v3304, %v3305
      %v3307 = vsel %vm928, %v3254, 0.0
      %v3308 = vadd.f32 %v3306, %v3307
      %v3309 = vsel %vm928, %v3255, 0.0
      %v3310 = vadd.f32 %v3308, %v3309
      %v3311 = vsel %vm928, %v3256, 0.0
      %v3312 = vadd.f32 %v3310, %v3311
      %v3313 = vsel %vm928, %v3257, 0.0
      %v3314 = vadd.f32 %v3312, %v3313
      %v3315 = vsel %vm928, %v3258, 0.0
      %v3316 = vadd.f32 %v3314, %v3315
      %v3317 = vsel %vm928, %v3259, 0.0
      %v3318 = vadd.f32 %v3316, %v3317
      %v3319 = vsel %vm928, %v3260, 0.0
      %v3320 = vadd.f32 %v3318, %v3319
      %v3321 = vsel %vm928, %v3261, 0.0
      %v3322 = vadd.f32 %v3320, %v3321
      %v3323 = vsel %vm928, %v3262, 0.0
      %v3324 = vadd.f32 %v3322, %v3323
      %v3325 = vsel %vm928, %v3263, 0.0
      %v3326 = vadd.f32 %v3324, %v3325
      %v3327 = vrot.slane %v3326, 4
      %v3328 = vadd.f32 %v3326, %v3327
      %v3329 = vrot.slane %v3328, 2
      %v3330 = vadd.f32 %v3328, %v3329
      %v3331 = vrot.slane %v3330, 1
      %v3332 = vadd.f32 %v3330, %v3331
      %v3333 = vadd.f32 %v2901, %v3332
      %3366 = vrot.lane.b32.xlu0 %v3004, 8
      %v3367 = vpop.permute.xlu0 %3366
      %3368 = vrot.lane.b32.xlu0 %v3009, 8
      %v3369 = vpop.permute.xlu0 %3368
      %3370 = vrot.lane.b32.xlu0 %v3014, 8
      %v3371 = vpop.permute.xlu0 %3370
      %3372 = vrot.lane.b32.xlu0 %v3019, 8
      %v3373 = vpop.permute.xlu0 %3372
      %3374 = vrot.lane.b32.xlu0 %v3024, 8
      %v3375 = vpop.permute.xlu0 %3374
      %3376 = vrot.lane.b32.xlu0 %v3029, 8
      %v3377 = vpop.permute.xlu0 %3376
      %3378 = vrot.lane.b32.xlu0 %v3034, 8
      %v3379 = vpop.permute.xlu0 %3378
      %3380 = vrot.lane.b32.xlu0 %v3039, 8
      %v3381 = vpop.permute.xlu0 %3380
      %3382 = vrot.lane.b32.xlu0 %v3044, 8
      %v3383 = vpop.permute.xlu0 %3382
      %3384 = vrot.lane.b32.xlu0 %v3049, 8
      %v3385 = vpop.permute.xlu0 %3384
      %3386 = vrot.lane.b32.xlu0 %v3054, 8
      %v3387 = vpop.permute.xlu0 %3386
      %3388 = vrot.lane.b32.xlu0 %v3059, 8
      %v3389 = vpop.permute.xlu0 %3388
      %3390 = vrot.lane.b32.xlu0 %v3064, 8
      %v3391 = vpop.permute.xlu0 %3390
      %3392 = vrot.lane.b32.xlu0 %v3069, 8
      %v3393 = vpop.permute.xlu0 %3392
      %3394 = vrot.lane.b32.xlu0 %v3074, 8
      %v3395 = vpop.permute.xlu0 %3394
      %3396 = vrot.lane.b32.xlu0 %v3079, 8
      %v3397 = vpop.permute.xlu0 %3396
      %3398 = vrot.lane.b32.xlu0 %v3084, 8
      %v3399 = vpop.permute.xlu0 %3398
      %3400 = vrot.lane.b32.xlu0 %v3089, 8
      %v3401 = vpop.permute.xlu0 %3400
      %3402 = vrot.lane.b32.xlu0 %v3094, 8
      %v3403 = vpop.permute.xlu0 %3402
      %3404 = vrot.lane.b32.xlu0 %v3099, 8
      %v3405 = vpop.permute.xlu0 %3404
      %3406 = vrot.lane.b32.xlu0 %v3104, 8
      %v3407 = vpop.permute.xlu0 %3406
      %3408 = vrot.lane.b32.xlu0 %v3109, 8
      %v3409 = vpop.permute.xlu0 %3408
      %3410 = vrot.lane.b32.xlu0 %v3114, 8
      %v3411 = vpop.permute.xlu0 %3410
      %3412 = vrot.lane.b32.xlu0 %v3119, 8
      %v3413 = vpop.permute.xlu0 %3412
      %3414 = vrot.lane.b32.xlu0 %v3124, 8
      %v3415 = vpop.permute.xlu0 %3414
      %3416 = vrot.lane.b32.xlu0 %v3129, 8
      %v3417 = vpop.permute.xlu0 %3416
      %3418 = vrot.lane.b32.xlu0 %v3134, 8
      %v3419 = vpop.permute.xlu0 %3418
      %3420 = vrot.lane.b32.xlu0 %v3139, 8
      %v3421 = vpop.permute.xlu0 %3420
      %3422 = vrot.lane.b32.xlu0 %v3144, 8
      %v3423 = vpop.permute.xlu0 %3422
      %3424 = vrot.lane.b32.xlu0 %v3149, 8
      %v3425 = vpop.permute.xlu0 %3424
      %3426 = vrot.lane.b32.xlu0 %v3154, 8
      %v3427 = vpop.permute.xlu0 %3426
      %3428 = vrot.lane.b32.xlu0 %v3159, 8
      %v3429 = vpop.permute.xlu0 %3428
      %v3462 = vsel %vm928, %v2572, %v3367
      %v3463 = vsel %vm928, %v2577, %v3369
      %v3464 = vsel %vm928, %v2582, %v3371
      %v3465 = vsel %vm928, %v2587, %v3373
      %v3466 = vsel %vm928, %v2592, %v3375
      %v3467 = vsel %vm928, %v2597, %v3377
      %v3468 = vsel %vm928, %v2602, %v3379
      %v3469 = vsel %vm928, %v2607, %v3381
      %v3470 = vsel %vm928, %v2612, %v3383
      %v3471 = vsel %vm928, %v2617, %v3385
      %v3472 = vsel %vm928, %v2622, %v3387
      %v3473 = vsel %vm928, %v2627, %v3389
      %v3474 = vsel %vm928, %v2632, %v3391
      %v3475 = vsel %vm928, %v2637, %v3393
      %v3476 = vsel %vm928, %v2642, %v3395
      %v3477 = vsel %vm928, %v2647, %v3397
      %v3478 = vsel %vm928, %v2652, %v3399
      %v3479 = vsel %vm928, %v2657, %v3401
      %v3480 = vsel %vm928, %v2662, %v3403
      %v3481 = vsel %vm928, %v2667, %v3405
      %v3482 = vsel %vm928, %v2672, %v3407
      %v3483 = vsel %vm928, %v2677, %v3409
      %v3484 = vsel %vm928, %v2682, %v3411
      %v3485 = vsel %vm928, %v2687, %v3413
      %v3486 = vsel %vm928, %v2692, %v3415
      %v3487 = vsel %vm928, %v2697, %v3417
      %v3488 = vsel %vm928, %v2702, %v3419
      %v3489 = vsel %vm928, %v2707, %v3421
      %v3490 = vsel %vm928, %v2712, %v3423
      %v3491 = vsel %vm928, %v2717, %v3425
      %v3492 = vsel %vm928, %v2722, %v3427
      %v3493 = vsel %vm928, %v2727, %v3429
      %s3494 = scalar_lea.vmem %s407, 16
      %3495 = vst.msk [vmem:[%s3494] sm:$0xff] %vm1006, %v3462
      %3496 = vst.msk [vmem:[%s3494 + $0x8] sm:$0xff] %vm1006, %v3463
      %3497 = vst.msk [vmem:[%s3494 + $0x20] sm:$0xff] %vm1006, %v3464
      %3498 = vst.msk [vmem:[%s3494 + $0x28] sm:$0xff] %vm1006, %v3465
      %3499 = vst.msk [vmem:[%s3494 + $0x40] sm:$0xff] %vm1006, %v3466
      %3500 = vst.msk [vmem:[%s3494 + $0x48] sm:$0xff] %vm1006, %v3467
      %3501 = vst.msk [vmem:[%s3494 + $0x60] sm:$0xff] %vm1006, %v3468
      %3502 = vst.msk [vmem:[%s3494 + $0x68] sm:$0xff] %vm1006, %v3469
      %3503 = vst.msk [vmem:[%s3494 + $0x80] sm:$0xff] %vm1006, %v3470
      %3504 = vst.msk [vmem:[%s3494 + $0x88] sm:$0xff] %vm1006, %v3471
      %3505 = vst.msk [vmem:[%s3494 + $0xa0] sm:$0xff] %vm1006, %v3472
      %3506 = vst.msk [vmem:[%s3494 + $0xa8] sm:$0xff] %vm1006, %v3473
      %3507 = vst.msk [vmem:[%s3494 + $0xc0] sm:$0xff] %vm1006, %v3474
      %3508 = vst.msk [vmem:[%s3494 + $0xc8] sm:$0xff] %vm1006, %v3475
      %3509 = vst.msk [vmem:[%s3494 + $0xe0] sm:$0xff] %vm1006, %v3476
      %3510 = vst.msk [vmem:[%s3494 + $0xe8] sm:$0xff] %vm1006, %v3477
      %3511 = vst.msk [vmem:[%s3494 + $0x100] sm:$0xff] %vm1006, %v3478
      %3512 = vst.msk [vmem:[%s3494 + $0x108] sm:$0xff] %vm1006, %v3479
      %3513 = vst.msk [vmem:[%s3494 + $0x120] sm:$0xff] %vm1006, %v3480
      %3514 = vst.msk [vmem:[%s3494 + $0x128] sm:$0xff] %vm1006, %v3481
      %3515 = vst.msk [vmem:[%s3494 + $0x140] sm:$0xff] %vm1006, %v3482
      %3516 = vst.msk [vmem:[%s3494 + $0x148] sm:$0xff] %vm1006, %v3483
      %3517 = vst.msk [vmem:[%s3494 + $0x160] sm:$0xff] %vm1006, %v3484
      %3518 = vst.msk [vmem:[%s3494 + $0x168] sm:$0xff] %vm1006, %v3485
      %3519 = vst.msk [vmem:[%s3494 + $0x180] sm:$0xff] %vm1006, %v3486
      %3520 = vst.msk [vmem:[%s3494 + $0x188] sm:$0xff] %vm1006, %v3487
      %3521 = vst.msk [vmem:[%s3494 + $0x1a0] sm:$0xff] %vm1006, %v3488
      %3522 = vst.msk [vmem:[%s3494 + $0x1a8] sm:$0xff] %vm1006, %v3489
      %3523 = vst.msk [vmem:[%s3494 + $0x1c0] sm:$0xff] %vm1006, %v3490
      %3524 = vst.msk [vmem:[%s3494 + $0x1c8] sm:$0xff] %vm1006, %v3491
      %3525 = vst.msk [vmem:[%s3494 + $0x1e0] sm:$0xff] %vm1006, %v3492
      %3526 = vst.msk [vmem:[%s3494 + $0x1e8] sm:$0xff] %vm1006, %v3493
      %vm3527 = vcmask 1040384
      %v3528 = vsel %vm3527, %v3231, %v3333
      %vm3529 = vcmask 58368
      %3530 = vst.msk [vmem:[%s415] sm:$0x3] %vm3529, %v3528
      %s3531 = smul.u32 16, %s22
      %p3532 = scmp.lt.s32.totalorder %s21, 1
      %s3533 = scalar_select %p3532, %s21, 1
      %p3534 = scmp.lt.s32.totalorder %s3531, 15
      %s3535 = scalar_select %p3534, %s3531, 15
      %s3536 = smul.addr %s3535, 4
      %s3537 = smul.addr %s3533, 64
      %s3538 = sadd.s32 %s3536, %s3537
      %s3539 = smul.addr %s3538, 8
      %s3540 = scalar_lea.vmem %s4, %s3539
      %p3541 = scmp.lt.s32.totalorder %s21, 1
      %s3542 = scalar_select %p3541, %s21, 1
      %p3543 = scmp.lt.s32.totalorder %s22, 0
      %s3544 = scalar_select %p3543, %s22, 0
      %s3545 = sadd.s32 %s3544, %s3542
      %s3546 = smul.addr %s3545, 2
      %s3547 = scalar_lea.vmem %s5, %s3546
      // Predicated region
      $region37: #{up_block_forward.2} parent=35 // pred_check
        %p3548 = pneg %p164
      $region38: #{up_block_forward.2} parent=35 // pred_check_branch
        %3550 = sbr.rel (%p3548) target = $region40
      $region39: #{up_block_forward.2} parent=35 // pred_region
        %s3551 = smul.u32 16, %s22
      $region40: #{up_block_forward.2} parent=35 // pred_fallthru
        _
      // Predicated region
      $region41: #{up_block_forward.2} parent=35 // pred_check
        %p3552 = pneg %p192
      $region42: #{up_block_forward.2} parent=35 // pred_check_branch
        %3554 = sbr.rel (%p3552) target = $region44
      $region43: #{up_block_forward.2} parent=35 // pred_region
        _
      $region44: #{up_block_forward.2} parent=35 // pred_fallthru
        _
    $region36: #{up_block_forward.2} parent=5 // pred_fallthru
      _
    %p3555 = scmp.le.s32.totalorder 2, %s12
    // Predicated region
    $region45: #{up_block_forward.2} parent=5 // pred_check
      %p3556 = pneg %p3555
    $region46: #{up_block_forward.2} parent=5 // pred_check_branch
      %3558 = sbr.rel (%p3556) target = $region48
    $region47: #{up_block_forward.2} parent=5 // pred_region
      %s3559 = ssub.s32 %s12, 2
      // Predicated region
      $region49: #{up_block_forward.2} parent=47 // pred_check
        %p3560 = pneg %p170
      $region50: #{up_block_forward.2} parent=47 // pred_check_branch
        %3562 = sbr.rel (%p3560) target = $region52
      $region51: #{up_block_forward.2} parent=47 // pred_region
        %s3563 = smul.u32 16, %s24
        %p3564 = scmp.lt.s32.totalorder %s23, 1
        %s3565 = scalar_select %p3564, %s23, 1
        %p3566 = scmp.lt.s32.totalorder %s3563, 15
        %s3567 = scalar_select %p3566, %s3563, 15
        %s3568 = smul.addr %s3567, 4
        %s3569 = smul.addr %s3565, 64
        %s3570 = sadd.s32 %s3568, %s3569
        %s3571 = smul.addr %s3570, 8
        %s3572 = scalar_lea.vmem %s4, %s3571
      $region52: #{up_block_forward.2} parent=47 // pred_fallthru
        _
      // Predicated region
      $region53: #{up_block_forward.2} parent=47 // pred_check
        %p3573 = pneg %p198
      $region54: #{up_block_forward.2} parent=47 // pred_check_branch
        %3575 = sbr.rel (%p3573) target = $region56
      $region55: #{up_block_forward.2} parent=47 // pred_region
        %p3576 = scmp.lt.s32.totalorder %s23, 1
        %s3577 = scalar_select %p3576, %s23, 1
        %p3578 = scmp.lt.s32.totalorder %s24, 0
        %s3579 = scalar_select %p3578, %s24, 0
        %s3580 = sadd.s32 %s3579, %s3577
        %s3581 = smul.addr %s3580, 2
        %s3582 = scalar_lea.vmem %s5, %s3581
      $region56: #{up_block_forward.2} parent=47 // pred_fallthru
        _
    $region48: #{up_block_forward.2} parent=5 // pred_fallthru
      _
  $region6: #{up_block_forward.2} parent=0 // loop_footer
    %s16 = sadd.s32 1, %s12
  $region7: #{up_block_forward.2} parent=0 // loop_footer_branch
    %11 = sbr.rel target = $region3
  $region8: #{up_block_forward.2} parent=0 // loop_exit
    _

</llo_original>
